<compile_context>
chip_gen: v7x
topology: tpu7x:2x2x1
jax: 0.10.0
libtpu: 0.0.40
codegen_flags: <defaults>
</compile_context>

<pallas_src>
import numpy as np
import jax
import jax.numpy as jnp
from jax.experimental import pallas as pl
from jax.experimental.pallas import tpu as pltpu


# --------------------------- fused Pallas kernel ------------------------------

def _fused_kernel(p1_ref, w1_ref, sel_ref, w2_ref, b2_ref, pool_ref,
                  wfc_ref, bfc_ref, o_ref):
    # conv1 (bias folded via the 1.0 lane of p1) + ReLU.
    # p1_ref: (B*P, 128), lanes = quadrant*32 + tap;  w1_ref: 128x128 block-diag.
    a = jnp.dot(p1_ref[...], w1_ref[...], preferred_element_type=jnp.float32)
    a = jnp.maximum(a, 0.0)                                        # (B*P, 128)

    # 2x2 max-pool == elementwise max over the 4 quadrant lane-groups.
    pooled = jnp.maximum(jnp.maximum(a[:, 0:32], a[:, 32:64]),
                         jnp.maximum(a[:, 64:96], a[:, 96:128]))   # (B*P, 32)

    # conv2 stage 1: ONE matmul for the whole batch block.  sel_ref is a 0/1
    # matrix, block-diagonal over images, rows ordered (tap, image, out_pos).
    taps = jnp.dot(sel_ref[...], pooled,
                   preferred_element_type=jnp.float32)             # (9*B*P2, 32)

    # conv2 stage 2: 9 INDEPENDENT tap matmuls (contiguous, 8-aligned row
    # slices) + tree-sum -- no serialized accumulator chain through the MXU.
    bp2 = taps.shape[0] // 9
    parts = [jnp.dot(taps[t * bp2:(t + 1) * bp2, :], w2_ref[t],
                     preferred_element_type=jnp.float32) for t in range(9)]
    while len(parts) > 1:
        nxt = [parts[i] + parts[i + 1] for i in range(0, len(parts) - 1, 2)]
        if len(parts) % 2:
            nxt.append(parts[-1])
        parts = nxt
    h = jnp.maximum(parts[0] + b2_ref[...], 0.0)                   # (B*P2, 64)

    # AdaptiveAvgPool2d((1,1)) as a matmul with a constant per-image pooling
    # matrix (1/P2 folded in) -> (B, 64); then fc + ReLU (out_dim padded to 128
    # so the store is a full-lane, unmasked (B, 128) write).
    g = jnp.dot(pool_ref[...], h, preferred_element_type=jnp.float32)
    y = jnp.dot(g, wfc_ref[...], preferred_element_type=jnp.float32) + bfc_ref[...]
    o_ref[0] = jnp.maximum(y, 0.0)


# --------------------------- constant index helpers ----------------------------

def _conv1_lane_packed_indices(HP, WP):
    """Gather indices into the zero-padded (H+4, W+4) image producing conv1
    im2col rows with lanes = quadrant*32 + tap (taps 25..31 point at (0,0),
    which is always 0.0 inside the padding; lane 25 later becomes the 1.0 bias
    lane)."""
    rows = np.zeros((HP, WP, 128), np.int32)
    cols = np.zeros((HP, WP, 128), np.int32)
    Y = np.arange(HP)[:, None]
    X = np.arange(WP)[None, :]
    for q in range(4):
        qy, qx = q // 2, q % 2
        for t in range(25):
            ky, kx = t // 5, t % 5
            rows[:, :, q * 32 + t] = 4 * Y + 2 * qy + ky
            cols[:, :, q * 32 + t] = 4 * X + 2 * qx + kx
    return rows.reshape(HP * WP, 128), cols.reshape(HP * WP, 128)


def _conv2_selection(HP, WP, H2, W2):
    """(9, P2, P) 0/1 matrices implementing the 3x3 / stride-2 / pad-1 taps."""
    P, P2 = HP * WP, H2 * W2
    sel = np.zeros((9, P2, P), np.float32)
    for t in range(9):
        ky, kx = t // 3, t % 3
        for y2 in range(H2):
            for x2 in range(W2):
                yi, xi = 2 * y2 + ky - 1, 2 * x2 + kx - 1
                if 0 <= yi < HP and 0 <= xi < WP:
                    sel[t, y2 * W2 + x2, yi * WP + xi] = 1.0
    return sel


def _conv2_selection_batched(sel, B):
    """Block-diagonal (over the B images) selection with rows ordered
    (tap, image, out_pos) and columns ordered (image, pooled_pos)."""
    T, P2, P = sel.shape
    selB = np.zeros((T, B, P2, B, P), np.float32)
    for b in range(B):
        selB[:, b, :, b, :] = sel
    return selB.reshape(T * B * P2, B * P)


# --------------------------- forward wrapper -----------------------------------

def init_params(key, out_dim=64):
    k1, k2, k3, k4, k5, k6 = jax.random.split(key, 6)
    return dict(
        w1=jax.random.normal(k1, (32, 1, 5, 5), jnp.float32) * 0.10,   # Conv2d(1, 32, 5)
        b1=jax.random.normal(k2, (32,), jnp.float32) * 0.05,
        w2=jax.random.normal(k3, (64, 32, 3, 3), jnp.float32) * 0.05,  # Conv2d(32, 64, 3)
        b2=jax.random.normal(k4, (64,), jnp.float32) * 0.05,
        wfc=jax.random.normal(k5, (out_dim, 64), jnp.float32) * 0.10,  # Linear(64, out_dim)
        bfc=jax.random.normal(k6, (out_dim,), jnp.float32) * 0.05,
    )


def semantic_feature_extractor_forward(x_nchw, params):
    """x_nchw: (N, 1, H, W) -> (N, out_dim), matching the PyTorch module."""
    N, _, H, W = x_nchw.shape
    H1 = (H + 4 - 5) // 2 + 1            # conv1: k=5, s=2, p=2
    W1 = (W + 4 - 5) // 2 + 1
    HP, WP = H1 // 2, W1 // 2            # floor-mode MaxPool2d(2)
    H2 = (HP + 2 - 3) // 2 + 1           # conv2: k=3, s=2, p=1
    W2 = (WP + 2 - 3) // 2 + 1
    P, P2 = HP * WP, H2 * W2
    OD = params["wfc"].shape[0]
    ODp = ((OD + 127) // 128) * 128      # lane-dense (padded) output width

    # Batch-block size: amortize per-grid-step overhead, keep the grid length
    # >= 2 when possible (feeds both v7x TensorCores), and keep the resident
    # sel / p1 blocks inside a conservative VMEM budget (v5e 16 MiB scoped).
    B = min(8, max(1, N // 2))
    while B > 1 and (36 * P2 * P * B * B > (4 << 20) or B * P * 512 > (2 << 20)):
        B -= 1
    G = -(-N // B)                       # number of grid steps
    NP = G * B                           # padded batch
    assert G == 1 or (B * P) % 8 == 0, "batch-block rows must be sublane aligned"

    # Wrapper-side glue: zero-pad, one constant-index gather builds the
    # lane-dense conv1 im2col block (quadrant packed, with a constant 1.0 bias
    # lane added).  Everything else is one-time parameter repacking.
    x = x_nchw.reshape(N, H, W).astype(jnp.float32)
    if NP != N:
        x = jnp.concatenate([x, jnp.zeros((NP - N, H, W), jnp.float32)], axis=0)
    xp = jnp.pad(x, ((0, 0), (2, 2), (2, 2)))
    rows, cols = _conv1_lane_packed_indices(HP, WP)
    bias_mask = np.zeros((128,), np.float32)
    bias_mask[25::32] = 1.0                                   # lanes q*32 + 25
    p1 = (xp[:, rows, cols] + bias_mask).reshape(NP * P, 128)

    # conv1 weight -> 128x128 block-diagonal, with b1 in the bias row.
    w1r = jnp.transpose(params["w1"], (2, 3, 1, 0)).reshape(25, 32)
    w1r = jnp.concatenate([w1r, params["b1"].reshape(1, 32),
                           jnp.zeros((6, 32), jnp.float32)], axis=0)   # (32, 32)
    w1bd = jnp.kron(jnp.eye(4, dtype=jnp.float32), w1r)                # (128, 128)
    # conv2 weights per tap, matching the sel row order.
    w2s = jnp.transpose(params["w2"], (2, 3, 1, 0)).reshape(9, 32, 64)
    selB = jnp.asarray(
        _conv2_selection_batched(_conv2_selection(HP, WP, H2, W2), B))
    # per-image average-pool matrix with the 1/P2 scale folded in.
    poolmat = jnp.asarray(np.kron(np.eye(B, dtype=np.float32),
                                  np.full((1, P2), 1.0 / P2, np.float32)))
    wfc = jnp.pad(params["wfc"].T.astype(jnp.float32), ((0, 0), (0, ODp - OD)))
    bfc = jnp.pad(params["bfc"].astype(jnp.float32), (0, ODp - OD)).reshape(1, ODp)
    b2 = params["b2"].reshape(1, 64).astype(jnp.float32)

    out = pl.pallas_call(
        _fused_kernel,
        out_shape=jax.ShapeDtypeStruct((G, B, ODp), jnp.float32),
        grid=(G,),
        in_specs=[
            pl.BlockSpec((B * P, 128), lambda i: (i, 0)),          # p1 block
            pl.BlockSpec((128, 128), lambda i: (0, 0)),            # w1 block-diag
            pl.BlockSpec((9 * B * P2, B * P), lambda i: (0, 0)),   # conv2 sel
            pl.BlockSpec((9, 32, 64), lambda i: (0, 0, 0)),        # conv2 weights
            pl.BlockSpec((1, 64), lambda i: (0, 0)),               # b2
            pl.BlockSpec((B, B * P2), lambda i: (0, 0)),           # avg-pool matrix
            pl.BlockSpec((64, ODp), lambda i: (0, 0)),             # fc weight (padded)
            pl.BlockSpec((1, ODp), lambda i: (0, 0)),              # fc bias (padded)
        ],
        out_specs=pl.BlockSpec((1, B, ODp), lambda i: (i, 0, 0)),
        compiler_params=pltpu.CompilerParams(
            dimension_semantics=("parallel",)),
    )(p1, w1bd, selB, w2s, b2, poolmat, wfc, bfc)
    return out.reshape(NP, ODp)[:N, :OD]


# --------------------------- pure-JAX reference --------------------------------

def reference_forward(x_nchw, params):
    y = jax.lax.conv_general_dilated(
        x_nchw, params["w1"], window_strides=(2, 2),
        padding=((2, 2), (2, 2)),
        dimension_numbers=("NCHW", "OIHW", "NCHW"))
    y = jnp.maximum(y + params["b1"][None, :, None, None], 0.0)
    y = jax.lax.reduce_window(y, -jnp.inf, jax.lax.max,
                              (1, 1, 2, 2), (1, 1, 2, 2), "VALID")
    y = jax.lax.conv_general_dilated(
        y, params["w2"], window_strides=(2, 2),
        padding=((1, 1), (1, 1)),
        dimension_numbers=("NCHW", "OIHW", "NCHW"))
    y = jnp.maximum(y + params["b2"][None, :, None, None], 0.0)
    y = jnp.mean(y, axis=(2, 3))
    y = y @ params["wfc"].T + params["bfc"]
    return jnp.maximum(y, 0.0)


# --------------------------- main ----------------------------------------------

if __name__ == "__main__":
    key = jax.random.PRNGKey(0)
    kx, kp = jax.random.split(key)

    # Small shapes consistent with the module: (N, 1, H, W), out_dim=64.
    # N=16 exercises the batched (B=8, grid=2) path.
    N, H, W, out_dim = 16, 32, 32, 64
    x = jax.random.normal(kx, (N, 1, H, W), jnp.float32)
    params = init_params(kp, out_dim)

    fwd = jax.jit(semantic_feature_extractor_forward)
    out = jax.block_until_ready(fwd(x, params))

    assert out.shape == (N, out_dim), out.shape
    ref = reference_forward(x, params)
    max_err = float(jnp.max(jnp.abs(out - ref)))
    assert jnp.allclose(out, ref, atol=1e-3, rtol=1e-3), f"max abs err = {max_err}"

    print("KERNEL_OK")
</pallas_src>

<mosaic_0001>
module attributes {stable_mosaic.version = 11 : i64} {
  func.func @_fused_kernel(%arg0: i32, %arg1: memref<512x128xf32, #tpu.memory_space<vmem>>, %arg2: memref<128x128xf32, #tpu.memory_space<vmem>>, %arg3: memref<1152x512xf32, #tpu.memory_space<vmem>>, %arg4: memref<9x32x64xf32, #tpu.memory_space<vmem>>, %arg5: memref<1x64xf32, #tpu.memory_space<vmem>>, %arg6: memref<8x128xf32, #tpu.memory_space<vmem>>, %arg7: memref<64x128xf32, #tpu.memory_space<vmem>>, %arg8: memref<1x128xf32, #tpu.memory_space<vmem>>, %arg9: memref<1x8x128xf32, #tpu.memory_space<vmem>>) attributes {dimension_semantics = [#tpu.dimension_semantics<parallel>], iteration_bounds = array<i64: 2>, scalar_prefetch = 0 : i64, scratch_operands = 0 : i64, tpu.core_type = #tpu.core_type<tc>, window_params = [{transform_indices = @transform_0, window_bounds = array<i64: 512, 128>}, {pipeline_mode = #tpu.pipeline_mode<synchronous>, transform_indices = @transform_1, window_bounds = array<i64: 128, 128>}, {pipeline_mode = #tpu.pipeline_mode<synchronous>, transform_indices = @transform_2, window_bounds = array<i64: 1152, 512>}, {pipeline_mode = #tpu.pipeline_mode<synchronous>, transform_indices = @transform_3, window_bounds = array<i64: 9, 32, 64>}, {pipeline_mode = #tpu.pipeline_mode<synchronous>, transform_indices = @transform_4, window_bounds = array<i64: 1, 64>}, {pipeline_mode = #tpu.pipeline_mode<synchronous>, transform_indices = @transform_5, window_bounds = array<i64: 8, 128>}, {pipeline_mode = #tpu.pipeline_mode<synchronous>, transform_indices = @transform_6, window_bounds = array<i64: 64, 128>}, {pipeline_mode = #tpu.pipeline_mode<synchronous>, transform_indices = @transform_7, window_bounds = array<i64: 1, 128>}, {transform_indices = @transform_8, window_bounds = array<i64: 1, 8, 128>}]} {
    %c0 = arith.constant 0 : index
    %c0_0 = arith.constant 0 : index
    %0 = vector.load %arg1[%c0, %c0_0] : memref<512x128xf32, #tpu.memory_space<vmem>>, vector<512x128xf32>
    %c0_1 = arith.constant 0 : index
    %c0_2 = arith.constant 0 : index
    %1 = vector.load %arg2[%c0_1, %c0_2] : memref<128x128xf32, #tpu.memory_space<vmem>>, vector<128x128xf32>
    %cst = arith.constant dense<0.000000e+00> : vector<512x128xf32>
    %2 = tpu.matmul %0, %1, %cst {dimension_numbers = #tpu.dot_dimension_numbers<[1], [0], [0], [1], [0, 0, 1, 1], [], []>} : vector<512x128xf32>, vector<128x128xf32>, vector<512x128xf32> -> vector<512x128xf32>
    %cst_3 = arith.constant 0.000000e+00 : f32
    %3 = vector.broadcast %cst_3 : f32 to vector<512x128xf32>
    %4 = arith.maximumf %2, %3 : vector<512x128xf32>
    %5 = vector.extract_strided_slice %4 {offsets = [0, 0], sizes = [512, 32], strides = [1, 1]} : vector<512x128xf32> to vector<512x32xf32>
    %6 = vector.extract_strided_slice %4 {offsets = [0, 32], sizes = [512, 32], strides = [1, 1]} : vector<512x128xf32> to vector<512x32xf32>
    %7 = arith.maximumf %5, %6 : vector<512x32xf32>
    %8 = vector.extract_strided_slice %4 {offsets = [0, 64], sizes = [512, 32], strides = [1, 1]} : vector<512x128xf32> to vector<512x32xf32>
    %9 = vector.extract_strided_slice %4 {offsets = [0, 96], sizes = [512, 32], strides = [1, 1]} : vector<512x128xf32> to vector<512x32xf32>
    %10 = arith.maximumf %8, %9 : vector<512x32xf32>
    %11 = arith.maximumf %7, %10 : vector<512x32xf32>
    %c0_4 = arith.constant 0 : index
    %c0_5 = arith.constant 0 : index
    %12 = vector.load %arg3[%c0_4, %c0_5] : memref<1152x512xf32, #tpu.memory_space<vmem>>, vector<1152x512xf32>
    %cst_6 = arith.constant dense<0.000000e+00> : vector<1152x32xf32>
    %13 = tpu.matmul %12, %11, %cst_6 {dimension_numbers = #tpu.dot_dimension_numbers<[1], [0], [0], [1], [0, 0, 1, 1], [], []>} : vector<1152x512xf32>, vector<512x32xf32>, vector<1152x32xf32> -> vector<1152x32xf32>
    %14 = vector.extract_strided_slice %13 {offsets = [0, 0], sizes = [128, 32], strides = [1, 1]} : vector<1152x32xf32> to vector<128x32xf32>
    %c0_7 = arith.constant 0 : index
    %c0_8 = arith.constant 0 : index
    %c0_9 = arith.constant 0 : index
    %15 = vector.load %arg4[%c0_7, %c0_8, %c0_9] : memref<9x32x64xf32, #tpu.memory_space<vmem>>, vector<1x32x64xf32>
    %16 = vector.shape_cast %15 : vector<1x32x64xf32> to vector<32x64xf32>
    %cst_10 = arith.constant dense<0.000000e+00> : vector<128x64xf32>
    %17 = tpu.matmul %14, %16, %cst_10 {dimension_numbers = #tpu.dot_dimension_numbers<[1], [0], [0], [1], [0, 0, 1, 1], [], []>} : vector<128x32xf32>, vector<32x64xf32>, vector<128x64xf32> -> vector<128x64xf32>
    %18 = vector.extract_strided_slice %13 {offsets = [128, 0], sizes = [128, 32], strides = [1, 1]} : vector<1152x32xf32> to vector<128x32xf32>
    %c1 = arith.constant 1 : index
    %c0_11 = arith.constant 0 : index
    %c0_12 = arith.constant 0 : index
    %19 = vector.load %arg4[%c1, %c0_11, %c0_12] : memref<9x32x64xf32, #tpu.memory_space<vmem>>, vector<1x32x64xf32>
    %20 = vector.shape_cast %19 : vector<1x32x64xf32> to vector<32x64xf32>
    %cst_13 = arith.constant dense<0.000000e+00> : vector<128x64xf32>
    %21 = tpu.matmul %18, %20, %cst_13 {dimension_numbers = #tpu.dot_dimension_numbers<[1], [0], [0], [1], [0, 0, 1, 1], [], []>} : vector<128x32xf32>, vector<32x64xf32>, vector<128x64xf32> -> vector<128x64xf32>
    %22 = vector.extract_strided_slice %13 {offsets = [256, 0], sizes = [128, 32], strides = [1, 1]} : vector<1152x32xf32> to vector<128x32xf32>
    %c2 = arith.constant 2 : index
    %c0_14 = arith.constant 0 : index
    %c0_15 = arith.constant 0 : index
    %23 = vector.load %arg4[%c2, %c0_14, %c0_15] : memref<9x32x64xf32, #tpu.memory_space<vmem>>, vector<1x32x64xf32>
    %24 = vector.shape_cast %23 : vector<1x32x64xf32> to vector<32x64xf32>
    %cst_16 = arith.constant dense<0.000000e+00> : vector<128x64xf32>
    %25 = tpu.matmul %22, %24, %cst_16 {dimension_numbers = #tpu.dot_dimension_numbers<[1], [0], [0], [1], [0, 0, 1, 1], [], []>} : vector<128x32xf32>, vector<32x64xf32>, vector<128x64xf32> -> vector<128x64xf32>
    %26 = vector.extract_strided_slice %13 {offsets = [384, 0], sizes = [128, 32], strides = [1, 1]} : vector<1152x32xf32> to vector<128x32xf32>
    %c3 = arith.constant 3 : index
    %c0_17 = arith.constant 0 : index
    %c0_18 = arith.constant 0 : index
    %27 = vector.load %arg4[%c3, %c0_17, %c0_18] : memref<9x32x64xf32, #tpu.memory_space<vmem>>, vector<1x32x64xf32>
    %28 = vector.shape_cast %27 : vector<1x32x64xf32> to vector<32x64xf32>
    %cst_19 = arith.constant dense<0.000000e+00> : vector<128x64xf32>
    %29 = tpu.matmul %26, %28, %cst_19 {dimension_numbers = #tpu.dot_dimension_numbers<[1], [0], [0], [1], [0, 0, 1, 1], [], []>} : vector<128x32xf32>, vector<32x64xf32>, vector<128x64xf32> -> vector<128x64xf32>
    %30 = vector.extract_strided_slice %13 {offsets = [512, 0], sizes = [128, 32], strides = [1, 1]} : vector<1152x32xf32> to vector<128x32xf32>
    %c4 = arith.constant 4 : index
    %c0_20 = arith.constant 0 : index
    %c0_21 = arith.constant 0 : index
    %31 = vector.load %arg4[%c4, %c0_20, %c0_21] : memref<9x32x64xf32, #tpu.memory_space<vmem>>, vector<1x32x64xf32>
    %32 = vector.shape_cast %31 : vector<1x32x64xf32> to vector<32x64xf32>
    %cst_22 = arith.constant dense<0.000000e+00> : vector<128x64xf32>
    %33 = tpu.matmul %30, %32, %cst_22 {dimension_numbers = #tpu.dot_dimension_numbers<[1], [0], [0], [1], [0, 0, 1, 1], [], []>} : vector<128x32xf32>, vector<32x64xf32>, vector<128x64xf32> -> vector<128x64xf32>
    %34 = vector.extract_strided_slice %13 {offsets = [640, 0], sizes = [128, 32], strides = [1, 1]} : vector<1152x32xf32> to vector<128x32xf32>
    %c5 = arith.constant 5 : index
    %c0_23 = arith.constant 0 : index
    %c0_24 = arith.constant 0 : index
    %35 = vector.load %arg4[%c5, %c0_23, %c0_24] : memref<9x32x64xf32, #tpu.memory_space<vmem>>, vector<1x32x64xf32>
    %36 = vector.shape_cast %35 : vector<1x32x64xf32> to vector<32x64xf32>
    %cst_25 = arith.constant dense<0.000000e+00> : vector<128x64xf32>
    %37 = tpu.matmul %34, %36, %cst_25 {dimension_numbers = #tpu.dot_dimension_numbers<[1], [0], [0], [1], [0, 0, 1, 1], [], []>} : vector<128x32xf32>, vector<32x64xf32>, vector<128x64xf32> -> vector<128x64xf32>
    %38 = vector.extract_strided_slice %13 {offsets = [768, 0], sizes = [128, 32], strides = [1, 1]} : vector<1152x32xf32> to vector<128x32xf32>
    %c6 = arith.constant 6 : index
    %c0_26 = arith.constant 0 : index
    %c0_27 = arith.constant 0 : index
    %39 = vector.load %arg4[%c6, %c0_26, %c0_27] : memref<9x32x64xf32, #tpu.memory_space<vmem>>, vector<1x32x64xf32>
    %40 = vector.shape_cast %39 : vector<1x32x64xf32> to vector<32x64xf32>
    %cst_28 = arith.constant dense<0.000000e+00> : vector<128x64xf32>
    %41 = tpu.matmul %38, %40, %cst_28 {dimension_numbers = #tpu.dot_dimension_numbers<[1], [0], [0], [1], [0, 0, 1, 1], [], []>} : vector<128x32xf32>, vector<32x64xf32>, vector<128x64xf32> -> vector<128x64xf32>
    %42 = vector.extract_strided_slice %13 {offsets = [896, 0], sizes = [128, 32], strides = [1, 1]} : vector<1152x32xf32> to vector<128x32xf32>
    %c7 = arith.constant 7 : index
    %c0_29 = arith.constant 0 : index
    %c0_30 = arith.constant 0 : index
    %43 = vector.load %arg4[%c7, %c0_29, %c0_30] : memref<9x32x64xf32, #tpu.memory_space<vmem>>, vector<1x32x64xf32>
    %44 = vector.shape_cast %43 : vector<1x32x64xf32> to vector<32x64xf32>
    %cst_31 = arith.constant dense<0.000000e+00> : vector<128x64xf32>
    %45 = tpu.matmul %42, %44, %cst_31 {dimension_numbers = #tpu.dot_dimension_numbers<[1], [0], [0], [1], [0, 0, 1, 1], [], []>} : vector<128x32xf32>, vector<32x64xf32>, vector<128x64xf32> -> vector<128x64xf32>
    %46 = vector.extract_strided_slice %13 {offsets = [1024, 0], sizes = [128, 32], strides = [1, 1]} : vector<1152x32xf32> to vector<128x32xf32>
    %c8 = arith.constant 8 : index
    %c0_32 = arith.constant 0 : index
    %c0_33 = arith.constant 0 : index
    %47 = vector.load %arg4[%c8, %c0_32, %c0_33] : memref<9x32x64xf32, #tpu.memory_space<vmem>>, vector<1x32x64xf32>
    %48 = vector.shape_cast %47 : vector<1x32x64xf32> to vector<32x64xf32>
    %cst_34 = arith.constant dense<0.000000e+00> : vector<128x64xf32>
    %49 = tpu.matmul %46, %48, %cst_34 {dimension_numbers = #tpu.dot_dimension_numbers<[1], [0], [0], [1], [0, 0, 1, 1], [], []>} : vector<128x32xf32>, vector<32x64xf32>, vector<128x64xf32> -> vector<128x64xf32>
    %50 = arith.addf %17, %21 : vector<128x64xf32>
    %51 = arith.addf %25, %29 : vector<128x64xf32>
    %52 = arith.addf %33, %37 : vector<128x64xf32>
    %53 = arith.addf %41, %45 : vector<128x64xf32>
    %54 = arith.addf %50, %51 : vector<128x64xf32>
    %55 = arith.addf %52, %53 : vector<128x64xf32>
    %56 = arith.addf %54, %55 : vector<128x64xf32>
    %57 = arith.addf %56, %49 : vector<128x64xf32>
    %c0_35 = arith.constant 0 : index
    %c0_36 = arith.constant 0 : index
    %58 = vector.load %arg5[%c0_35, %c0_36] : memref<1x64xf32, #tpu.memory_space<vmem>>, vector<1x64xf32>
    %59 = vector.broadcast %58 : vector<1x64xf32> to vector<128x64xf32>
    %60 = arith.addf %57, %59 : vector<128x64xf32>
    %cst_37 = arith.constant 0.000000e+00 : f32
    %61 = vector.broadcast %cst_37 : f32 to vector<128x64xf32>
    %62 = arith.maximumf %60, %61 : vector<128x64xf32>
    %c0_38 = arith.constant 0 : index
    %c0_39 = arith.constant 0 : index
    %63 = vector.load %arg6[%c0_38, %c0_39] : memref<8x128xf32, #tpu.memory_space<vmem>>, vector<8x128xf32>
    %cst_40 = arith.constant dense<0.000000e+00> : vector<8x64xf32>
    %64 = tpu.matmul %63, %62, %cst_40 {dimension_numbers = #tpu.dot_dimension_numbers<[1], [0], [0], [1], [0, 0, 1, 1], [], []>} : vector<8x128xf32>, vector<128x64xf32>, vector<8x64xf32> -> vector<8x64xf32>
    %c0_41 = arith.constant 0 : index
    %c0_42 = arith.constant 0 : index
    %65 = vector.load %arg7[%c0_41, %c0_42] : memref<64x128xf32, #tpu.memory_space<vmem>>, vector<64x128xf32>
    %cst_43 = arith.constant dense<0.000000e+00> : vector<8x128xf32>
    %66 = tpu.matmul %64, %65, %cst_43 {dimension_numbers = #tpu.dot_dimension_numbers<[1], [0], [0], [1], [0, 0, 1, 1], [], []>} : vector<8x64xf32>, vector<64x128xf32>, vector<8x128xf32> -> vector<8x128xf32>
    %c0_44 = arith.constant 0 : index
    %c0_45 = arith.constant 0 : index
    %67 = vector.load %arg8[%c0_44, %c0_45] : memref<1x128xf32, #tpu.memory_space<vmem>>, vector<1x128xf32>
    %68 = vector.broadcast %67 : vector<1x128xf32> to vector<8x128xf32>
    %69 = arith.addf %66, %68 : vector<8x128xf32>
    %cst_46 = arith.constant 0.000000e+00 : f32
    %70 = vector.broadcast %cst_46 : f32 to vector<8x128xf32>
    %71 = arith.maximumf %69, %70 : vector<8x128xf32>
    %c0_47 = arith.constant 0 : index
    %c0_48 = arith.constant 0 : index
    %c0_49 = arith.constant 0 : index
    %72 = vector.load %arg9[%c0_47, %c0_48, %c0_49] : memref<1x8x128xf32, #tpu.memory_space<vmem>>, vector<1x8x128xf32>
    %73 = vector.shape_cast %72 : vector<1x8x128xf32> to vector<8x128xf32>
    %74 = vector.shape_cast %71 : vector<8x128xf32> to vector<1x8x128xf32>
    tpu.vector_store %arg9[%c0_47, %c0_48, %c0_49], %74 {strides = array<i32>} : memref<1x8x128xf32, #tpu.memory_space<vmem>>, vector<1x8x128xf32>,
    return
  }
  func.func @transform_0(%arg0: i32) -> (i32, i32) {
    %c0_i32 = arith.constant 0 : i32
    %c0_i32_0 = arith.constant 0 : i32
    return %arg0, %c0_i32 : i32, i32
  }
  func.func @transform_1(%arg0: i32) -> (i32, i32) {
    %c0_i32 = arith.constant 0 : i32
    %c0_i32_0 = arith.constant 0 : i32
    %c0_i32_1 = arith.constant 0 : i32
    return %c0_i32, %c0_i32_0 : i32, i32
  }
  func.func @transform_2(%arg0: i32) -> (i32, i32) {
    %c0_i32 = arith.constant 0 : i32
    %c0_i32_0 = arith.constant 0 : i32
    %c0_i32_1 = arith.constant 0 : i32
    return %c0_i32, %c0_i32_0 : i32, i32
  }
  func.func @transform_3(%arg0: i32) -> (i32, i32, i32) {
    %c0_i32 = arith.constant 0 : i32
    %c0_i32_0 = arith.constant 0 : i32
    %c0_i32_1 = arith.constant 0 : i32
    %c0_i32_2 = arith.constant 0 : i32
    return %c0_i32, %c0_i32_0, %c0_i32_1 : i32, i32, i32
  }
  func.func @transform_4(%arg0: i32) -> (i32, i32) {
    %c0_i32 = arith.constant 0 : i32
    %c0_i32_0 = arith.constant 0 : i32
    %c0_i32_1 = arith.constant 0 : i32
    return %c0_i32, %c0_i32_0 : i32, i32
  }
  func.func @transform_5(%arg0: i32) -> (i32, i32) {
    %c0_i32 = arith.constant 0 : i32
    %c0_i32_0 = arith.constant 0 : i32
    %c0_i32_1 = arith.constant 0 : i32
    return %c0_i32, %c0_i32_0 : i32, i32
  }
  func.func @transform_6(%arg0: i32) -> (i32, i32) {
    %c0_i32 = arith.constant 0 : i32
    %c0_i32_0 = arith.constant 0 : i32
    %c0_i32_1 = arith.constant 0 : i32
    return %c0_i32, %c0_i32_0 : i32, i32
  }
  func.func @transform_7(%arg0: i32) -> (i32, i32) {
    %c0_i32 = arith.constant 0 : i32
    %c0_i32_0 = arith.constant 0 : i32
    %c0_i32_1 = arith.constant 0 : i32
    return %c0_i32, %c0_i32_0 : i32, i32
  }
  func.func @transform_8(%arg0: i32) -> (i32, i32, i32) {
    %c0_i32 = arith.constant 0 : i32
    %c0_i32_0 = arith.constant 0 : i32
    %c0_i32_1 = arith.constant 0 : i32
    return %arg0, %c0_i32, %c0_i32_0 : i32, i32, i32
  }
}

</mosaic_0001>

<llo_original>
// kernel: semantic_feature_extractor_forward.1
$region0: #{semantic_feature_extractor_forward.1}
  #allocation0 [shape = 'u32[]', space=smem, size = 0x4, offset = 0x4, fixed_abs, tag = 'smem constant byte address 0x4 - core index']
  #allocation1 [shape = 'u32[144,128]{1,0:T(1,128)}', space=vmem, size = 0x12000, scoped, tag = 'internal scratch']
  %s0 = inlined_call_operand.vmem [shape: f32[1024,128], index: 0, kind: input, shape index: {}]
  %s1 = inlined_call_operand.vmem [shape: f32[128,128], index: 1, kind: input, shape index: {}]
  %s2 = inlined_call_operand.vmem [shape: f32[1152,512], index: 2, kind: input, shape index: {}]
  %s3 = inlined_call_operand.vmem [shape: f32[9,32,64], index: 3, kind: input, shape index: {}]
  %s4 = inlined_call_operand.vmem [shape: f32[1,64], index: 4, kind: input, shape index: {}]
  %s5 = inlined_call_operand.vmem [shape: f32[8,128], index: 5, kind: input, shape index: {}]
  %s6 = inlined_call_operand.vmem [shape: f32[64,128], index: 6, kind: input, shape index: {}]
  %s7 = inlined_call_operand.vmem [shape: f32[1,128], index: 7, kind: input, shape index: {}]
  %s8 = inlined_call_operand.hbm [shape: f32[2,8,128], index: 8, kind: output, shape index: {}]
  %s9 = sld [smem:[#allocation0]]
  $region65: #{semantic_feature_extractor_forward.1} parent=0
    _
  %s11 = ssub.s32 1, %s9
  %s12 = scalar_select 0, %s11, %s9
  $region1: #{semantic_feature_extractor_forward.1} parent=0
    #allocation2 [shape = 'u8[8192]{0}', space=vmem, size = 0x2000, scoped, tag = 'output window, operand 0']
    #allocation3 [shape = 's32[2]{0}', space=sflag, size = 0x8, scoped, tag = 'scoped memory for semantic_feature_extractor_forward.1']
    %13 = vsyncpa [#allocation3], 0
    %s14 = scalar_lea.sflag [#allocation3], 1
    %15 = vsyncpa %s14, 0
    loop: start=0, step=1, limit=4
    $region2: #{semantic_feature_extractor_forward.1} parent=1 // loop_pre_header
      _
    $region3: #{semantic_feature_extractor_forward.1} parent=1 // loop_header
      %s17 = sphi 0, %s21
      %p18 = scmp.ge.s32.totalorder %s17, 4
      %s27 = sphi 0, %s29
      %s30 = sphi 0, %s27
      %s31 = sphi 0, %s30
      %s47 = sphi 0, %s31
      %s51 = sphi 0, %s51
      %s53 = sphi 0, %s51
      %s54 = sphi 0, %s53
      %s68 = sphi 0, %s54
      %s72 = sphi 0, %s72
      %s74 = sphi 0, %s72
      %s75 = sphi 0, %s74
      %s89 = sphi 0, %s75
      %s93 = sphi 0, %s93
      %s95 = sphi 0, %s93
      %s96 = sphi 0, %s95
      %s110 = sphi 0, %s96
      %s114 = sphi 0, %s114
      %s116 = sphi 0, %s114
      %s117 = sphi 0, %s116
      %s131 = sphi 0, %s117
      %s135 = sphi 0, %s135
      %s137 = sphi 0, %s135
      %s138 = sphi 0, %s137
      %s152 = sphi 0, %s138
      %s156 = sphi 0, %s156
      %s158 = sphi 0, %s156
      %s159 = sphi 0, %s158
      %s173 = sphi 0, %s159
      %s177 = sphi 0, %s177
      %s179 = sphi 0, %s177
      %s180 = sphi 0, %s179
      %s194 = sphi 0, %s180
      %s200 = sphi 0, %s202
      %s203 = sphi 0, %s200
      %s204 = sphi 0, %s203
      %s220 = sphi 0, %s204
    $region4: #{semantic_feature_extractor_forward.1} parent=1 // loop_header_branch
      %20 = sbr.rel (%p18) target = $region8
    $region5: #{semantic_feature_extractor_forward.1} parent=1 // loop_body
      %s22 = ssub.s32 %s17, 1
      %s23 = ssub.s32 %s17, 2
      %s24 = sadd.s32 %s17, 1
      %s25 = ssub.s32 %s17, %s24
      %p26 = scmp.eq.s32.totalorder %s25, 0
      %s28 = sadd.s32 %s27, 1
      %s29 = scalar_select %p26, %s27, %s28
      %p32 = pneg %p26
      %p33 = scmp.eq.s32.totalorder %s17, 1
      %p34 = por %p32, %p33
      %p35 = scmp.ne.s32.totalorder %s27, %s30
      %p36 = scmp.eq.s32.totalorder %s17, 0
      %p37 = por %p35, %p36
      %p38 = scmp.ne.s32.totalorder %s27, %s30
      %p39 = scmp.eq.s32.totalorder %s22, 1
      %p40 = por %p38, %p39
      %p41 = scmp.ne.s32.totalorder %s30, %s31
      %p42 = scmp.eq.s32.totalorder %s22, 0
      %p43 = por %p41, %p42
      %p44 = scmp.ne.s32.totalorder %s30, %s31
      %p45 = scmp.eq.s32.totalorder %s23, 1
      %p46 = por %p44, %p45
      %p48 = scmp.ne.s32.totalorder %s31, %s47
      %p49 = scmp.eq.s32.totalorder %s23, 0
      %p50 = por %p48, %p49
      %s52 = sadd.s32 %s51, 1
      %p55 = scmp.eq.s32.totalorder %s17, 1
      %p56 = scmp.ne.s32.totalorder %s51, %s53
      %p57 = scmp.eq.s32.totalorder %s17, 0
      %p58 = por %p56, %p57
      %p59 = scmp.ne.s32.totalorder %s51, %s53
      %p60 = scmp.eq.s32.totalorder %s22, 1
      %p61 = por %p59, %p60
      %p62 = scmp.ne.s32.totalorder %s53, %s54
      %p63 = scmp.eq.s32.totalorder %s22, 0
      %p64 = por %p62, %p63
      %p65 = scmp.ne.s32.totalorder %s53, %s54
      %p66 = scmp.eq.s32.totalorder %s23, 1
      %p67 = por %p65, %p66
      %p69 = scmp.ne.s32.totalorder %s54, %s68
      %p70 = scmp.eq.s32.totalorder %s23, 0
      %p71 = por %p69, %p70
      %s73 = sadd.s32 %s72, 1
      %p76 = scmp.eq.s32.totalorder %s17, 1
      %p77 = scmp.ne.s32.totalorder %s72, %s74
      %p78 = scmp.eq.s32.totalorder %s17, 0
      %p79 = por %p77, %p78
      %p80 = scmp.ne.s32.totalorder %s72, %s74
      %p81 = scmp.eq.s32.totalorder %s22, 1
      %p82 = por %p80, %p81
      %p83 = scmp.ne.s32.totalorder %s74, %s75
      %p84 = scmp.eq.s32.totalorder %s22, 0
      %p85 = por %p83, %p84
      %p86 = scmp.ne.s32.totalorder %s74, %s75
      %p87 = scmp.eq.s32.totalorder %s23, 1
      %p88 = por %p86, %p87
      %p90 = scmp.ne.s32.totalorder %s75, %s89
      %p91 = scmp.eq.s32.totalorder %s23, 0
      %p92 = por %p90, %p91
      %s94 = sadd.s32 %s93, 1
      %p97 = scmp.eq.s32.totalorder %s17, 1
      %p98 = scmp.ne.s32.totalorder %s93, %s95
      %p99 = scmp.eq.s32.totalorder %s17, 0
      %p100 = por %p98, %p99
      %p101 = scmp.ne.s32.totalorder %s93, %s95
      %p102 = scmp.eq.s32.totalorder %s22, 1
      %p103 = por %p101, %p102
      %p104 = scmp.ne.s32.totalorder %s95, %s96
      %p105 = scmp.eq.s32.totalorder %s22, 0
      %p106 = por %p104, %p105
      %p107 = scmp.ne.s32.totalorder %s95, %s96
      %p108 = scmp.eq.s32.totalorder %s23, 1
      %p109 = por %p107, %p108
      %p111 = scmp.ne.s32.totalorder %s96, %s110
      %p112 = scmp.eq.s32.totalorder %s23, 0
      %p113 = por %p111, %p112
      %s115 = sadd.s32 %s114, 1
      %p118 = scmp.eq.s32.totalorder %s17, 1
      %p119 = scmp.ne.s32.totalorder %s114, %s116
      %p120 = scmp.eq.s32.totalorder %s17, 0
      %p121 = por %p119, %p120
      %p122 = scmp.ne.s32.totalorder %s114, %s116
      %p123 = scmp.eq.s32.totalorder %s22, 1
      %p124 = por %p122, %p123
      %p125 = scmp.ne.s32.totalorder %s116, %s117
      %p126 = scmp.eq.s32.totalorder %s22, 0
      %p127 = por %p125, %p126
      %p128 = scmp.ne.s32.totalorder %s116, %s117
      %p129 = scmp.eq.s32.totalorder %s23, 1
      %p130 = por %p128, %p129
      %p132 = scmp.ne.s32.totalorder %s117, %s131
      %p133 = scmp.eq.s32.totalorder %s23, 0
      %p134 = por %p132, %p133
      %s136 = sadd.s32 %s135, 1
      %p139 = scmp.eq.s32.totalorder %s17, 1
      %p140 = scmp.ne.s32.totalorder %s135, %s137
      %p141 = scmp.eq.s32.totalorder %s17, 0
      %p142 = por %p140, %p141
      %p143 = scmp.ne.s32.totalorder %s135, %s137
      %p144 = scmp.eq.s32.totalorder %s22, 1
      %p145 = por %p143, %p144
      %p146 = scmp.ne.s32.totalorder %s137, %s138
      %p147 = scmp.eq.s32.totalorder %s22, 0
      %p148 = por %p146, %p147
      %p149 = scmp.ne.s32.totalorder %s137, %s138
      %p150 = scmp.eq.s32.totalorder %s23, 1
      %p151 = por %p149, %p150
      %p153 = scmp.ne.s32.totalorder %s138, %s152
      %p154 = scmp.eq.s32.totalorder %s23, 0
      %p155 = por %p153, %p154
      %s157 = sadd.s32 %s156, 1
      %p160 = scmp.eq.s32.totalorder %s17, 1
      %p161 = scmp.ne.s32.totalorder %s156, %s158
      %p162 = scmp.eq.s32.totalorder %s17, 0
      %p163 = por %p161, %p162
      %p164 = scmp.ne.s32.totalorder %s156, %s158
      %p165 = scmp.eq.s32.totalorder %s22, 1
      %p166 = por %p164, %p165
      %p167 = scmp.ne.s32.totalorder %s158, %s159
      %p168 = scmp.eq.s32.totalorder %s22, 0
      %p169 = por %p167, %p168
      %p170 = scmp.ne.s32.totalorder %s158, %s159
      %p171 = scmp.eq.s32.totalorder %s23, 1
      %p172 = por %p170, %p171
      %p174 = scmp.ne.s32.totalorder %s159, %s173
      %p175 = scmp.eq.s32.totalorder %s23, 0
      %p176 = por %p174, %p175
      %s178 = sadd.s32 %s177, 1
      %p181 = scmp.eq.s32.totalorder %s17, 1
      %p182 = scmp.ne.s32.totalorder %s177, %s179
      %p183 = scmp.eq.s32.totalorder %s17, 0
      %p184 = por %p182, %p183
      %p185 = scmp.ne.s32.totalorder %s177, %s179
      %p186 = scmp.eq.s32.totalorder %s22, 1
      %p187 = por %p185, %p186
      %p188 = scmp.ne.s32.totalorder %s179, %s180
      %p189 = scmp.eq.s32.totalorder %s22, 0
      %p190 = por %p188, %p189
      %p191 = scmp.ne.s32.totalorder %s179, %s180
      %p192 = scmp.eq.s32.totalorder %s23, 1
      %p193 = por %p191, %p192
      %p195 = scmp.ne.s32.totalorder %s180, %s194
      %p196 = scmp.eq.s32.totalorder %s23, 0
      %p197 = por %p195, %p196
      %s198 = ssub.s32 %s17, %s24
      %p199 = scmp.eq.s32.totalorder %s198, 0
      %s201 = sadd.s32 %s200, 1
      %s202 = scalar_select %p199, %s200, %s201
      %p205 = pneg %p199
      %p206 = scmp.eq.s32.totalorder %s17, 1
      %p207 = por %p205, %p206
      %p208 = scmp.ne.s32.totalorder %s200, %s203
      %p209 = scmp.eq.s32.totalorder %s17, 0
      %p210 = por %p208, %p209
      %p211 = scmp.ne.s32.totalorder %s200, %s203
      %p212 = scmp.eq.s32.totalorder %s22, 1
      %p213 = por %p211, %p212
      %p214 = scmp.ne.s32.totalorder %s203, %s204
      %p215 = scmp.eq.s32.totalorder %s22, 0
      %p216 = por %p214, %p215
      %p217 = scmp.ne.s32.totalorder %s203, %s204
      %p218 = scmp.eq.s32.totalorder %s23, 1
      %p219 = por %p217, %p218
      %p221 = scmp.ne.s32.totalorder %s204, %s220
      %p222 = scmp.eq.s32.totalorder %s23, 0
      %p223 = por %p221, %p222
      %p224 = scmp.le.s32.totalorder 1, %s17
      %p225 = scmp.lt.s32.totalorder %s17, 3
      %p226 = pnand %p224, %p225
      %p227 = pneg %p226
      // Predicated region
      $region9: #{semantic_feature_extractor_forward.1} parent=5 // pred_check
        _
      $region10: #{semantic_feature_extractor_forward.1} parent=5 // pred_check_branch
        %229 = sbr.rel (%p226) target = $region12
      $region11: #{semantic_feature_extractor_forward.1} parent=5 // pred_region
        %s230 = ssub.s32 %s17, 1
        // Predicated region
        $region13: #{semantic_feature_extractor_forward.1} parent=11 // pred_check
          %p231 = pneg %p64
        $region14: #{semantic_feature_extractor_forward.1} parent=11 // pred_check_branch
          %233 = sbr.rel (%p231) target = $region16
        $region15: #{semantic_feature_extractor_forward.1} parent=11 // pred_region
          _
        $region16: #{semantic_feature_extractor_forward.1} parent=11 // pred_fallthru
          _
        // Predicated region
        $region17: #{semantic_feature_extractor_forward.1} parent=11 // pred_check
          %p234 = pneg %p85
        $region18: #{semantic_feature_extractor_forward.1} parent=11 // pred_check_branch
          %236 = sbr.rel (%p234) target = $region20
        $region19: #{semantic_feature_extractor_forward.1} parent=11 // pred_region
          _
        $region20: #{semantic_feature_extractor_forward.1} parent=11 // pred_fallthru
          _
        // Predicated region
        $region21: #{semantic_feature_extractor_forward.1} parent=11 // pred_check
          %p237 = pneg %p106
        $region22: #{semantic_feature_extractor_forward.1} parent=11 // pred_check_branch
          %239 = sbr.rel (%p237) target = $region24
        $region23: #{semantic_feature_extractor_forward.1} parent=11 // pred_region
          _
        $region24: #{semantic_feature_extractor_forward.1} parent=11 // pred_fallthru
          _
        // Predicated region
        $region25: #{semantic_feature_extractor_forward.1} parent=11 // pred_check
          %p240 = pneg %p127
        $region26: #{semantic_feature_extractor_forward.1} parent=11 // pred_check_branch
          %242 = sbr.rel (%p240) target = $region28
        $region27: #{semantic_feature_extractor_forward.1} parent=11 // pred_region
          _
        $region28: #{semantic_feature_extractor_forward.1} parent=11 // pred_fallthru
          _
        // Predicated region
        $region29: #{semantic_feature_extractor_forward.1} parent=11 // pred_check
          %p243 = pneg %p148
        $region30: #{semantic_feature_extractor_forward.1} parent=11 // pred_check_branch
          %245 = sbr.rel (%p243) target = $region32
        $region31: #{semantic_feature_extractor_forward.1} parent=11 // pred_region
          _
        $region32: #{semantic_feature_extractor_forward.1} parent=11 // pred_fallthru
          _
        // Predicated region
        $region33: #{semantic_feature_extractor_forward.1} parent=11 // pred_check
          %p246 = pneg %p169
        $region34: #{semantic_feature_extractor_forward.1} parent=11 // pred_check_branch
          %248 = sbr.rel (%p246) target = $region36
        $region35: #{semantic_feature_extractor_forward.1} parent=11 // pred_region
          _
        $region36: #{semantic_feature_extractor_forward.1} parent=11 // pred_fallthru
          _
        // Predicated region
        $region37: #{semantic_feature_extractor_forward.1} parent=11 // pred_check
          %p249 = pneg %p190
        $region38: #{semantic_feature_extractor_forward.1} parent=11 // pred_check_branch
          %251 = sbr.rel (%p249) target = $region40
        $region39: #{semantic_feature_extractor_forward.1} parent=11 // pred_region
          _
        $region40: #{semantic_feature_extractor_forward.1} parent=11 // pred_fallthru
          _
      $region12: #{semantic_feature_extractor_forward.1} parent=5 // pred_fallthru
        _
      %p252 = scmp.lt.s32.totalorder %s17, 2
      // Predicated region
      $region41: #{semantic_feature_extractor_forward.1} parent=5 // pred_check
        %p253 = pneg %p252
      $region42: #{semantic_feature_extractor_forward.1} parent=5 // pred_check_branch
        %255 = sbr.rel (%p253) target = $region44
      $region43: #{semantic_feature_extractor_forward.1} parent=5 // pred_region
        // Predicated region
        $region45: #{semantic_feature_extractor_forward.1} parent=43 // pred_check
          %p256 = pneg %p37
        $region46: #{semantic_feature_extractor_forward.1} parent=43 // pred_check_branch
          %258 = sbr.rel (%p256) target = $region48
        $region47: #{semantic_feature_extractor_forward.1} parent=43 // pred_region
          %s259 = smul.u32 64, %s17
          %p260 = scmp.lt.s32.totalorder %s259, 127
          %s261 = scalar_select %p260, %s259, 127
          %s262 = smul.addr %s261, 8
          %s263 = scalar_lea.vmem %s0, %s262
          %s264 = smul.u32 64, %s17
        $region48: #{semantic_feature_extractor_forward.1} parent=43 // pred_fallthru
          _
      $region44: #{semantic_feature_extractor_forward.1} parent=5 // pred_fallthru
        _
      %p265 = scmp.le.s32.totalorder 1, %s17
      %p266 = scmp.lt.s32.totalorder %s17, 3
      %p267 = pnand %p265, %p266
      %p268 = pneg %p267
      // Predicated region
      $region49: #{semantic_feature_extractor_forward.1} parent=5 // pred_check
        _
      $region50: #{semantic_feature_extractor_forward.1} parent=5 // pred_check_branch
        %270 = sbr.rel (%p267) target = $region52
      $region51: #{semantic_feature_extractor_forward.1} parent=5 // pred_region
        %s271 = ssub.s32 %s17, 1
        %s272 = smul.u32 64, %s22
        %p273 = scmp.lt.s32.totalorder %s272, 127
        %s274 = scalar_select %p273, %s272, 127
        %s275 = smul.addr %s274, 8
        %s276 = scalar_lea.vmem %s0, %s275
        %p277 = pneg %p43
        %p278 = pneg %p40
        %p279 = pneg %p64
        %p280 = pneg %p61
        %p281 = pneg %p85
        %p282 = pneg %p82
        %p283 = pneg %p106
        %p284 = pneg %p103
        %p285 = pneg %p127
        %p286 = pneg %p124
        %p287 = pneg %p148
        %p288 = pneg %p145
        %p289 = pneg %p169
        %p290 = pneg %p166
        %p291 = pneg %p190
        %p292 = pneg %p187
        %p293 = pneg %p216
        %p294 = pneg %p213
        %s295 = sand.u32 %s203, 1
        %s296 = scalar_lea.sflag [#allocation3], %s295
        %s297 = sand.u32 %s203, 1
        %s298 = smul.addr %s297, 8
        %s299 = scalar_lea.vmem [#allocation2], %s298
        %s300 = smul.u32 64, %s22
        %p301 = scmp.lt.s32.totalorder %s300, 127
        %s302 = scalar_select %p301, %s300, 127
        %s303 = smul.addr %s302, 8
        %s304 = scalar_lea.vmem %s0, %s303
        %s305 = smul.u32 64, %s22
        %v306 = vld [vmem:[%s304] sm:$0xff]
        %v307 = vld [vmem:[%s304 + $0x8] sm:$0xff]
        %v308 = vld [vmem:[%s304 + $0x10] sm:$0xff]
        %v309 = vld [vmem:[%s304 + $0x18] sm:$0xff]
        %v310 = vld [vmem:[%s304 + $0x20] sm:$0xff]
        %v311 = vld [vmem:[%s304 + $0x28] sm:$0xff]
        %v312 = vld [vmem:[%s304 + $0x30] sm:$0xff]
        %v313 = vld [vmem:[%s304 + $0x38] sm:$0xff]
        %v314 = vld [vmem:[%s304 + $0x40] sm:$0xff]
        %v315 = vld [vmem:[%s304 + $0x48] sm:$0xff]
        %v316 = vld [vmem:[%s304 + $0x50] sm:$0xff]
        %v317 = vld [vmem:[%s304 + $0x58] sm:$0xff]
        %v318 = vld [vmem:[%s304 + $0x60] sm:$0xff]
        %v319 = vld [vmem:[%s304 + $0x68] sm:$0xff]
        %v320 = vld [vmem:[%s304 + $0x70] sm:$0xff]
        %v321 = vld [vmem:[%s304 + $0x78] sm:$0xff]
        %v322 = vld [vmem:[%s304 + $0x80] sm:$0xff]
        %v323 = vld [vmem:[%s304 + $0x88] sm:$0xff]
        %v324 = vld [vmem:[%s304 + $0x90] sm:$0xff]
        %v325 = vld [vmem:[%s304 + $0x98] sm:$0xff]
        %v326 = vld [vmem:[%s304 + $0xa0] sm:$0xff]
        %v327 = vld [vmem:[%s304 + $0xa8] sm:$0xff]
        %v328 = vld [vmem:[%s304 + $0xb0] sm:$0xff]
        %v329 = vld [vmem:[%s304 + $0xb8] sm:$0xff]
        %v330 = vld [vmem:[%s304 + $0xc0] sm:$0xff]
        %v331 = vld [vmem:[%s304 + $0xc8] sm:$0xff]
        %v332 = vld [vmem:[%s304 + $0xd0] sm:$0xff]
        %v333 = vld [vmem:[%s304 + $0xd8] sm:$0xff]
        %v334 = vld [vmem:[%s304 + $0xe0] sm:$0xff]
        %v335 = vld [vmem:[%s304 + $0xe8] sm:$0xff]
        %v336 = vld [vmem:[%s304 + $0xf0] sm:$0xff]
        %v337 = vld [vmem:[%s304 + $0xf8] sm:$0xff]
        %v338 = vld [vmem:[%s304 + $0x100] sm:$0xff]
        %v339 = vld [vmem:[%s304 + $0x108] sm:$0xff]
        %v340 = vld [vmem:[%s304 + $0x110] sm:$0xff]
        %v341 = vld [vmem:[%s304 + $0x118] sm:$0xff]
        %v342 = vld [vmem:[%s304 + $0x120] sm:$0xff]
        %v343 = vld [vmem:[%s304 + $0x128] sm:$0xff]
        %v344 = vld [vmem:[%s304 + $0x130] sm:$0xff]
        %v345 = vld [vmem:[%s304 + $0x138] sm:$0xff]
        %v346 = vld [vmem:[%s304 + $0x140] sm:$0xff]
        %v347 = vld [vmem:[%s304 + $0x148] sm:$0xff]
        %v348 = vld [vmem:[%s304 + $0x150] sm:$0xff]
        %v349 = vld [vmem:[%s304 + $0x158] sm:$0xff]
        %v350 = vld [vmem:[%s304 + $0x160] sm:$0xff]
        %v351 = vld [vmem:[%s304 + $0x168] sm:$0xff]
        %v352 = vld [vmem:[%s304 + $0x170] sm:$0xff]
        %v353 = vld [vmem:[%s304 + $0x178] sm:$0xff]
        %v354 = vld [vmem:[%s304 + $0x180] sm:$0xff]
        %v355 = vld [vmem:[%s304 + $0x188] sm:$0xff]
        %v356 = vld [vmem:[%s304 + $0x190] sm:$0xff]
        %v357 = vld [vmem:[%s304 + $0x198] sm:$0xff]
        %v358 = vld [vmem:[%s304 + $0x1a0] sm:$0xff]
        %v359 = vld [vmem:[%s304 + $0x1a8] sm:$0xff]
        %v360 = vld [vmem:[%s304 + $0x1b0] sm:$0xff]
        %v361 = vld [vmem:[%s304 + $0x1b8] sm:$0xff]
        %v362 = vld [vmem:[%s304 + $0x1c0] sm:$0xff]
        %v363 = vld [vmem:[%s304 + $0x1c8] sm:$0xff]
        %v364 = vld [vmem:[%s304 + $0x1d0] sm:$0xff]
        %v365 = vld [vmem:[%s304 + $0x1d8] sm:$0xff]
        %v366 = vld [vmem:[%s304 + $0x1e0] sm:$0xff]
        %v367 = vld [vmem:[%s304 + $0x1e8] sm:$0xff]
        %v368 = vld [vmem:[%s304 + $0x1f0] sm:$0xff]
        %v369 = vld [vmem:[%s304 + $0x1f8] sm:$0xff]
        %v370 = vld [vmem:[%s1] sm:$0xff]
        %v371 = vld [vmem:[%s1 + $0x8] sm:$0xff]
        %v372 = vld [vmem:[%s1 + $0x10] sm:$0xff]
        %v373 = vld [vmem:[%s1 + $0x18] sm:$0xff]
        %v374 = vld [vmem:[%s1 + $0x20] sm:$0xff]
        %v375 = vld [vmem:[%s1 + $0x28] sm:$0xff]
        %v376 = vld [vmem:[%s1 + $0x30] sm:$0xff]
        %v377 = vld [vmem:[%s1 + $0x38] sm:$0xff]
        %v378 = vld [vmem:[%s1 + $0x40] sm:$0xff]
        %v379 = vld [vmem:[%s1 + $0x48] sm:$0xff]
        %v380 = vld [vmem:[%s1 + $0x50] sm:$0xff]
        %v381 = vld [vmem:[%s1 + $0x58] sm:$0xff]
        %v382 = vld [vmem:[%s1 + $0x60] sm:$0xff]
        %v383 = vld [vmem:[%s1 + $0x68] sm:$0xff]
        %v384 = vld [vmem:[%s1 + $0x70] sm:$0xff]
        %v385 = vld [vmem:[%s1 + $0x78] sm:$0xff]
        %386 = vmatprep.subr.mxu0 0.0
        %387 = vmatpush1.msra.mxu0 %v370
        %388 = vmatprep.subr.mxu0 0.0
        %389 = vmatpush1.msra.mxu0 %v371
        %390 = vmatprep.subr.mxu0 0.0
        %391 = vmatpush1.msra.mxu0 %v372
        %392 = vmatprep.subr.mxu0 0.0
        %393 = vmatpush1.msra.mxu0 %v373
        %394 = vmatprep.subr.mxu0 0.0
        %395 = vmatpush1.msra.mxu0 %v374
        %396 = vmatprep.subr.mxu0 0.0
        %397 = vmatpush1.msra.mxu0 %v375
        %398 = vmatprep.subr.mxu0 0.0
        %399 = vmatpush1.msra.mxu0 %v376
        %400 = vmatprep.subr.mxu0 0.0
        %401 = vmatpush1.msra.mxu0 %v377
        %402 = vmatprep.subr.mxu0 0.0
        %403 = vmatpush1.msra.mxu0 %v378
        %404 = vmatprep.subr.mxu0 0.0
        %405 = vmatpush1.msra.mxu0 %v379
        %406 = vmatprep.subr.mxu0 0.0
        %407 = vmatpush1.msra.mxu0 %v380
        %408 = vmatprep.subr.mxu0 0.0
        %409 = vmatpush1.msra.mxu0 %v381
        %410 = vmatprep.subr.mxu0 0.0
        %411 = vmatpush1.msra.mxu0 %v382
        %412 = vmatprep.subr.mxu0 0.0
        %413 = vmatpush1.msra.mxu0 %v383
        %414 = vmatprep.subr.mxu0 0.0
        %415 = vmatpush1.msra.mxu0 %v384
        %416 = vmatprep.subr.mxu0 0.0
        %417 = vmatpush1.msra.mxu0 %v385
        %418 = vmatprep.subr.mxu0 0.0
        %419 = vmatpush1.msra.mxu0 0.0
        %420 = vmatprep.subr.mxu0 0.0
        %421 = vmatpush1.msra.mxu0 0.0
        %422 = vmatprep.subr.mxu0 0.0
        %423 = vmatpush1.msra.mxu0 0.0
        %424 = vmatprep.subr.mxu0 0.0
        %425 = vmatpush1.msra.mxu0 0.0
        %426 = vmatprep.subr.mxu0 0.0
        %427 = vmatpush1.msra.mxu0 0.0
        %428 = vmatprep.subr.mxu0 0.0
        %429 = vmatpush1.msra.mxu0 0.0
        %430 = vmatprep.subr.mxu0 0.0
        %431 = vmatpush1.msra.mxu0 0.0
        %432 = vmatprep.subr.mxu0 0.0
        %433 = vmatpush1.msra.mxu0 0.0
        %434 = vmatprep.subr.mxu0 0.0
        %435 = vmatpush1.msra.mxu0 0.0
        %436 = vmatprep.subr.mxu0 0.0
        %437 = vmatpush1.msra.mxu0 0.0
        %438 = vmatprep.subr.mxu0 0.0
        %439 = vmatpush1.msra.mxu0 0.0
        %440 = vmatprep.subr.mxu0 0.0
        %441 = vmatpush1.msra.mxu0 0.0
        %442 = vmatprep.subr.mxu0 0.0
        %443 = vmatpush1.msra.mxu0 0.0
        %444 = vmatprep.subr.mxu0 0.0
        %445 = vmatpush1.msra.mxu0 0.0
        %446 = vmatprep.subr.mxu0 0.0
        %447 = vmatpush1.msra.mxu0 0.0
        %448 = vmatprep.subr.mxu0 0.0
        %449 = vmatpush1.msra.mxu0 0.0
        %450 = vmatprep.mubr.f32.mxu0 0.0
        %451 = vmatmul.mubr.f32.gmra.mrb[0].mxu0 %v306
        %v452 = vpop.f32.mrb[0].mxu0
        %v453 = vadd.f32 0.0, %v452
        %v454 = vpop.f32.mrb[0].mxu0
        %455 = vmatprep.mubr.f32.mxu0 0.0
        %456 = vmatmul.mubr.f32.gmra.mrb[0].mxu0 %v307
        %v457 = vpop.f32.mrb[0].mxu0
        %v458 = vadd.f32 0.0, %v457
        %v459 = vpop.f32.mrb[0].mxu0
        %460 = vmatprep.mubr.f32.mxu0 0.0
        %461 = vmatmul.mubr.f32.gmra.mrb[0].mxu0 %v308
        %v462 = vpop.f32.mrb[0].mxu0
        %v463 = vadd.f32 0.0, %v462
        %v464 = vpop.f32.mrb[0].mxu0
        %465 = vmatprep.mubr.f32.mxu0 0.0
        %466 = vmatmul.mubr.f32.gmra.mrb[0].mxu0 %v309
        %v467 = vpop.f32.mrb[0].mxu0
        %v468 = vadd.f32 0.0, %v467
        %v469 = vpop.f32.mrb[0].mxu0
        %470 = vmatprep.mubr.f32.mxu0 0.0
        %471 = vmatmul.mubr.f32.gmra.mrb[0].mxu0 %v310
        %v472 = vpop.f32.mrb[0].mxu0
        %v473 = vadd.f32 0.0, %v472
        %v474 = vpop.f32.mrb[0].mxu0
        %475 = vmatprep.mubr.f32.mxu0 0.0
        %476 = vmatmul.mubr.f32.gmra.mrb[0].mxu0 %v311
        %v477 = vpop.f32.mrb[0].mxu0
        %v478 = vadd.f32 0.0, %v477
        %v479 = vpop.f32.mrb[0].mxu0
        %480 = vmatprep.mubr.f32.mxu0 0.0
        %481 = vmatmul.mubr.f32.gmra.mrb[0].mxu0 %v312
        %v482 = vpop.f32.mrb[0].mxu0
        %v483 = vadd.f32 0.0, %v482
        %v484 = vpop.f32.mrb[0].mxu0
        %485 = vmatprep.mubr.f32.mxu0 0.0
        %486 = vmatmul.mubr.f32.gmra.mrb[0].mxu0 %v313
        %v487 = vpop.f32.mrb[0].mxu0
        %v488 = vadd.f32 0.0, %v487
        %v489 = vpop.f32.mrb[0].mxu0
        %490 = vmatprep.mubr.f32.mxu0 0.0
        %491 = vmatmul.mubr.f32.gmra.mrb[0].mxu0 %v314
        %v492 = vpop.f32.mrb[0].mxu0
        %v493 = vadd.f32 0.0, %v492
        %v494 = vpop.f32.mrb[0].mxu0
        %495 = vmatprep.mubr.f32.mxu0 0.0
        %496 = vmatmul.mubr.f32.gmra.mrb[0].mxu0 %v315
        %v497 = vpop.f32.mrb[0].mxu0
        %v498 = vadd.f32 0.0, %v497
        %v499 = vpop.f32.mrb[0].mxu0
        %500 = vmatprep.mubr.f32.mxu0 0.0
        %501 = vmatmul.mubr.f32.gmra.mrb[0].mxu0 %v316
        %v502 = vpop.f32.mrb[0].mxu0
        %v503 = vadd.f32 0.0, %v502
        %v504 = vpop.f32.mrb[0].mxu0
        %505 = vmatprep.mubr.f32.mxu0 0.0
        %506 = vmatmul.mubr.f32.gmra.mrb[0].mxu0 %v317
        %v507 = vpop.f32.mrb[0].mxu0
        %v508 = vadd.f32 0.0, %v507
        %v509 = vpop.f32.mrb[0].mxu0
        %510 = vmatprep.mubr.f32.mxu0 0.0
        %511 = vmatmul.mubr.f32.gmra.mrb[0].mxu0 %v318
        %v512 = vpop.f32.mrb[0].mxu0
        %v513 = vadd.f32 0.0, %v512
        %v514 = vpop.f32.mrb[0].mxu0
        %515 = vmatprep.mubr.f32.mxu0 0.0
        %516 = vmatmul.mubr.f32.gmra.mrb[0].mxu0 %v319
        %v517 = vpop.f32.mrb[0].mxu0
        %v518 = vadd.f32 0.0, %v517
        %v519 = vpop.f32.mrb[0].mxu0
        %520 = vmatprep.mubr.f32.mxu0 0.0
        %521 = vmatmul.mubr.f32.gmra.mrb[0].mxu0 %v320
        %v522 = vpop.f32.mrb[0].mxu0
        %v523 = vadd.f32 0.0, %v522
        %v524 = vpop.f32.mrb[0].mxu0
        %525 = vmatprep.mubr.f32.mxu0 0.0
        %526 = vmatmul.mubr.f32.gmra.mrb[0].mxu0 %v321
        %v527 = vpop.f32.mrb[0].mxu0
        %v528 = vadd.f32 0.0, %v527
        %v529 = vpop.f32.mrb[0].mxu0
        %530 = vmatprep.mubr.f32.mxu0 0.0
        %531 = vmatmul.mubr.f32.gmra.mrb[0].mxu0 %v322
        %v532 = vpop.f32.mrb[0].mxu0
        %v533 = vadd.f32 0.0, %v532
        %v534 = vpop.f32.mrb[0].mxu0
        %535 = vmatprep.mubr.f32.mxu0 0.0
        %536 = vmatmul.mubr.f32.gmra.mrb[0].mxu0 %v323
        %v537 = vpop.f32.mrb[0].mxu0
        %v538 = vadd.f32 0.0, %v537
        %v539 = vpop.f32.mrb[0].mxu0
        %540 = vmatprep.mubr.f32.mxu0 0.0
        %541 = vmatmul.mubr.f32.gmra.mrb[0].mxu0 %v324
        %v542 = vpop.f32.mrb[0].mxu0
        %v543 = vadd.f32 0.0, %v542
        %v544 = vpop.f32.mrb[0].mxu0
        %545 = vmatprep.mubr.f32.mxu0 0.0
        %546 = vmatmul.mubr.f32.gmra.mrb[0].mxu0 %v325
        %v547 = vpop.f32.mrb[0].mxu0
        %v548 = vadd.f32 0.0, %v547
        %v549 = vpop.f32.mrb[0].mxu0
        %550 = vmatprep.mubr.f32.mxu0 0.0
        %551 = vmatmul.mubr.f32.gmra.mrb[0].mxu0 %v326
        %v552 = vpop.f32.mrb[0].mxu0
        %v553 = vadd.f32 0.0, %v552
        %v554 = vpop.f32.mrb[0].mxu0
        %555 = vmatprep.mubr.f32.mxu0 0.0
        %556 = vmatmul.mubr.f32.gmra.mrb[0].mxu0 %v327
        %v557 = vpop.f32.mrb[0].mxu0
        %v558 = vadd.f32 0.0, %v557
        %v559 = vpop.f32.mrb[0].mxu0
        %560 = vmatprep.mubr.f32.mxu0 0.0
        %561 = vmatmul.mubr.f32.gmra.mrb[0].mxu0 %v328
        %v562 = vpop.f32.mrb[0].mxu0
        %v563 = vadd.f32 0.0, %v562
        %v564 = vpop.f32.mrb[0].mxu0
        %565 = vmatprep.mubr.f32.mxu0 0.0
        %566 = vmatmul.mubr.f32.gmra.mrb[0].mxu0 %v329
        %v567 = vpop.f32.mrb[0].mxu0
        %v568 = vadd.f32 0.0, %v567
        %v569 = vpop.f32.mrb[0].mxu0
        %570 = vmatprep.mubr.f32.mxu0 0.0
        %571 = vmatmul.mubr.f32.gmra.mrb[0].mxu0 %v330
        %v572 = vpop.f32.mrb[0].mxu0
        %v573 = vadd.f32 0.0, %v572
        %v574 = vpop.f32.mrb[0].mxu0
        %575 = vmatprep.mubr.f32.mxu0 0.0
        %576 = vmatmul.mubr.f32.gmra.mrb[0].mxu0 %v331
        %v577 = vpop.f32.mrb[0].mxu0
        %v578 = vadd.f32 0.0, %v577
        %v579 = vpop.f32.mrb[0].mxu0
        %580 = vmatprep.mubr.f32.mxu0 0.0
        %581 = vmatmul.mubr.f32.gmra.mrb[0].mxu0 %v332
        %v582 = vpop.f32.mrb[0].mxu0
        %v583 = vadd.f32 0.0, %v582
        %v584 = vpop.f32.mrb[0].mxu0
        %585 = vmatprep.mubr.f32.mxu0 0.0
        %586 = vmatmul.mubr.f32.gmra.mrb[0].mxu0 %v333
        %v587 = vpop.f32.mrb[0].mxu0
        %v588 = vadd.f32 0.0, %v587
        %v589 = vpop.f32.mrb[0].mxu0
        %590 = vmatprep.mubr.f32.mxu0 0.0
        %591 = vmatmul.mubr.f32.gmra.mrb[0].mxu0 %v334
        %v592 = vpop.f32.mrb[0].mxu0
        %v593 = vadd.f32 0.0, %v592
        %v594 = vpop.f32.mrb[0].mxu0
        %595 = vmatprep.mubr.f32.mxu0 0.0
        %596 = vmatmul.mubr.f32.gmra.mrb[0].mxu0 %v335
        %v597 = vpop.f32.mrb[0].mxu0
        %v598 = vadd.f32 0.0, %v597
        %v599 = vpop.f32.mrb[0].mxu0
        %600 = vmatprep.mubr.f32.mxu0 0.0
        %601 = vmatmul.mubr.f32.gmra.mrb[0].mxu0 %v336
        %v602 = vpop.f32.mrb[0].mxu0
        %v603 = vadd.f32 0.0, %v602
        %v604 = vpop.f32.mrb[0].mxu0
        %605 = vmatprep.mubr.f32.mxu0 0.0
        %606 = vmatmul.mubr.f32.gmra.mrb[0].mxu0 %v337
        %v607 = vpop.f32.mrb[0].mxu0
        %v608 = vadd.f32 0.0, %v607
        %v609 = vpop.f32.mrb[0].mxu0
        %610 = vmatprep.mubr.f32.mxu0 0.0
        %611 = vmatmul.mubr.f32.gmra.mrb[0].mxu0 %v338
        %v612 = vpop.f32.mrb[0].mxu0
        %v613 = vadd.f32 0.0, %v612
        %v614 = vpop.f32.mrb[0].mxu0
        %615 = vmatprep.mubr.f32.mxu0 0.0
        %616 = vmatmul.mubr.f32.gmra.mrb[0].mxu0 %v339
        %v617 = vpop.f32.mrb[0].mxu0
        %v618 = vadd.f32 0.0, %v617
        %v619 = vpop.f32.mrb[0].mxu0
        %620 = vmatprep.mubr.f32.mxu0 0.0
        %621 = vmatmul.mubr.f32.gmra.mrb[0].mxu0 %v340
        %v622 = vpop.f32.mrb[0].mxu0
        %v623 = vadd.f32 0.0, %v622
        %v624 = vpop.f32.mrb[0].mxu0
        %625 = vmatprep.mubr.f32.mxu0 0.0
        %626 = vmatmul.mubr.f32.gmra.mrb[0].mxu0 %v341
        %v627 = vpop.f32.mrb[0].mxu0
        %v628 = vadd.f32 0.0, %v627
        %v629 = vpop.f32.mrb[0].mxu0
        %630 = vmatprep.mubr.f32.mxu0 0.0
        %631 = vmatmul.mubr.f32.gmra.mrb[0].mxu0 %v342
        %v632 = vpop.f32.mrb[0].mxu0
        %v633 = vadd.f32 0.0, %v632
        %v634 = vpop.f32.mrb[0].mxu0
        %635 = vmatprep.mubr.f32.mxu0 0.0
        %636 = vmatmul.mubr.f32.gmra.mrb[0].mxu0 %v343
        %v637 = vpop.f32.mrb[0].mxu0
        %v638 = vadd.f32 0.0, %v637
        %v639 = vpop.f32.mrb[0].mxu0
        %640 = vmatprep.mubr.f32.mxu0 0.0
        %641 = vmatmul.mubr.f32.gmra.mrb[0].mxu0 %v344
        %v642 = vpop.f32.mrb[0].mxu0
        %v643 = vadd.f32 0.0, %v642
        %v644 = vpop.f32.mrb[0].mxu0
        %645 = vmatprep.mubr.f32.mxu0 0.0
        %646 = vmatmul.mubr.f32.gmra.mrb[0].mxu0 %v345
        %v647 = vpop.f32.mrb[0].mxu0
        %v648 = vadd.f32 0.0, %v647
        %v649 = vpop.f32.mrb[0].mxu0
        %650 = vmatprep.mubr.f32.mxu0 0.0
        %651 = vmatmul.mubr.f32.gmra.mrb[0].mxu0 %v346
        %v652 = vpop.f32.mrb[0].mxu0
        %v653 = vadd.f32 0.0, %v652
        %v654 = vpop.f32.mrb[0].mxu0
        %655 = vmatprep.mubr.f32.mxu0 0.0
        %656 = vmatmul.mubr.f32.gmra.mrb[0].mxu0 %v347
        %v657 = vpop.f32.mrb[0].mxu0
        %v658 = vadd.f32 0.0, %v657
        %v659 = vpop.f32.mrb[0].mxu0
        %660 = vmatprep.mubr.f32.mxu0 0.0
        %661 = vmatmul.mubr.f32.gmra.mrb[0].mxu0 %v348
        %v662 = vpop.f32.mrb[0].mxu0
        %v663 = vadd.f32 0.0, %v662
        %v664 = vpop.f32.mrb[0].mxu0
        %665 = vmatprep.mubr.f32.mxu0 0.0
        %666 = vmatmul.mubr.f32.gmra.mrb[0].mxu0 %v349
        %v667 = vpop.f32.mrb[0].mxu0
        %v668 = vadd.f32 0.0, %v667
        %v669 = vpop.f32.mrb[0].mxu0
        %670 = vmatprep.mubr.f32.mxu0 0.0
        %671 = vmatmul.mubr.f32.gmra.mrb[0].mxu0 %v350
        %v672 = vpop.f32.mrb[0].mxu0
        %v673 = vadd.f32 0.0, %v672
        %v674 = vpop.f32.mrb[0].mxu0
        %675 = vmatprep.mubr.f32.mxu0 0.0
        %676 = vmatmul.mubr.f32.gmra.mrb[0].mxu0 %v351
        %v677 = vpop.f32.mrb[0].mxu0
        %v678 = vadd.f32 0.0, %v677
        %v679 = vpop.f32.mrb[0].mxu0
        %680 = vmatprep.mubr.f32.mxu0 0.0
        %681 = vmatmul.mubr.f32.gmra.mrb[0].mxu0 %v352
        %v682 = vpop.f32.mrb[0].mxu0
        %v683 = vadd.f32 0.0, %v682
        %v684 = vpop.f32.mrb[0].mxu0
        %685 = vmatprep.mubr.f32.mxu0 0.0
        %686 = vmatmul.mubr.f32.gmra.mrb[0].mxu0 %v353
        %v687 = vpop.f32.mrb[0].mxu0
        %v688 = vadd.f32 0.0, %v687
        %v689 = vpop.f32.mrb[0].mxu0
        %690 = vmatprep.mubr.f32.mxu0 0.0
        %691 = vmatmul.mubr.f32.gmra.mrb[0].mxu0 %v354
        %v692 = vpop.f32.mrb[0].mxu0
        %v693 = vadd.f32 0.0, %v692
        %v694 = vpop.f32.mrb[0].mxu0
        %695 = vmatprep.mubr.f32.mxu0 0.0
        %696 = vmatmul.mubr.f32.gmra.mrb[0].mxu0 %v355
        %v697 = vpop.f32.mrb[0].mxu0
        %v698 = vadd.f32 0.0, %v697
        %v699 = vpop.f32.mrb[0].mxu0
        %700 = vmatprep.mubr.f32.mxu0 0.0
        %701 = vmatmul.mubr.f32.gmra.mrb[0].mxu0 %v356
        %v702 = vpop.f32.mrb[0].mxu0
        %v703 = vadd.f32 0.0, %v702
        %v704 = vpop.f32.mrb[0].mxu0
        %705 = vmatprep.mubr.f32.mxu0 0.0
        %706 = vmatmul.mubr.f32.gmra.mrb[0].mxu0 %v357
        %v707 = vpop.f32.mrb[0].mxu0
        %v708 = vadd.f32 0.0, %v707
        %v709 = vpop.f32.mrb[0].mxu0
        %710 = vmatprep.mubr.f32.mxu0 0.0
        %711 = vmatmul.mubr.f32.gmra.mrb[0].mxu0 %v358
        %v712 = vpop.f32.mrb[0].mxu0
        %v713 = vadd.f32 0.0, %v712
        %v714 = vpop.f32.mrb[0].mxu0
        %715 = vmatprep.mubr.f32.mxu0 0.0
        %716 = vmatmul.mubr.f32.gmra.mrb[0].mxu0 %v359
        %v717 = vpop.f32.mrb[0].mxu0
        %v718 = vadd.f32 0.0, %v717
        %v719 = vpop.f32.mrb[0].mxu0
        %720 = vmatprep.mubr.f32.mxu0 0.0
        %721 = vmatmul.mubr.f32.gmra.mrb[0].mxu0 %v360
        %v722 = vpop.f32.mrb[0].mxu0
        %v723 = vadd.f32 0.0, %v722
        %v724 = vpop.f32.mrb[0].mxu0
        %725 = vmatprep.mubr.f32.mxu0 0.0
        %726 = vmatmul.mubr.f32.gmra.mrb[0].mxu0 %v361
        %v727 = vpop.f32.mrb[0].mxu0
        %v728 = vadd.f32 0.0, %v727
        %v729 = vpop.f32.mrb[0].mxu0
        %730 = vmatprep.mubr.f32.mxu0 0.0
        %731 = vmatmul.mubr.f32.gmra.mrb[0].mxu0 %v362
        %v732 = vpop.f32.mrb[0].mxu0
        %v733 = vadd.f32 0.0, %v732
        %v734 = vpop.f32.mrb[0].mxu0
        %735 = vmatprep.mubr.f32.mxu0 0.0
        %736 = vmatmul.mubr.f32.gmra.mrb[0].mxu0 %v363
        %v737 = vpop.f32.mrb[0].mxu0
        %v738 = vadd.f32 0.0, %v737
        %v739 = vpop.f32.mrb[0].mxu0
        %740 = vmatprep.mubr.f32.mxu0 0.0
        %741 = vmatmul.mubr.f32.gmra.mrb[0].mxu0 %v364
        %v742 = vpop.f32.mrb[0].mxu0
        %v743 = vadd.f32 0.0, %v742
        %v744 = vpop.f32.mrb[0].mxu0
        %745 = vmatprep.mubr.f32.mxu0 0.0
        %746 = vmatmul.mubr.f32.gmra.mrb[0].mxu0 %v365
        %v747 = vpop.f32.mrb[0].mxu0
        %v748 = vadd.f32 0.0, %v747
        %v749 = vpop.f32.mrb[0].mxu0
        %750 = vmatprep.mubr.f32.mxu0 0.0
        %751 = vmatmul.mubr.f32.gmra.mrb[0].mxu0 %v366
        %v752 = vpop.f32.mrb[0].mxu0
        %v753 = vadd.f32 0.0, %v752
        %v754 = vpop.f32.mrb[0].mxu0
        %755 = vmatprep.mubr.f32.mxu0 0.0
        %756 = vmatmul.mubr.f32.gmra.mrb[0].mxu0 %v367
        %v757 = vpop.f32.mrb[0].mxu0
        %v758 = vadd.f32 0.0, %v757
        %v759 = vpop.f32.mrb[0].mxu0
        %760 = vmatprep.mubr.f32.mxu0 0.0
        %761 = vmatmul.mubr.f32.gmra.mrb[0].mxu0 %v368
        %v762 = vpop.f32.mrb[0].mxu0
        %v763 = vadd.f32 0.0, %v762
        %v764 = vpop.f32.mrb[0].mxu0
        %765 = vmatprep.mubr.f32.mxu0 0.0
        %766 = vmatmul.mubr.f32.gmra.mrb[0].mxu0 %v369
        %v767 = vpop.f32.mrb[0].mxu0
        %v768 = vadd.f32 0.0, %v767
        %v769 = vpop.f32.mrb[0].mxu0
        %770 = vdwg.mxu0
        %v771 = vmax.f32 %v453, 0.0
        %v772 = vmax.f32 %v458, 0.0
        %v773 = vmax.f32 %v463, 0.0
        %v774 = vmax.f32 %v468, 0.0
        %v775 = vmax.f32 %v473, 0.0
        %v776 = vmax.f32 %v478, 0.0
        %v777 = vmax.f32 %v483, 0.0
        %v778 = vmax.f32 %v488, 0.0
        %v779 = vmax.f32 %v493, 0.0
        %v780 = vmax.f32 %v498, 0.0
        %v781 = vmax.f32 %v503, 0.0
        %v782 = vmax.f32 %v508, 0.0
        %v783 = vmax.f32 %v513, 0.0
        %v784 = vmax.f32 %v518, 0.0
        %v785 = vmax.f32 %v523, 0.0
        %v786 = vmax.f32 %v528, 0.0
        %v787 = vmax.f32 %v533, 0.0
        %v788 = vmax.f32 %v538, 0.0
        %v789 = vmax.f32 %v543, 0.0
        %v790 = vmax.f32 %v548, 0.0
        %v791 = vmax.f32 %v553, 0.0
        %v792 = vmax.f32 %v558, 0.0
        %v793 = vmax.f32 %v563, 0.0
        %v794 = vmax.f32 %v568, 0.0
        %v795 = vmax.f32 %v573, 0.0
        %v796 = vmax.f32 %v578, 0.0
        %v797 = vmax.f32 %v583, 0.0
        %v798 = vmax.f32 %v588, 0.0
        %v799 = vmax.f32 %v593, 0.0
        %v800 = vmax.f32 %v598, 0.0
        %v801 = vmax.f32 %v603, 0.0
        %v802 = vmax.f32 %v608, 0.0
        %v803 = vmax.f32 %v613, 0.0
        %v804 = vmax.f32 %v618, 0.0
        %v805 = vmax.f32 %v623, 0.0
        %v806 = vmax.f32 %v628, 0.0
        %v807 = vmax.f32 %v633, 0.0
        %v808 = vmax.f32 %v638, 0.0
        %v809 = vmax.f32 %v643, 0.0
        %v810 = vmax.f32 %v648, 0.0
        %v811 = vmax.f32 %v653, 0.0
        %v812 = vmax.f32 %v658, 0.0
        %v813 = vmax.f32 %v663, 0.0
        %v814 = vmax.f32 %v668, 0.0
        %v815 = vmax.f32 %v673, 0.0
        %v816 = vmax.f32 %v678, 0.0
        %v817 = vmax.f32 %v683, 0.0
        %v818 = vmax.f32 %v688, 0.0
        %v819 = vmax.f32 %v693, 0.0
        %v820 = vmax.f32 %v698, 0.0
        %v821 = vmax.f32 %v703, 0.0
        %v822 = vmax.f32 %v708, 0.0
        %v823 = vmax.f32 %v713, 0.0
        %v824 = vmax.f32 %v718, 0.0
        %v825 = vmax.f32 %v723, 0.0
        %v826 = vmax.f32 %v728, 0.0
        %v827 = vmax.f32 %v733, 0.0
        %v828 = vmax.f32 %v738, 0.0
        %v829 = vmax.f32 %v743, 0.0
        %v830 = vmax.f32 %v748, 0.0
        %v831 = vmax.f32 %v753, 0.0
        %v832 = vmax.f32 %v758, 0.0
        %v833 = vmax.f32 %v763, 0.0
        %v834 = vmax.f32 %v768, 0.0
        %899 = vrot.lane.b32.xlu0 %v771, 96
        %v900 = vpop.permute.xlu0 %899
        %901 = vrot.lane.b32.xlu0 %v772, 96
        %v902 = vpop.permute.xlu0 %901
        %903 = vrot.lane.b32.xlu0 %v773, 96
        %v904 = vpop.permute.xlu0 %903
        %905 = vrot.lane.b32.xlu0 %v774, 96
        %v906 = vpop.permute.xlu0 %905
        %907 = vrot.lane.b32.xlu0 %v775, 96
        %v908 = vpop.permute.xlu0 %907
        %909 = vrot.lane.b32.xlu0 %v776, 96
        %v910 = vpop.permute.xlu0 %909
        %911 = vrot.lane.b32.xlu0 %v777, 96
        %v912 = vpop.permute.xlu0 %911
        %913 = vrot.lane.b32.xlu0 %v778, 96
        %v914 = vpop.permute.xlu0 %913
        %915 = vrot.lane.b32.xlu0 %v779, 96
        %v916 = vpop.permute.xlu0 %915
        %917 = vrot.lane.b32.xlu0 %v780, 96
        %v918 = vpop.permute.xlu0 %917
        %919 = vrot.lane.b32.xlu0 %v781, 96
        %v920 = vpop.permute.xlu0 %919
        %921 = vrot.lane.b32.xlu0 %v782, 96
        %v922 = vpop.permute.xlu0 %921
        %923 = vrot.lane.b32.xlu0 %v783, 96
        %v924 = vpop.permute.xlu0 %923
        %925 = vrot.lane.b32.xlu0 %v784, 96
        %v926 = vpop.permute.xlu0 %925
        %927 = vrot.lane.b32.xlu0 %v785, 96
        %v928 = vpop.permute.xlu0 %927
        %929 = vrot.lane.b32.xlu0 %v786, 96
        %v930 = vpop.permute.xlu0 %929
        %931 = vrot.lane.b32.xlu0 %v787, 96
        %v932 = vpop.permute.xlu0 %931
        %933 = vrot.lane.b32.xlu0 %v788, 96
        %v934 = vpop.permute.xlu0 %933
        %935 = vrot.lane.b32.xlu0 %v789, 96
        %v936 = vpop.permute.xlu0 %935
        %937 = vrot.lane.b32.xlu0 %v790, 96
        %v938 = vpop.permute.xlu0 %937
        %939 = vrot.lane.b32.xlu0 %v791, 96
        %v940 = vpop.permute.xlu0 %939
        %941 = vrot.lane.b32.xlu0 %v792, 96
        %v942 = vpop.permute.xlu0 %941
        %943 = vrot.lane.b32.xlu0 %v793, 96
        %v944 = vpop.permute.xlu0 %943
        %945 = vrot.lane.b32.xlu0 %v794, 96
        %v946 = vpop.permute.xlu0 %945
        %947 = vrot.lane.b32.xlu0 %v795, 96
        %v948 = vpop.permute.xlu0 %947
        %949 = vrot.lane.b32.xlu0 %v796, 96
        %v950 = vpop.permute.xlu0 %949
        %951 = vrot.lane.b32.xlu0 %v797, 96
        %v952 = vpop.permute.xlu0 %951
        %953 = vrot.lane.b32.xlu0 %v798, 96
        %v954 = vpop.permute.xlu0 %953
        %955 = vrot.lane.b32.xlu0 %v799, 96
        %v956 = vpop.permute.xlu0 %955
        %957 = vrot.lane.b32.xlu0 %v800, 96
        %v958 = vpop.permute.xlu0 %957
        %959 = vrot.lane.b32.xlu0 %v801, 96
        %v960 = vpop.permute.xlu0 %959
        %961 = vrot.lane.b32.xlu0 %v802, 96
        %v962 = vpop.permute.xlu0 %961
        %963 = vrot.lane.b32.xlu0 %v803, 96
        %v964 = vpop.permute.xlu0 %963
        %965 = vrot.lane.b32.xlu0 %v804, 96
        %v966 = vpop.permute.xlu0 %965
        %967 = vrot.lane.b32.xlu0 %v805, 96
        %v968 = vpop.permute.xlu0 %967
        %969 = vrot.lane.b32.xlu0 %v806, 96
        %v970 = vpop.permute.xlu0 %969
        %971 = vrot.lane.b32.xlu0 %v807, 96
        %v972 = vpop.permute.xlu0 %971
        %973 = vrot.lane.b32.xlu0 %v808, 96
        %v974 = vpop.permute.xlu0 %973
        %975 = vrot.lane.b32.xlu0 %v809, 96
        %v976 = vpop.permute.xlu0 %975
        %977 = vrot.lane.b32.xlu0 %v810, 96
        %v978 = vpop.permute.xlu0 %977
        %979 = vrot.lane.b32.xlu0 %v811, 96
        %v980 = vpop.permute.xlu0 %979
        %981 = vrot.lane.b32.xlu0 %v812, 96
        %v982 = vpop.permute.xlu0 %981
        %983 = vrot.lane.b32.xlu0 %v813, 96
        %v984 = vpop.permute.xlu0 %983
        %985 = vrot.lane.b32.xlu0 %v814, 96
        %v986 = vpop.permute.xlu0 %985
        %987 = vrot.lane.b32.xlu0 %v815, 96
        %v988 = vpop.permute.xlu0 %987
        %989 = vrot.lane.b32.xlu0 %v816, 96
        %v990 = vpop.permute.xlu0 %989
        %991 = vrot.lane.b32.xlu0 %v817, 96
        %v992 = vpop.permute.xlu0 %991
        %993 = vrot.lane.b32.xlu0 %v818, 96
        %v994 = vpop.permute.xlu0 %993
        %995 = vrot.lane.b32.xlu0 %v819, 96
        %v996 = vpop.permute.xlu0 %995
        %997 = vrot.lane.b32.xlu0 %v820, 96
        %v998 = vpop.permute.xlu0 %997
        %999 = vrot.lane.b32.xlu0 %v821, 96
        %v1000 = vpop.permute.xlu0 %999
        %1001 = vrot.lane.b32.xlu0 %v822, 96
        %v1002 = vpop.permute.xlu0 %1001
        %1003 = vrot.lane.b32.xlu0 %v823, 96
        %v1004 = vpop.permute.xlu0 %1003
        %1005 = vrot.lane.b32.xlu0 %v824, 96
        %v1006 = vpop.permute.xlu0 %1005
        %1007 = vrot.lane.b32.xlu0 %v825, 96
        %v1008 = vpop.permute.xlu0 %1007
        %1009 = vrot.lane.b32.xlu0 %v826, 96
        %v1010 = vpop.permute.xlu0 %1009
        %1011 = vrot.lane.b32.xlu0 %v827, 96
        %v1012 = vpop.permute.xlu0 %1011
        %1013 = vrot.lane.b32.xlu0 %v828, 96
        %v1014 = vpop.permute.xlu0 %1013
        %1015 = vrot.lane.b32.xlu0 %v829, 96
        %v1016 = vpop.permute.xlu0 %1015
        %1017 = vrot.lane.b32.xlu0 %v830, 96
        %v1018 = vpop.permute.xlu0 %1017
        %1019 = vrot.lane.b32.xlu0 %v831, 96
        %v1020 = vpop.permute.xlu0 %1019
        %1021 = vrot.lane.b32.xlu0 %v832, 96
        %v1022 = vpop.permute.xlu0 %1021
        %1023 = vrot.lane.b32.xlu0 %v833, 96
        %v1024 = vpop.permute.xlu0 %1023
        %1025 = vrot.lane.b32.xlu0 %v834, 96
        %v1026 = vpop.permute.xlu0 %1025
        %v1091 = vmax.f32 %v771, %v900
        %v1092 = vmax.f32 %v772, %v902
        %v1093 = vmax.f32 %v773, %v904
        %v1094 = vmax.f32 %v774, %v906
        %v1095 = vmax.f32 %v775, %v908
        %v1096 = vmax.f32 %v776, %v910
        %v1097 = vmax.f32 %v777, %v912
        %v1098 = vmax.f32 %v778, %v914
        %v1099 = vmax.f32 %v779, %v916
        %v1100 = vmax.f32 %v780, %v918
        %v1101 = vmax.f32 %v781, %v920
        %v1102 = vmax.f32 %v782, %v922
        %v1103 = vmax.f32 %v783, %v924
        %v1104 = vmax.f32 %v784, %v926
        %v1105 = vmax.f32 %v785, %v928
        %v1106 = vmax.f32 %v786, %v930
        %v1107 = vmax.f32 %v787, %v932
        %v1108 = vmax.f32 %v788, %v934
        %v1109 = vmax.f32 %v789, %v936
        %v1110 = vmax.f32 %v790, %v938
        %v1111 = vmax.f32 %v791, %v940
        %v1112 = vmax.f32 %v792, %v942
        %v1113 = vmax.f32 %v793, %v944
        %v1114 = vmax.f32 %v794, %v946
        %v1115 = vmax.f32 %v795, %v948
        %v1116 = vmax.f32 %v796, %v950
        %v1117 = vmax.f32 %v797, %v952
        %v1118 = vmax.f32 %v798, %v954
        %v1119 = vmax.f32 %v799, %v956
        %v1120 = vmax.f32 %v800, %v958
        %v1121 = vmax.f32 %v801, %v960
        %v1122 = vmax.f32 %v802, %v962
        %v1123 = vmax.f32 %v803, %v964
        %v1124 = vmax.f32 %v804, %v966
        %v1125 = vmax.f32 %v805, %v968
        %v1126 = vmax.f32 %v806, %v970
        %v1127 = vmax.f32 %v807, %v972
        %v1128 = vmax.f32 %v808, %v974
        %v1129 = vmax.f32 %v809, %v976
        %v1130 = vmax.f32 %v810, %v978
        %v1131 = vmax.f32 %v811, %v980
        %v1132 = vmax.f32 %v812, %v982
        %v1133 = vmax.f32 %v813, %v984
        %v1134 = vmax.f32 %v814, %v986
        %v1135 = vmax.f32 %v815, %v988
        %v1136 = vmax.f32 %v816, %v990
        %v1137 = vmax.f32 %v817, %v992
        %v1138 = vmax.f32 %v818, %v994
        %v1139 = vmax.f32 %v819, %v996
        %v1140 = vmax.f32 %v820, %v998
        %v1141 = vmax.f32 %v821, %v1000
        %v1142 = vmax.f32 %v822, %v1002
        %v1143 = vmax.f32 %v823, %v1004
        %v1144 = vmax.f32 %v824, %v1006
        %v1145 = vmax.f32 %v825, %v1008
        %v1146 = vmax.f32 %v826, %v1010
        %v1147 = vmax.f32 %v827, %v1012
        %v1148 = vmax.f32 %v828, %v1014
        %v1149 = vmax.f32 %v829, %v1016
        %v1150 = vmax.f32 %v830, %v1018
        %v1151 = vmax.f32 %v831, %v1020
        %v1152 = vmax.f32 %v832, %v1022
        %v1153 = vmax.f32 %v833, %v1024
        %v1154 = vmax.f32 %v834, %v1026
        %1219 = vrot.lane.b32.xlu0 %v1091, 64
        %v1220 = vpop.permute.xlu0 %1219
        %1221 = vrot.lane.b32.xlu0 %v1092, 64
        %v1222 = vpop.permute.xlu0 %1221
        %1223 = vrot.lane.b32.xlu0 %v1093, 64
        %v1224 = vpop.permute.xlu0 %1223
        %1225 = vrot.lane.b32.xlu0 %v1094, 64
        %v1226 = vpop.permute.xlu0 %1225
        %1227 = vrot.lane.b32.xlu0 %v1095, 64
        %v1228 = vpop.permute.xlu0 %1227
        %1229 = vrot.lane.b32.xlu0 %v1096, 64
        %v1230 = vpop.permute.xlu0 %1229
        %1231 = vrot.lane.b32.xlu0 %v1097, 64
        %v1232 = vpop.permute.xlu0 %1231
        %1233 = vrot.lane.b32.xlu0 %v1098, 64
        %v1234 = vpop.permute.xlu0 %1233
        %1235 = vrot.lane.b32.xlu0 %v1099, 64
        %v1236 = vpop.permute.xlu0 %1235
        %1237 = vrot.lane.b32.xlu0 %v1100, 64
        %v1238 = vpop.permute.xlu0 %1237
        %1239 = vrot.lane.b32.xlu0 %v1101, 64
        %v1240 = vpop.permute.xlu0 %1239
        %1241 = vrot.lane.b32.xlu0 %v1102, 64
        %v1242 = vpop.permute.xlu0 %1241
        %1243 = vrot.lane.b32.xlu0 %v1103, 64
        %v1244 = vpop.permute.xlu0 %1243
        %1245 = vrot.lane.b32.xlu0 %v1104, 64
        %v1246 = vpop.permute.xlu0 %1245
        %1247 = vrot.lane.b32.xlu0 %v1105, 64
        %v1248 = vpop.permute.xlu0 %1247
        %1249 = vrot.lane.b32.xlu0 %v1106, 64
        %v1250 = vpop.permute.xlu0 %1249
        %1251 = vrot.lane.b32.xlu0 %v1107, 64
        %v1252 = vpop.permute.xlu0 %1251
        %1253 = vrot.lane.b32.xlu0 %v1108, 64
        %v1254 = vpop.permute.xlu0 %1253
        %1255 = vrot.lane.b32.xlu0 %v1109, 64
        %v1256 = vpop.permute.xlu0 %1255
        %1257 = vrot.lane.b32.xlu0 %v1110, 64
        %v1258 = vpop.permute.xlu0 %1257
        %1259 = vrot.lane.b32.xlu0 %v1111, 64
        %v1260 = vpop.permute.xlu0 %1259
        %1261 = vrot.lane.b32.xlu0 %v1112, 64
        %v1262 = vpop.permute.xlu0 %1261
        %1263 = vrot.lane.b32.xlu0 %v1113, 64
        %v1264 = vpop.permute.xlu0 %1263
        %1265 = vrot.lane.b32.xlu0 %v1114, 64
        %v1266 = vpop.permute.xlu0 %1265
        %1267 = vrot.lane.b32.xlu0 %v1115, 64
        %v1268 = vpop.permute.xlu0 %1267
        %1269 = vrot.lane.b32.xlu0 %v1116, 64
        %v1270 = vpop.permute.xlu0 %1269
        %1271 = vrot.lane.b32.xlu0 %v1117, 64
        %v1272 = vpop.permute.xlu0 %1271
        %1273 = vrot.lane.b32.xlu0 %v1118, 64
        %v1274 = vpop.permute.xlu0 %1273
        %1275 = vrot.lane.b32.xlu0 %v1119, 64
        %v1276 = vpop.permute.xlu0 %1275
        %1277 = vrot.lane.b32.xlu0 %v1120, 64
        %v1278 = vpop.permute.xlu0 %1277
        %1279 = vrot.lane.b32.xlu0 %v1121, 64
        %v1280 = vpop.permute.xlu0 %1279
        %1281 = vrot.lane.b32.xlu0 %v1122, 64
        %v1282 = vpop.permute.xlu0 %1281
        %1283 = vrot.lane.b32.xlu0 %v1123, 64
        %v1284 = vpop.permute.xlu0 %1283
        %1285 = vrot.lane.b32.xlu0 %v1124, 64
        %v1286 = vpop.permute.xlu0 %1285
        %1287 = vrot.lane.b32.xlu0 %v1125, 64
        %v1288 = vpop.permute.xlu0 %1287
        %1289 = vrot.lane.b32.xlu0 %v1126, 64
        %v1290 = vpop.permute.xlu0 %1289
        %1291 = vrot.lane.b32.xlu0 %v1127, 64
        %v1292 = vpop.permute.xlu0 %1291
        %1293 = vrot.lane.b32.xlu0 %v1128, 64
        %v1294 = vpop.permute.xlu0 %1293
        %1295 = vrot.lane.b32.xlu0 %v1129, 64
        %v1296 = vpop.permute.xlu0 %1295
        %1297 = vrot.lane.b32.xlu0 %v1130, 64
        %v1298 = vpop.permute.xlu0 %1297
        %1299 = vrot.lane.b32.xlu0 %v1131, 64
        %v1300 = vpop.permute.xlu0 %1299
        %1301 = vrot.lane.b32.xlu0 %v1132, 64
        %v1302 = vpop.permute.xlu0 %1301
        %1303 = vrot.lane.b32.xlu0 %v1133, 64
        %v1304 = vpop.permute.xlu0 %1303
        %1305 = vrot.lane.b32.xlu0 %v1134, 64
        %v1306 = vpop.permute.xlu0 %1305
        %1307 = vrot.lane.b32.xlu0 %v1135, 64
        %v1308 = vpop.permute.xlu0 %1307
        %1309 = vrot.lane.b32.xlu0 %v1136, 64
        %v1310 = vpop.permute.xlu0 %1309
        %1311 = vrot.lane.b32.xlu0 %v1137, 64
        %v1312 = vpop.permute.xlu0 %1311
        %1313 = vrot.lane.b32.xlu0 %v1138, 64
        %v1314 = vpop.permute.xlu0 %1313
        %1315 = vrot.lane.b32.xlu0 %v1139, 64
        %v1316 = vpop.permute.xlu0 %1315
        %1317 = vrot.lane.b32.xlu0 %v1140, 64
        %v1318 = vpop.permute.xlu0 %1317
        %1319 = vrot.lane.b32.xlu0 %v1141, 64
        %v1320 = vpop.permute.xlu0 %1319
        %1321 = vrot.lane.b32.xlu0 %v1142, 64
        %v1322 = vpop.permute.xlu0 %1321
        %1323 = vrot.lane.b32.xlu0 %v1143, 64
        %v1324 = vpop.permute.xlu0 %1323
        %1325 = vrot.lane.b32.xlu0 %v1144, 64
        %v1326 = vpop.permute.xlu0 %1325
        %1327 = vrot.lane.b32.xlu0 %v1145, 64
        %v1328 = vpop.permute.xlu0 %1327
        %1329 = vrot.lane.b32.xlu0 %v1146, 64
        %v1330 = vpop.permute.xlu0 %1329
        %1331 = vrot.lane.b32.xlu0 %v1147, 64
        %v1332 = vpop.permute.xlu0 %1331
        %1333 = vrot.lane.b32.xlu0 %v1148, 64
        %v1334 = vpop.permute.xlu0 %1333
        %1335 = vrot.lane.b32.xlu0 %v1149, 64
        %v1336 = vpop.permute.xlu0 %1335
        %1337 = vrot.lane.b32.xlu0 %v1150, 64
        %v1338 = vpop.permute.xlu0 %1337
        %1339 = vrot.lane.b32.xlu0 %v1151, 64
        %v1340 = vpop.permute.xlu0 %1339
        %1341 = vrot.lane.b32.xlu0 %v1152, 64
        %v1342 = vpop.permute.xlu0 %1341
        %1343 = vrot.lane.b32.xlu0 %v1153, 64
        %v1344 = vpop.permute.xlu0 %1343
        %1345 = vrot.lane.b32.xlu0 %v1154, 64
        %v1346 = vpop.permute.xlu0 %1345
        %v1411 = vmax.f32 %v1091, %v1220
        %v1412 = vmax.f32 %v1092, %v1222
        %v1413 = vmax.f32 %v1093, %v1224
        %v1414 = vmax.f32 %v1094, %v1226
        %v1415 = vmax.f32 %v1095, %v1228
        %v1416 = vmax.f32 %v1096, %v1230
        %v1417 = vmax.f32 %v1097, %v1232
        %v1418 = vmax.f32 %v1098, %v1234
        %v1419 = vmax.f32 %v1099, %v1236
        %v1420 = vmax.f32 %v1100, %v1238
        %v1421 = vmax.f32 %v1101, %v1240
        %v1422 = vmax.f32 %v1102, %v1242
        %v1423 = vmax.f32 %v1103, %v1244
        %v1424 = vmax.f32 %v1104, %v1246
        %v1425 = vmax.f32 %v1105, %v1248
        %v1426 = vmax.f32 %v1106, %v1250
        %v1427 = vmax.f32 %v1107, %v1252
        %v1428 = vmax.f32 %v1108, %v1254
        %v1429 = vmax.f32 %v1109, %v1256
        %v1430 = vmax.f32 %v1110, %v1258
        %v1431 = vmax.f32 %v1111, %v1260
        %v1432 = vmax.f32 %v1112, %v1262
        %v1433 = vmax.f32 %v1113, %v1264
        %v1434 = vmax.f32 %v1114, %v1266
        %v1435 = vmax.f32 %v1115, %v1268
        %v1436 = vmax.f32 %v1116, %v1270
        %v1437 = vmax.f32 %v1117, %v1272
        %v1438 = vmax.f32 %v1118, %v1274
        %v1439 = vmax.f32 %v1119, %v1276
        %v1440 = vmax.f32 %v1120, %v1278
        %v1441 = vmax.f32 %v1121, %v1280
        %v1442 = vmax.f32 %v1122, %v1282
        %v1443 = vmax.f32 %v1123, %v1284
        %v1444 = vmax.f32 %v1124, %v1286
        %v1445 = vmax.f32 %v1125, %v1288
        %v1446 = vmax.f32 %v1126, %v1290
        %v1447 = vmax.f32 %v1127, %v1292
        %v1448 = vmax.f32 %v1128, %v1294
        %v1449 = vmax.f32 %v1129, %v1296
        %v1450 = vmax.f32 %v1130, %v1298
        %v1451 = vmax.f32 %v1131, %v1300
        %v1452 = vmax.f32 %v1132, %v1302
        %v1453 = vmax.f32 %v1133, %v1304
        %v1454 = vmax.f32 %v1134, %v1306
        %v1455 = vmax.f32 %v1135, %v1308
        %v1456 = vmax.f32 %v1136, %v1310
        %v1457 = vmax.f32 %v1137, %v1312
        %v1458 = vmax.f32 %v1138, %v1314
        %v1459 = vmax.f32 %v1139, %v1316
        %v1460 = vmax.f32 %v1140, %v1318
        %v1461 = vmax.f32 %v1141, %v1320
        %v1462 = vmax.f32 %v1142, %v1322
        %v1463 = vmax.f32 %v1143, %v1324
        %v1464 = vmax.f32 %v1144, %v1326
        %v1465 = vmax.f32 %v1145, %v1328
        %v1466 = vmax.f32 %v1146, %v1330
        %v1467 = vmax.f32 %v1147, %v1332
        %v1468 = vmax.f32 %v1148, %v1334
        %v1469 = vmax.f32 %v1149, %v1336
        %v1470 = vmax.f32 %v1150, %v1338
        %v1471 = vmax.f32 %v1151, %v1340
        %v1472 = vmax.f32 %v1152, %v1342
        %v1473 = vmax.f32 %v1153, %v1344
        %v1474 = vmax.f32 %v1154, %v1346
        %v1475 = vld [vmem:[%s2] sm:$0xff]
        %v1476 = vld [vmem:[%s2 + $0x8] sm:$0xff]
        %v1477 = vld [vmem:[%s2 + $0x10] sm:$0xff]
        %v1478 = vld [vmem:[%s2 + $0x18] sm:$0xff]
        %v1479 = vld [vmem:[%s2 + $0x20] sm:$0xff]
        %v1480 = vld [vmem:[%s2 + $0x28] sm:$0xff]
        %v1481 = vld [vmem:[%s2 + $0x30] sm:$0xff]
        %v1482 = vld [vmem:[%s2 + $0x38] sm:$0xff]
        %v1483 = vld [vmem:[%s2 + $0x40] sm:$0xff]
        %v1484 = vld [vmem:[%s2 + $0x48] sm:$0xff]
        %v1485 = vld [vmem:[%s2 + $0x50] sm:$0xff]
        %v1486 = vld [vmem:[%s2 + $0x58] sm:$0xff]
        %v1487 = vld [vmem:[%s2 + $0x60] sm:$0xff]
        %v1488 = vld [vmem:[%s2 + $0x68] sm:$0xff]
        %v1489 = vld [vmem:[%s2 + $0x70] sm:$0xff]
        %v1490 = vld [vmem:[%s2 + $0x78] sm:$0xff]
        %v1491 = vld [vmem:[%s2 + $0x80] sm:$0xff]
        %v1492 = vld [vmem:[%s2 + $0x88] sm:$0xff]
        %v1493 = vld [vmem:[%s2 + $0x90] sm:$0xff]
        %v1494 = vld [vmem:[%s2 + $0x98] sm:$0xff]
        %v1495 = vld [vmem:[%s2 + $0xa0] sm:$0xff]
        %v1496 = vld [vmem:[%s2 + $0xa8] sm:$0xff]
        %v1497 = vld [vmem:[%s2 + $0xb0] sm:$0xff]
        %v1498 = vld [vmem:[%s2 + $0xb8] sm:$0xff]
        %v1499 = vld [vmem:[%s2 + $0xc0] sm:$0xff]
        %v1500 = vld [vmem:[%s2 + $0xc8] sm:$0xff]
        %v1501 = vld [vmem:[%s2 + $0xd0] sm:$0xff]
        %v1502 = vld [vmem:[%s2 + $0xd8] sm:$0xff]
        %v1503 = vld [vmem:[%s2 + $0xe0] sm:$0xff]
        %v1504 = vld [vmem:[%s2 + $0xe8] sm:$0xff]
        %v1505 = vld [vmem:[%s2 + $0xf0] sm:$0xff]
        %v1506 = vld [vmem:[%s2 + $0xf8] sm:$0xff]
        %v1507 = vld [vmem:[%s2 + $0x100] sm:$0xff]
        %v1508 = vld [vmem:[%s2 + $0x108] sm:$0xff]
        %v1509 = vld [vmem:[%s2 + $0x110] sm:$0xff]
        %v1510 = vld [vmem:[%s2 + $0x118] sm:$0xff]
        %v1511 = vld [vmem:[%s2 + $0x120] sm:$0xff]
        %v1512 = vld [vmem:[%s2 + $0x128] sm:$0xff]
        %v1513 = vld [vmem:[%s2 + $0x130] sm:$0xff]
        %v1514 = vld [vmem:[%s2 + $0x138] sm:$0xff]
        %v1515 = vld [vmem:[%s2 + $0x140] sm:$0xff]
        %v1516 = vld [vmem:[%s2 + $0x148] sm:$0xff]
        %v1517 = vld [vmem:[%s2 + $0x150] sm:$0xff]
        %v1518 = vld [vmem:[%s2 + $0x158] sm:$0xff]
        %v1519 = vld [vmem:[%s2 + $0x160] sm:$0xff]
        %v1520 = vld [vmem:[%s2 + $0x168] sm:$0xff]
        %v1521 = vld [vmem:[%s2 + $0x170] sm:$0xff]
        %v1522 = vld [vmem:[%s2 + $0x178] sm:$0xff]
        %v1523 = vld [vmem:[%s2 + $0x180] sm:$0xff]
        %v1524 = vld [vmem:[%s2 + $0x188] sm:$0xff]
        %v1525 = vld [vmem:[%s2 + $0x190] sm:$0xff]
        %v1526 = vld [vmem:[%s2 + $0x198] sm:$0xff]
        %v1527 = vld [vmem:[%s2 + $0x1a0] sm:$0xff]
        %v1528 = vld [vmem:[%s2 + $0x1a8] sm:$0xff]
        %v1529 = vld [vmem:[%s2 + $0x1b0] sm:$0xff]
        %v1530 = vld [vmem:[%s2 + $0x1b8] sm:$0xff]
        %v1531 = vld [vmem:[%s2 + $0x1c0] sm:$0xff]
        %v1532 = vld [vmem:[%s2 + $0x1c8] sm:$0xff]
        %v1533 = vld [vmem:[%s2 + $0x1d0] sm:$0xff]
        %v1534 = vld [vmem:[%s2 + $0x1d8] sm:$0xff]
        %v1535 = vld [vmem:[%s2 + $0x1e0] sm:$0xff]
        %v1536 = vld [vmem:[%s2 + $0x1e8] sm:$0xff]
        %v1537 = vld [vmem:[%s2 + $0x1f0] sm:$0xff]
        %v1538 = vld [vmem:[%s2 + $0x1f8] sm:$0xff]
        %v1539 = vld [vmem:[%s2 + $0x200] sm:$0xff]
        %v1540 = vld [vmem:[%s2 + $0x208] sm:$0xff]
        %v1541 = vld [vmem:[%s2 + $0x210] sm:$0xff]
        %v1542 = vld [vmem:[%s2 + $0x218] sm:$0xff]
        %v1543 = vld [vmem:[%s2 + $0x220] sm:$0xff]
        %v1544 = vld [vmem:[%s2 + $0x228] sm:$0xff]
        %v1545 = vld [vmem:[%s2 + $0x230] sm:$0xff]
        %v1546 = vld [vmem:[%s2 + $0x238] sm:$0xff]
        %v1547 = vld [vmem:[%s2 + $0x240] sm:$0xff]
        %v1548 = vld [vmem:[%s2 + $0x248] sm:$0xff]
        %v1549 = vld [vmem:[%s2 + $0x250] sm:$0xff]
        %v1550 = vld [vmem:[%s2 + $0x258] sm:$0xff]
        %v1551 = vld [vmem:[%s2 + $0x260] sm:$0xff]
        %v1552 = vld [vmem:[%s2 + $0x268] sm:$0xff]
        %v1553 = vld [vmem:[%s2 + $0x270] sm:$0xff]
        %v1554 = vld [vmem:[%s2 + $0x278] sm:$0xff]
        %v1555 = vld [vmem:[%s2 + $0x280] sm:$0xff]
        %v1556 = vld [vmem:[%s2 + $0x288] sm:$0xff]
        %v1557 = vld [vmem:[%s2 + $0x290] sm:$0xff]
        %v1558 = vld [vmem:[%s2 + $0x298] sm:$0xff]
        %v1559 = vld [vmem:[%s2 + $0x2a0] sm:$0xff]
        %v1560 = vld [vmem:[%s2 + $0x2a8] sm:$0xff]
        %v1561 = vld [vmem:[%s2 + $0x2b0] sm:$0xff]
        %v1562 = vld [vmem:[%s2 + $0x2b8] sm:$0xff]
        %v1563 = vld [vmem:[%s2 + $0x2c0] sm:$0xff]
        %v1564 = vld [vmem:[%s2 + $0x2c8] sm:$0xff]
        %v1565 = vld [vmem:[%s2 + $0x2d0] sm:$0xff]
        %v1566 = vld [vmem:[%s2 + $0x2d8] sm:$0xff]
        %v1567 = vld [vmem:[%s2 + $0x2e0] sm:$0xff]
        %v1568 = vld [vmem:[%s2 + $0x2e8] sm:$0xff]
        %v1569 = vld [vmem:[%s2 + $0x2f0] sm:$0xff]
        %v1570 = vld [vmem:[%s2 + $0x2f8] sm:$0xff]
        %v1571 = vld [vmem:[%s2 + $0x300] sm:$0xff]
        %v1572 = vld [vmem:[%s2 + $0x308] sm:$0xff]
        %v1573 = vld [vmem:[%s2 + $0x310] sm:$0xff]
        %v1574 = vld [vmem:[%s2 + $0x318] sm:$0xff]
        %v1575 = vld [vmem:[%s2 + $0x320] sm:$0xff]
        %v1576 = vld [vmem:[%s2 + $0x328] sm:$0xff]
        %v1577 = vld [vmem:[%s2 + $0x330] sm:$0xff]
        %v1578 = vld [vmem:[%s2 + $0x338] sm:$0xff]
        %v1579 = vld [vmem:[%s2 + $0x340] sm:$0xff]
        %v1580 = vld [vmem:[%s2 + $0x348] sm:$0xff]
        %v1581 = vld [vmem:[%s2 + $0x350] sm:$0xff]
        %v1582 = vld [vmem:[%s2 + $0x358] sm:$0xff]
        %v1583 = vld [vmem:[%s2 + $0x360] sm:$0xff]
        %v1584 = vld [vmem:[%s2 + $0x368] sm:$0xff]
        %v1585 = vld [vmem:[%s2 + $0x370] sm:$0xff]
        %v1586 = vld [vmem:[%s2 + $0x378] sm:$0xff]
        %v1587 = vld [vmem:[%s2 + $0x380] sm:$0xff]
        %v1588 = vld [vmem:[%s2 + $0x388] sm:$0xff]
        %v1589 = vld [vmem:[%s2 + $0x390] sm:$0xff]
        %v1590 = vld [vmem:[%s2 + $0x398] sm:$0xff]
        %v1591 = vld [vmem:[%s2 + $0x3a0] sm:$0xff]
        %v1592 = vld [vmem:[%s2 + $0x3a8] sm:$0xff]
        %v1593 = vld [vmem:[%s2 + $0x3b0] sm:$0xff]
        %v1594 = vld [vmem:[%s2 + $0x3b8] sm:$0xff]
        %v1595 = vld [vmem:[%s2 + $0x3c0] sm:$0xff]
        %v1596 = vld [vmem:[%s2 + $0x3c8] sm:$0xff]
        %v1597 = vld [vmem:[%s2 + $0x3d0] sm:$0xff]
        %v1598 = vld [vmem:[%s2 + $0x3d8] sm:$0xff]
        %v1599 = vld [vmem:[%s2 + $0x3e0] sm:$0xff]
        %v1600 = vld [vmem:[%s2 + $0x3e8] sm:$0xff]
        %v1601 = vld [vmem:[%s2 + $0x3f0] sm:$0xff]
        %v1602 = vld [vmem:[%s2 + $0x3f8] sm:$0xff]
        %v1603 = vld [vmem:[%s2 + $0x400] sm:$0xff]
        %v1604 = vld [vmem:[%s2 + $0x408] sm:$0xff]
        %v1605 = vld [vmem:[%s2 + $0x410] sm:$0xff]
        %v1606 = vld [vmem:[%s2 + $0x418] sm:$0xff]
        %v1607 = vld [vmem:[%s2 + $0x420] sm:$0xff]
        %v1608 = vld [vmem:[%s2 + $0x428] sm:$0xff]
        %v1609 = vld [vmem:[%s2 + $0x430] sm:$0xff]
        %v1610 = vld [vmem:[%s2 + $0x438] sm:$0xff]
        %v1611 = vld [vmem:[%s2 + $0x440] sm:$0xff]
        %v1612 = vld [vmem:[%s2 + $0x448] sm:$0xff]
        %v1613 = vld [vmem:[%s2 + $0x450] sm:$0xff]
        %v1614 = vld [vmem:[%s2 + $0x458] sm:$0xff]
        %v1615 = vld [vmem:[%s2 + $0x460] sm:$0xff]
        %v1616 = vld [vmem:[%s2 + $0x468] sm:$0xff]
        %v1617 = vld [vmem:[%s2 + $0x470] sm:$0xff]
        %v1618 = vld [vmem:[%s2 + $0x478] sm:$0xff]
        %v1619 = vld [vmem:[%s2 + $0x480] sm:$0xff]
        %v1620 = vld [vmem:[%s2 + $0x488] sm:$0xff]
        %v1621 = vld [vmem:[%s2 + $0x490] sm:$0xff]
        %v1622 = vld [vmem:[%s2 + $0x498] sm:$0xff]
        %v1623 = vld [vmem:[%s2 + $0x4a0] sm:$0xff]
        %v1624 = vld [vmem:[%s2 + $0x4a8] sm:$0xff]
        %v1625 = vld [vmem:[%s2 + $0x4b0] sm:$0xff]
        %v1626 = vld [vmem:[%s2 + $0x4b8] sm:$0xff]
        %v1627 = vld [vmem:[%s2 + $0x4c0] sm:$0xff]
        %v1628 = vld [vmem:[%s2 + $0x4c8] sm:$0xff]
        %v1629 = vld [vmem:[%s2 + $0x4d0] sm:$0xff]
        %v1630 = vld [vmem:[%s2 + $0x4d8] sm:$0xff]
        %v1631 = vld [vmem:[%s2 + $0x4e0] sm:$0xff]
        %v1632 = vld [vmem:[%s2 + $0x4e8] sm:$0xff]
        %v1633 = vld [vmem:[%s2 + $0x4f0] sm:$0xff]
        %v1634 = vld [vmem:[%s2 + $0x4f8] sm:$0xff]
        %v1635 = vld [vmem:[%s2 + $0x500] sm:$0xff]
        %v1636 = vld [vmem:[%s2 + $0x508] sm:$0xff]
        %v1637 = vld [vmem:[%s2 + $0x510] sm:$0xff]
        %v1638 = vld [vmem:[%s2 + $0x518] sm:$0xff]
        %v1639 = vld [vmem:[%s2 + $0x520] sm:$0xff]
        %v1640 = vld [vmem:[%s2 + $0x528] sm:$0xff]
        %v1641 = vld [vmem:[%s2 + $0x530] sm:$0xff]
        %v1642 = vld [vmem:[%s2 + $0x538] sm:$0xff]
        %v1643 = vld [vmem:[%s2 + $0x540] sm:$0xff]
        %v1644 = vld [vmem:[%s2 + $0x548] sm:$0xff]
        %v1645 = vld [vmem:[%s2 + $0x550] sm:$0xff]
        %v1646 = vld [vmem:[%s2 + $0x558] sm:$0xff]
        %v1647 = vld [vmem:[%s2 + $0x560] sm:$0xff]
        %v1648 = vld [vmem:[%s2 + $0x568] sm:$0xff]
        %v1649 = vld [vmem:[%s2 + $0x570] sm:$0xff]
        %v1650 = vld [vmem:[%s2 + $0x578] sm:$0xff]
        %v1651 = vld [vmem:[%s2 + $0x580] sm:$0xff]
        %v1652 = vld [vmem:[%s2 + $0x588] sm:$0xff]
        %v1653 = vld [vmem:[%s2 + $0x590] sm:$0xff]
        %v1654 = vld [vmem:[%s2 + $0x598] sm:$0xff]
        %v1655 = vld [vmem:[%s2 + $0x5a0] sm:$0xff]
        %v1656 = vld [vmem:[%s2 + $0x5a8] sm:$0xff]
        %v1657 = vld [vmem:[%s2 + $0x5b0] sm:$0xff]
        %v1658 = vld [vmem:[%s2 + $0x5b8] sm:$0xff]
        %v1659 = vld [vmem:[%s2 + $0x5c0] sm:$0xff]
        %v1660 = vld [vmem:[%s2 + $0x5c8] sm:$0xff]
        %v1661 = vld [vmem:[%s2 + $0x5d0] sm:$0xff]
        %v1662 = vld [vmem:[%s2 + $0x5d8] sm:$0xff]
        %v1663 = vld [vmem:[%s2 + $0x5e0] sm:$0xff]
        %v1664 = vld [vmem:[%s2 + $0x5e8] sm:$0xff]
        %v1665 = vld [vmem:[%s2 + $0x5f0] sm:$0xff]
        %v1666 = vld [vmem:[%s2 + $0x5f8] sm:$0xff]
        %v1667 = vld [vmem:[%s2 + $0x600] sm:$0xff]
        %v1668 = vld [vmem:[%s2 + $0x608] sm:$0xff]
        %v1669 = vld [vmem:[%s2 + $0x610] sm:$0xff]
        %v1670 = vld [vmem:[%s2 + $0x618] sm:$0xff]
        %v1671 = vld [vmem:[%s2 + $0x620] sm:$0xff]
        %v1672 = vld [vmem:[%s2 + $0x628] sm:$0xff]
        %v1673 = vld [vmem:[%s2 + $0x630] sm:$0xff]
        %v1674 = vld [vmem:[%s2 + $0x638] sm:$0xff]
        %v1675 = vld [vmem:[%s2 + $0x640] sm:$0xff]
        %v1676 = vld [vmem:[%s2 + $0x648] sm:$0xff]
        %v1677 = vld [vmem:[%s2 + $0x650] sm:$0xff]
        %v1678 = vld [vmem:[%s2 + $0x658] sm:$0xff]
        %v1679 = vld [vmem:[%s2 + $0x660] sm:$0xff]
        %v1680 = vld [vmem:[%s2 + $0x668] sm:$0xff]
        %v1681 = vld [vmem:[%s2 + $0x670] sm:$0xff]
        %v1682 = vld [vmem:[%s2 + $0x678] sm:$0xff]
        %v1683 = vld [vmem:[%s2 + $0x680] sm:$0xff]
        %v1684 = vld [vmem:[%s2 + $0x688] sm:$0xff]
        %v1685 = vld [vmem:[%s2 + $0x690] sm:$0xff]
        %v1686 = vld [vmem:[%s2 + $0x698] sm:$0xff]
        %v1687 = vld [vmem:[%s2 + $0x6a0] sm:$0xff]
        %v1688 = vld [vmem:[%s2 + $0x6a8] sm:$0xff]
        %v1689 = vld [vmem:[%s2 + $0x6b0] sm:$0xff]
        %v1690 = vld [vmem:[%s2 + $0x6b8] sm:$0xff]
        %v1691 = vld [vmem:[%s2 + $0x6c0] sm:$0xff]
        %v1692 = vld [vmem:[%s2 + $0x6c8] sm:$0xff]
        %v1693 = vld [vmem:[%s2 + $0x6d0] sm:$0xff]
        %v1694 = vld [vmem:[%s2 + $0x6d8] sm:$0xff]
        %v1695 = vld [vmem:[%s2 + $0x6e0] sm:$0xff]
        %v1696 = vld [vmem:[%s2 + $0x6e8] sm:$0xff]
        %v1697 = vld [vmem:[%s2 + $0x6f0] sm:$0xff]
        %v1698 = vld [vmem:[%s2 + $0x6f8] sm:$0xff]
        %v1699 = vld [vmem:[%s2 + $0x700] sm:$0xff]
        %v1700 = vld [vmem:[%s2 + $0x708] sm:$0xff]
        %v1701 = vld [vmem:[%s2 + $0x710] sm:$0xff]
        %v1702 = vld [vmem:[%s2 + $0x718] sm:$0xff]
        %v1703 = vld [vmem:[%s2 + $0x720] sm:$0xff]
        %v1704 = vld [vmem:[%s2 + $0x728] sm:$0xff]
        %v1705 = vld [vmem:[%s2 + $0x730] sm:$0xff]
        %v1706 = vld [vmem:[%s2 + $0x738] sm:$0xff]
        %v1707 = vld [vmem:[%s2 + $0x740] sm:$0xff]
        %v1708 = vld [vmem:[%s2 + $0x748] sm:$0xff]
        %v1709 = vld [vmem:[%s2 + $0x750] sm:$0xff]
        %v1710 = vld [vmem:[%s2 + $0x758] sm:$0xff]
        %v1711 = vld [vmem:[%s2 + $0x760] sm:$0xff]
        %v1712 = vld [vmem:[%s2 + $0x768] sm:$0xff]
        %v1713 = vld [vmem:[%s2 + $0x770] sm:$0xff]
        %v1714 = vld [vmem:[%s2 + $0x778] sm:$0xff]
        %v1715 = vld [vmem:[%s2 + $0x780] sm:$0xff]
        %v1716 = vld [vmem:[%s2 + $0x788] sm:$0xff]
        %v1717 = vld [vmem:[%s2 + $0x790] sm:$0xff]
        %v1718 = vld [vmem:[%s2 + $0x798] sm:$0xff]
        %v1719 = vld [vmem:[%s2 + $0x7a0] sm:$0xff]
        %v1720 = vld [vmem:[%s2 + $0x7a8] sm:$0xff]
        %v1721 = vld [vmem:[%s2 + $0x7b0] sm:$0xff]
        %v1722 = vld [vmem:[%s2 + $0x7b8] sm:$0xff]
        %v1723 = vld [vmem:[%s2 + $0x7c0] sm:$0xff]
        %v1724 = vld [vmem:[%s2 + $0x7c8] sm:$0xff]
        %v1725 = vld [vmem:[%s2 + $0x7d0] sm:$0xff]
        %v1726 = vld [vmem:[%s2 + $0x7d8] sm:$0xff]
        %v1727 = vld [vmem:[%s2 + $0x7e0] sm:$0xff]
        %v1728 = vld [vmem:[%s2 + $0x7e8] sm:$0xff]
        %v1729 = vld [vmem:[%s2 + $0x7f0] sm:$0xff]
        %v1730 = vld [vmem:[%s2 + $0x7f8] sm:$0xff]
        %v1731 = vld [vmem:[%s2 + $0x800] sm:$0xff]
        %v1732 = vld [vmem:[%s2 + $0x808] sm:$0xff]
        %v1733 = vld [vmem:[%s2 + $0x810] sm:$0xff]
        %v1734 = vld [vmem:[%s2 + $0x818] sm:$0xff]
        %v1735 = vld [vmem:[%s2 + $0x820] sm:$0xff]
        %v1736 = vld [vmem:[%s2 + $0x828] sm:$0xff]
        %v1737 = vld [vmem:[%s2 + $0x830] sm:$0xff]
        %v1738 = vld [vmem:[%s2 + $0x838] sm:$0xff]
        %v1739 = vld [vmem:[%s2 + $0x840] sm:$0xff]
        %v1740 = vld [vmem:[%s2 + $0x848] sm:$0xff]
        %v1741 = vld [vmem:[%s2 + $0x850] sm:$0xff]
        %v1742 = vld [vmem:[%s2 + $0x858] sm:$0xff]
        %v1743 = vld [vmem:[%s2 + $0x860] sm:$0xff]
        %v1744 = vld [vmem:[%s2 + $0x868] sm:$0xff]
        %v1745 = vld [vmem:[%s2 + $0x870] sm:$0xff]
        %v1746 = vld [vmem:[%s2 + $0x878] sm:$0xff]
        %v1747 = vld [vmem:[%s2 + $0x880] sm:$0xff]
        %v1748 = vld [vmem:[%s2 + $0x888] sm:$0xff]
        %v1749 = vld [vmem:[%s2 + $0x890] sm:$0xff]
        %v1750 = vld [vmem:[%s2 + $0x898] sm:$0xff]
        %v1751 = vld [vmem:[%s2 + $0x8a0] sm:$0xff]
        %v1752 = vld [vmem:[%s2 + $0x8a8] sm:$0xff]
        %v1753 = vld [vmem:[%s2 + $0x8b0] sm:$0xff]
        %v1754 = vld [vmem:[%s2 + $0x8b8] sm:$0xff]
        %v1755 = vld [vmem:[%s2 + $0x8c0] sm:$0xff]
        %v1756 = vld [vmem:[%s2 + $0x8c8] sm:$0xff]
        %v1757 = vld [vmem:[%s2 + $0x8d0] sm:$0xff]
        %v1758 = vld [vmem:[%s2 + $0x8d8] sm:$0xff]
        %v1759 = vld [vmem:[%s2 + $0x8e0] sm:$0xff]
        %v1760 = vld [vmem:[%s2 + $0x8e8] sm:$0xff]
        %v1761 = vld [vmem:[%s2 + $0x8f0] sm:$0xff]
        %v1762 = vld [vmem:[%s2 + $0x8f8] sm:$0xff]
        %v1763 = vld [vmem:[%s2 + $0x900] sm:$0xff]
        %v1764 = vld [vmem:[%s2 + $0x908] sm:$0xff]
        %v1765 = vld [vmem:[%s2 + $0x910] sm:$0xff]
        %v1766 = vld [vmem:[%s2 + $0x918] sm:$0xff]
        %v1767 = vld [vmem:[%s2 + $0x920] sm:$0xff]
        %v1768 = vld [vmem:[%s2 + $0x928] sm:$0xff]
        %v1769 = vld [vmem:[%s2 + $0x930] sm:$0xff]
        %v1770 = vld [vmem:[%s2 + $0x938] sm:$0xff]
        %v1771 = vld [vmem:[%s2 + $0x940] sm:$0xff]
        %v1772 = vld [vmem:[%s2 + $0x948] sm:$0xff]
        %v1773 = vld [vmem:[%s2 + $0x950] sm:$0xff]
        %v1774 = vld [vmem:[%s2 + $0x958] sm:$0xff]
        %v1775 = vld [vmem:[%s2 + $0x960] sm:$0xff]
        %v1776 = vld [vmem:[%s2 + $0x968] sm:$0xff]
        %v1777 = vld [vmem:[%s2 + $0x970] sm:$0xff]
        %v1778 = vld [vmem:[%s2 + $0x978] sm:$0xff]
        %v1779 = vld [vmem:[%s2 + $0x980] sm:$0xff]
        %v1780 = vld [vmem:[%s2 + $0x988] sm:$0xff]
        %v1781 = vld [vmem:[%s2 + $0x990] sm:$0xff]
        %v1782 = vld [vmem:[%s2 + $0x998] sm:$0xff]
        %v1783 = vld [vmem:[%s2 + $0x9a0] sm:$0xff]
        %v1784 = vld [vmem:[%s2 + $0x9a8] sm:$0xff]
        %v1785 = vld [vmem:[%s2 + $0x9b0] sm:$0xff]
        %v1786 = vld [vmem:[%s2 + $0x9b8] sm:$0xff]
        %v1787 = vld [vmem:[%s2 + $0x9c0] sm:$0xff]
        %v1788 = vld [vmem:[%s2 + $0x9c8] sm:$0xff]
        %v1789 = vld [vmem:[%s2 + $0x9d0] sm:$0xff]
        %v1790 = vld [vmem:[%s2 + $0x9d8] sm:$0xff]
        %v1791 = vld [vmem:[%s2 + $0x9e0] sm:$0xff]
        %v1792 = vld [vmem:[%s2 + $0x9e8] sm:$0xff]
        %v1793 = vld [vmem:[%s2 + $0x9f0] sm:$0xff]
        %v1794 = vld [vmem:[%s2 + $0x9f8] sm:$0xff]
        %v1795 = vld [vmem:[%s2 + $0xa00] sm:$0xff]
        %v1796 = vld [vmem:[%s2 + $0xa08] sm:$0xff]
        %v1797 = vld [vmem:[%s2 + $0xa10] sm:$0xff]
        %v1798 = vld [vmem:[%s2 + $0xa18] sm:$0xff]
        %v1799 = vld [vmem:[%s2 + $0xa20] sm:$0xff]
        %v1800 = vld [vmem:[%s2 + $0xa28] sm:$0xff]
        %v1801 = vld [vmem:[%s2 + $0xa30] sm:$0xff]
        %v1802 = vld [vmem:[%s2 + $0xa38] sm:$0xff]
        %v1803 = vld [vmem:[%s2 + $0xa40] sm:$0xff]
        %v1804 = vld [vmem:[%s2 + $0xa48] sm:$0xff]
        %v1805 = vld [vmem:[%s2 + $0xa50] sm:$0xff]
        %v1806 = vld [vmem:[%s2 + $0xa58] sm:$0xff]
        %v1807 = vld [vmem:[%s2 + $0xa60] sm:$0xff]
        %v1808 = vld [vmem:[%s2 + $0xa68] sm:$0xff]
        %v1809 = vld [vmem:[%s2 + $0xa70] sm:$0xff]
        %v1810 = vld [vmem:[%s2 + $0xa78] sm:$0xff]
        %v1811 = vld [vmem:[%s2 + $0xa80] sm:$0xff]
        %v1812 = vld [vmem:[%s2 + $0xa88] sm:$0xff]
        %v1813 = vld [vmem:[%s2 + $0xa90] sm:$0xff]
        %v1814 = vld [vmem:[%s2 + $0xa98] sm:$0xff]
        %v1815 = vld [vmem:[%s2 + $0xaa0] sm:$0xff]
        %v1816 = vld [vmem:[%s2 + $0xaa8] sm:$0xff]
        %v1817 = vld [vmem:[%s2 + $0xab0] sm:$0xff]
        %v1818 = vld [vmem:[%s2 + $0xab8] sm:$0xff]
        %v1819 = vld [vmem:[%s2 + $0xac0] sm:$0xff]
        %v1820 = vld [vmem:[%s2 + $0xac8] sm:$0xff]
        %v1821 = vld [vmem:[%s2 + $0xad0] sm:$0xff]
        %v1822 = vld [vmem:[%s2 + $0xad8] sm:$0xff]
        %v1823 = vld [vmem:[%s2 + $0xae0] sm:$0xff]
        %v1824 = vld [vmem:[%s2 + $0xae8] sm:$0xff]
        %v1825 = vld [vmem:[%s2 + $0xaf0] sm:$0xff]
        %v1826 = vld [vmem:[%s2 + $0xaf8] sm:$0xff]
        %v1827 = vld [vmem:[%s2 + $0xb00] sm:$0xff]
        %v1828 = vld [vmem:[%s2 + $0xb08] sm:$0xff]
        %v1829 = vld [vmem:[%s2 + $0xb10] sm:$0xff]
        %v1830 = vld [vmem:[%s2 + $0xb18] sm:$0xff]
        %v1831 = vld [vmem:[%s2 + $0xb20] sm:$0xff]
        %v1832 = vld [vmem:[%s2 + $0xb28] sm:$0xff]
        %v1833 = vld [vmem:[%s2 + $0xb30] sm:$0xff]
        %v1834 = vld [vmem:[%s2 + $0xb38] sm:$0xff]
        %v1835 = vld [vmem:[%s2 + $0xb40] sm:$0xff]
        %v1836 = vld [vmem:[%s2 + $0xb48] sm:$0xff]
        %v1837 = vld [vmem:[%s2 + $0xb50] sm:$0xff]
        %v1838 = vld [vmem:[%s2 + $0xb58] sm:$0xff]
        %v1839 = vld [vmem:[%s2 + $0xb60] sm:$0xff]
        %v1840 = vld [vmem:[%s2 + $0xb68] sm:$0xff]
        %v1841 = vld [vmem:[%s2 + $0xb70] sm:$0xff]
        %v1842 = vld [vmem:[%s2 + $0xb78] sm:$0xff]
        %v1843 = vld [vmem:[%s2 + $0xb80] sm:$0xff]
        %v1844 = vld [vmem:[%s2 + $0xb88] sm:$0xff]
        %v1845 = vld [vmem:[%s2 + $0xb90] sm:$0xff]
        %v1846 = vld [vmem:[%s2 + $0xb98] sm:$0xff]
        %v1847 = vld [vmem:[%s2 + $0xba0] sm:$0xff]
        %v1848 = vld [vmem:[%s2 + $0xba8] sm:$0xff]
        %v1849 = vld [vmem:[%s2 + $0xbb0] sm:$0xff]
        %v1850 = vld [vmem:[%s2 + $0xbb8] sm:$0xff]
        %v1851 = vld [vmem:[%s2 + $0xbc0] sm:$0xff]
        %v1852 = vld [vmem:[%s2 + $0xbc8] sm:$0xff]
        %v1853 = vld [vmem:[%s2 + $0xbd0] sm:$0xff]
        %v1854 = vld [vmem:[%s2 + $0xbd8] sm:$0xff]
        %v1855 = vld [vmem:[%s2 + $0xbe0] sm:$0xff]
        %v1856 = vld [vmem:[%s2 + $0xbe8] sm:$0xff]
        %v1857 = vld [vmem:[%s2 + $0xbf0] sm:$0xff]
        %v1858 = vld [vmem:[%s2 + $0xbf8] sm:$0xff]
        %v1859 = vld [vmem:[%s2 + $0xc00] sm:$0xff]
        %v1860 = vld [vmem:[%s2 + $0xc08] sm:$0xff]
        %v1861 = vld [vmem:[%s2 + $0xc10] sm:$0xff]
        %v1862 = vld [vmem:[%s2 + $0xc18] sm:$0xff]
        %v1863 = vld [vmem:[%s2 + $0xc20] sm:$0xff]
        %v1864 = vld [vmem:[%s2 + $0xc28] sm:$0xff]
        %v1865 = vld [vmem:[%s2 + $0xc30] sm:$0xff]
        %v1866 = vld [vmem:[%s2 + $0xc38] sm:$0xff]
        %v1867 = vld [vmem:[%s2 + $0xc40] sm:$0xff]
        %v1868 = vld [vmem:[%s2 + $0xc48] sm:$0xff]
        %v1869 = vld [vmem:[%s2 + $0xc50] sm:$0xff]
        %v1870 = vld [vmem:[%s2 + $0xc58] sm:$0xff]
        %v1871 = vld [vmem:[%s2 + $0xc60] sm:$0xff]
        %v1872 = vld [vmem:[%s2 + $0xc68] sm:$0xff]
        %v1873 = vld [vmem:[%s2 + $0xc70] sm:$0xff]
        %v1874 = vld [vmem:[%s2 + $0xc78] sm:$0xff]
        %v1875 = vld [vmem:[%s2 + $0xc80] sm:$0xff]
        %v1876 = vld [vmem:[%s2 + $0xc88] sm:$0xff]
        %v1877 = vld [vmem:[%s2 + $0xc90] sm:$0xff]
        %v1878 = vld [vmem:[%s2 + $0xc98] sm:$0xff]
        %v1879 = vld [vmem:[%s2 + $0xca0] sm:$0xff]
        %v1880 = vld [vmem:[%s2 + $0xca8] sm:$0xff]
        %v1881 = vld [vmem:[%s2 + $0xcb0] sm:$0xff]
        %v1882 = vld [vmem:[%s2 + $0xcb8] sm:$0xff]
        %v1883 = vld [vmem:[%s2 + $0xcc0] sm:$0xff]
        %v1884 = vld [vmem:[%s2 + $0xcc8] sm:$0xff]
        %v1885 = vld [vmem:[%s2 + $0xcd0] sm:$0xff]
        %v1886 = vld [vmem:[%s2 + $0xcd8] sm:$0xff]
        %v1887 = vld [vmem:[%s2 + $0xce0] sm:$0xff]
        %v1888 = vld [vmem:[%s2 + $0xce8] sm:$0xff]
        %v1889 = vld [vmem:[%s2 + $0xcf0] sm:$0xff]
        %v1890 = vld [vmem:[%s2 + $0xcf8] sm:$0xff]
        %v1891 = vld [vmem:[%s2 + $0xd00] sm:$0xff]
        %v1892 = vld [vmem:[%s2 + $0xd08] sm:$0xff]
        %v1893 = vld [vmem:[%s2 + $0xd10] sm:$0xff]
        %v1894 = vld [vmem:[%s2 + $0xd18] sm:$0xff]
        %v1895 = vld [vmem:[%s2 + $0xd20] sm:$0xff]
        %v1896 = vld [vmem:[%s2 + $0xd28] sm:$0xff]
        %v1897 = vld [vmem:[%s2 + $0xd30] sm:$0xff]
        %v1898 = vld [vmem:[%s2 + $0xd38] sm:$0xff]
        %v1899 = vld [vmem:[%s2 + $0xd40] sm:$0xff]
        %v1900 = vld [vmem:[%s2 + $0xd48] sm:$0xff]
        %v1901 = vld [vmem:[%s2 + $0xd50] sm:$0xff]
        %v1902 = vld [vmem:[%s2 + $0xd58] sm:$0xff]
        %v1903 = vld [vmem:[%s2 + $0xd60] sm:$0xff]
        %v1904 = vld [vmem:[%s2 + $0xd68] sm:$0xff]
        %v1905 = vld [vmem:[%s2 + $0xd70] sm:$0xff]
        %v1906 = vld [vmem:[%s2 + $0xd78] sm:$0xff]
        %v1907 = vld [vmem:[%s2 + $0xd80] sm:$0xff]
        %v1908 = vld [vmem:[%s2 + $0xd88] sm:$0xff]
        %v1909 = vld [vmem:[%s2 + $0xd90] sm:$0xff]
        %v1910 = vld [vmem:[%s2 + $0xd98] sm:$0xff]
        %v1911 = vld [vmem:[%s2 + $0xda0] sm:$0xff]
        %v1912 = vld [vmem:[%s2 + $0xda8] sm:$0xff]
        %v1913 = vld [vmem:[%s2 + $0xdb0] sm:$0xff]
        %v1914 = vld [vmem:[%s2 + $0xdb8] sm:$0xff]
        %v1915 = vld [vmem:[%s2 + $0xdc0] sm:$0xff]
        %v1916 = vld [vmem:[%s2 + $0xdc8] sm:$0xff]
        %v1917 = vld [vmem:[%s2 + $0xdd0] sm:$0xff]
        %v1918 = vld [vmem:[%s2 + $0xdd8] sm:$0xff]
        %v1919 = vld [vmem:[%s2 + $0xde0] sm:$0xff]
        %v1920 = vld [vmem:[%s2 + $0xde8] sm:$0xff]
        %v1921 = vld [vmem:[%s2 + $0xdf0] sm:$0xff]
        %v1922 = vld [vmem:[%s2 + $0xdf8] sm:$0xff]
        %v1923 = vld [vmem:[%s2 + $0xe00] sm:$0xff]
        %v1924 = vld [vmem:[%s2 + $0xe08] sm:$0xff]
        %v1925 = vld [vmem:[%s2 + $0xe10] sm:$0xff]
        %v1926 = vld [vmem:[%s2 + $0xe18] sm:$0xff]
        %v1927 = vld [vmem:[%s2 + $0xe20] sm:$0xff]
        %v1928 = vld [vmem:[%s2 + $0xe28] sm:$0xff]
        %v1929 = vld [vmem:[%s2 + $0xe30] sm:$0xff]
        %v1930 = vld [vmem:[%s2 + $0xe38] sm:$0xff]
        %v1931 = vld [vmem:[%s2 + $0xe40] sm:$0xff]
        %v1932 = vld [vmem:[%s2 + $0xe48] sm:$0xff]
        %v1933 = vld [vmem:[%s2 + $0xe50] sm:$0xff]
        %v1934 = vld [vmem:[%s2 + $0xe58] sm:$0xff]
        %v1935 = vld [vmem:[%s2 + $0xe60] sm:$0xff]
        %v1936 = vld [vmem:[%s2 + $0xe68] sm:$0xff]
        %v1937 = vld [vmem:[%s2 + $0xe70] sm:$0xff]
        %v1938 = vld [vmem:[%s2 + $0xe78] sm:$0xff]
        %v1939 = vld [vmem:[%s2 + $0xe80] sm:$0xff]
        %v1940 = vld [vmem:[%s2 + $0xe88] sm:$0xff]
        %v1941 = vld [vmem:[%s2 + $0xe90] sm:$0xff]
        %v1942 = vld [vmem:[%s2 + $0xe98] sm:$0xff]
        %v1943 = vld [vmem:[%s2 + $0xea0] sm:$0xff]
        %v1944 = vld [vmem:[%s2 + $0xea8] sm:$0xff]
        %v1945 = vld [vmem:[%s2 + $0xeb0] sm:$0xff]
        %v1946 = vld [vmem:[%s2 + $0xeb8] sm:$0xff]
        %v1947 = vld [vmem:[%s2 + $0xec0] sm:$0xff]
        %v1948 = vld [vmem:[%s2 + $0xec8] sm:$0xff]
        %v1949 = vld [vmem:[%s2 + $0xed0] sm:$0xff]
        %v1950 = vld [vmem:[%s2 + $0xed8] sm:$0xff]
        %v1951 = vld [vmem:[%s2 + $0xee0] sm:$0xff]
        %v1952 = vld [vmem:[%s2 + $0xee8] sm:$0xff]
        %v1953 = vld [vmem:[%s2 + $0xef0] sm:$0xff]
        %v1954 = vld [vmem:[%s2 + $0xef8] sm:$0xff]
        %v1955 = vld [vmem:[%s2 + $0xf00] sm:$0xff]
        %v1956 = vld [vmem:[%s2 + $0xf08] sm:$0xff]
        %v1957 = vld [vmem:[%s2 + $0xf10] sm:$0xff]
        %v1958 = vld [vmem:[%s2 + $0xf18] sm:$0xff]
        %v1959 = vld [vmem:[%s2 + $0xf20] sm:$0xff]
        %v1960 = vld [vmem:[%s2 + $0xf28] sm:$0xff]
        %v1961 = vld [vmem:[%s2 + $0xf30] sm:$0xff]
        %v1962 = vld [vmem:[%s2 + $0xf38] sm:$0xff]
        %v1963 = vld [vmem:[%s2 + $0xf40] sm:$0xff]
        %v1964 = vld [vmem:[%s2 + $0xf48] sm:$0xff]
        %v1965 = vld [vmem:[%s2 + $0xf50] sm:$0xff]
        %v1966 = vld [vmem:[%s2 + $0xf58] sm:$0xff]
        %v1967 = vld [vmem:[%s2 + $0xf60] sm:$0xff]
        %v1968 = vld [vmem:[%s2 + $0xf68] sm:$0xff]
        %v1969 = vld [vmem:[%s2 + $0xf70] sm:$0xff]
        %v1970 = vld [vmem:[%s2 + $0xf78] sm:$0xff]
        %v1971 = vld [vmem:[%s2 + $0xf80] sm:$0xff]
        %v1972 = vld [vmem:[%s2 + $0xf88] sm:$0xff]
        %v1973 = vld [vmem:[%s2 + $0xf90] sm:$0xff]
        %v1974 = vld [vmem:[%s2 + $0xf98] sm:$0xff]
        %v1975 = vld [vmem:[%s2 + $0xfa0] sm:$0xff]
        %v1976 = vld [vmem:[%s2 + $0xfa8] sm:$0xff]
        %v1977 = vld [vmem:[%s2 + $0xfb0] sm:$0xff]
        %v1978 = vld [vmem:[%s2 + $0xfb8] sm:$0xff]
        %v1979 = vld [vmem:[%s2 + $0xfc0] sm:$0xff]
        %v1980 = vld [vmem:[%s2 + $0xfc8] sm:$0xff]
        %v1981 = vld [vmem:[%s2 + $0xfd0] sm:$0xff]
        %v1982 = vld [vmem:[%s2 + $0xfd8] sm:$0xff]
        %v1983 = vld [vmem:[%s2 + $0xfe0] sm:$0xff]
        %v1984 = vld [vmem:[%s2 + $0xfe8] sm:$0xff]
        %v1985 = vld [vmem:[%s2 + $0xff0] sm:$0xff]
        %v1986 = vld [vmem:[%s2 + $0xff8] sm:$0xff]
        %v1987 = vld [vmem:[%s2 + $0x1000] sm:$0xff]
        %v1988 = vld [vmem:[%s2 + $0x1008] sm:$0xff]
        %v1989 = vld [vmem:[%s2 + $0x1010] sm:$0xff]
        %v1990 = vld [vmem:[%s2 + $0x1018] sm:$0xff]
        %v1991 = vld [vmem:[%s2 + $0x1020] sm:$0xff]
        %v1992 = vld [vmem:[%s2 + $0x1028] sm:$0xff]
        %v1993 = vld [vmem:[%s2 + $0x1030] sm:$0xff]
        %v1994 = vld [vmem:[%s2 + $0x1038] sm:$0xff]
        %v1995 = vld [vmem:[%s2 + $0x1040] sm:$0xff]
        %v1996 = vld [vmem:[%s2 + $0x1048] sm:$0xff]
        %v1997 = vld [vmem:[%s2 + $0x1050] sm:$0xff]
        %v1998 = vld [vmem:[%s2 + $0x1058] sm:$0xff]
        %v1999 = vld [vmem:[%s2 + $0x1060] sm:$0xff]
        %v2000 = vld [vmem:[%s2 + $0x1068] sm:$0xff]
        %v2001 = vld [vmem:[%s2 + $0x1070] sm:$0xff]
        %v2002 = vld [vmem:[%s2 + $0x1078] sm:$0xff]
        %v2003 = vld [vmem:[%s2 + $0x1080] sm:$0xff]
        %v2004 = vld [vmem:[%s2 + $0x1088] sm:$0xff]
        %v2005 = vld [vmem:[%s2 + $0x1090] sm:$0xff]
        %v2006 = vld [vmem:[%s2 + $0x1098] sm:$0xff]
        %v2007 = vld [vmem:[%s2 + $0x10a0] sm:$0xff]
        %v2008 = vld [vmem:[%s2 + $0x10a8] sm:$0xff]
        %v2009 = vld [vmem:[%s2 + $0x10b0] sm:$0xff]
        %v2010 = vld [vmem:[%s2 + $0x10b8] sm:$0xff]
        %v2011 = vld [vmem:[%s2 + $0x10c0] sm:$0xff]
        %v2012 = vld [vmem:[%s2 + $0x10c8] sm:$0xff]
        %v2013 = vld [vmem:[%s2 + $0x10d0] sm:$0xff]
        %v2014 = vld [vmem:[%s2 + $0x10d8] sm:$0xff]
        %v2015 = vld [vmem:[%s2 + $0x10e0] sm:$0xff]
        %v2016 = vld [vmem:[%s2 + $0x10e8] sm:$0xff]
        %v2017 = vld [vmem:[%s2 + $0x10f0] sm:$0xff]
        %v2018 = vld [vmem:[%s2 + $0x10f8] sm:$0xff]
        %v2019 = vld [vmem:[%s2 + $0x1100] sm:$0xff]
        %v2020 = vld [vmem:[%s2 + $0x1108] sm:$0xff]
        %v2021 = vld [vmem:[%s2 + $0x1110] sm:$0xff]
        %v2022 = vld [vmem:[%s2 + $0x1118] sm:$0xff]
        %v2023 = vld [vmem:[%s2 + $0x1120] sm:$0xff]
        %v2024 = vld [vmem:[%s2 + $0x1128] sm:$0xff]
        %v2025 = vld [vmem:[%s2 + $0x1130] sm:$0xff]
        %v2026 = vld [vmem:[%s2 + $0x1138] sm:$0xff]
        %v2027 = vld [vmem:[%s2 + $0x1140] sm:$0xff]
        %v2028 = vld [vmem:[%s2 + $0x1148] sm:$0xff]
        %v2029 = vld [vmem:[%s2 + $0x1150] sm:$0xff]
        %v2030 = vld [vmem:[%s2 + $0x1158] sm:$0xff]
        %v2031 = vld [vmem:[%s2 + $0x1160] sm:$0xff]
        %v2032 = vld [vmem:[%s2 + $0x1168] sm:$0xff]
        %v2033 = vld [vmem:[%s2 + $0x1170] sm:$0xff]
        %v2034 = vld [vmem:[%s2 + $0x1178] sm:$0xff]
        %v2035 = vld [vmem:[%s2 + $0x1180] sm:$0xff]
        %v2036 = vld [vmem:[%s2 + $0x1188] sm:$0xff]
        %v2037 = vld [vmem:[%s2 + $0x1190] sm:$0xff]
        %v2038 = vld [vmem:[%s2 + $0x1198] sm:$0xff]
        %v2039 = vld [vmem:[%s2 + $0x11a0] sm:$0xff]
        %v2040 = vld [vmem:[%s2 + $0x11a8] sm:$0xff]
        %v2041 = vld [vmem:[%s2 + $0x11b0] sm:$0xff]
        %v2042 = vld [vmem:[%s2 + $0x11b8] sm:$0xff]
        %v2043 = vld [vmem:[%s2 + $0x11c0] sm:$0xff]
        %v2044 = vld [vmem:[%s2 + $0x11c8] sm:$0xff]
        %v2045 = vld [vmem:[%s2 + $0x11d0] sm:$0xff]
        %v2046 = vld [vmem:[%s2 + $0x11d8] sm:$0xff]
        %v2047 = vld [vmem:[%s2 + $0x11e0] sm:$0xff]
        %v2048 = vld [vmem:[%s2 + $0x11e8] sm:$0xff]
        %v2049 = vld [vmem:[%s2 + $0x11f0] sm:$0xff]
        %v2050 = vld [vmem:[%s2 + $0x11f8] sm:$0xff]
        %2051 = vmatprep.subr.mxu0 0.0
        %2052 = vmatpush1.msra.mxu0 %v1411
        %2053 = vmatprep.subr.mxu0 0.0
        %2054 = vmatpush1.msra.mxu0 %v1412
        %2055 = vmatprep.subr.mxu0 0.0
        %2056 = vmatpush1.msra.mxu0 %v1413
        %2057 = vmatprep.subr.mxu0 0.0
        %2058 = vmatpush1.msra.mxu0 %v1414
        %2059 = vmatprep.subr.mxu0 0.0
        %2060 = vmatpush1.msra.mxu0 %v1415
        %2061 = vmatprep.subr.mxu0 0.0
        %2062 = vmatpush1.msra.mxu0 %v1416
        %2063 = vmatprep.subr.mxu0 0.0
        %2064 = vmatpush1.msra.mxu0 %v1417
        %2065 = vmatprep.subr.mxu0 0.0
        %2066 = vmatpush1.msra.mxu0 %v1418
        %2067 = vmatprep.subr.mxu0 0.0
        %2068 = vmatpush1.msra.mxu0 %v1419
        %2069 = vmatprep.subr.mxu0 0.0
        %2070 = vmatpush1.msra.mxu0 %v1420
        %2071 = vmatprep.subr.mxu0 0.0
        %2072 = vmatpush1.msra.mxu0 %v1421
        %2073 = vmatprep.subr.mxu0 0.0
        %2074 = vmatpush1.msra.mxu0 %v1422
        %2075 = vmatprep.subr.mxu0 0.0
        %2076 = vmatpush1.msra.mxu0 %v1423
        %2077 = vmatprep.subr.mxu0 0.0
        %2078 = vmatpush1.msra.mxu0 %v1424
        %2079 = vmatprep.subr.mxu0 0.0
        %2080 = vmatpush1.msra.mxu0 %v1425
        %2081 = vmatprep.subr.mxu0 0.0
        %2082 = vmatpush1.msra.mxu0 %v1426
        %2083 = vmatprep.subr.mxu0 0.0
        %2084 = vmatpush1.msra.mxu0 %v1427
        %2085 = vmatprep.subr.mxu0 0.0
        %2086 = vmatpush1.msra.mxu0 %v1428
        %2087 = vmatprep.subr.mxu0 0.0
        %2088 = vmatpush1.msra.mxu0 %v1429
        %2089 = vmatprep.subr.mxu0 0.0
        %2090 = vmatpush1.msra.mxu0 %v1430
        %2091 = vmatprep.subr.mxu0 0.0
        %2092 = vmatpush1.msra.mxu0 %v1431
        %2093 = vmatprep.subr.mxu0 0.0
        %2094 = vmatpush1.msra.mxu0 %v1432
        %2095 = vmatprep.subr.mxu0 0.0
        %2096 = vmatpush1.msra.mxu0 %v1433
        %2097 = vmatprep.subr.mxu0 0.0
        %2098 = vmatpush1.msra.mxu0 %v1434
        %2099 = vmatprep.subr.mxu0 0.0
        %2100 = vmatpush1.msra.mxu0 %v1435
        %2101 = vmatprep.subr.mxu0 0.0
        %2102 = vmatpush1.msra.mxu0 %v1436
        %2103 = vmatprep.subr.mxu0 0.0
        %2104 = vmatpush1.msra.mxu0 %v1437
        %2105 = vmatprep.subr.mxu0 0.0
        %2106 = vmatpush1.msra.mxu0 %v1438
        %2107 = vmatprep.subr.mxu0 0.0
        %2108 = vmatpush1.msra.mxu0 %v1439
        %2109 = vmatprep.subr.mxu0 0.0
        %2110 = vmatpush1.msra.mxu0 %v1440
        %2111 = vmatprep.subr.mxu0 0.0
        %2112 = vmatpush1.msra.mxu0 %v1441
        %2113 = vmatprep.subr.mxu0 0.0
        %2114 = vmatpush1.msra.mxu0 %v1442
        %2115 = vmatprep.mubr.f32.mxu0 %v1476
        %2116 = vmatmul.mubr.f32.gmra.mrb[0].mxu0 %v1475
        %v2117 = vpop.f32.mrb[0].mxu0
        %v2118 = vadd.f32 0.0, %v2117
        %v2119 = vpop.f32.mrb[0].mxu0
        %2120 = vmatprep.mubr.f32.mxu0 %v1480
        %2121 = vmatmul.mubr.f32.gmra.mrb[0].mxu0 %v1479
        %v2122 = vpop.f32.mrb[0].mxu0
        %v2123 = vadd.f32 0.0, %v2122
        %v2124 = vpop.f32.mrb[0].mxu0
        %2125 = vmatprep.mubr.f32.mxu0 %v1484
        %2126 = vmatmul.mubr.f32.gmra.mrb[0].mxu0 %v1483
        %v2127 = vpop.f32.mrb[0].mxu0
        %v2128 = vadd.f32 0.0, %v2127
        %v2129 = vpop.f32.mrb[0].mxu0
        %2130 = vmatprep.mubr.f32.mxu0 %v1488
        %2131 = vmatmul.mubr.f32.gmra.mrb[0].mxu0 %v1487
        %v2132 = vpop.f32.mrb[0].mxu0
        %v2133 = vadd.f32 0.0, %v2132
        %v2134 = vpop.f32.mrb[0].mxu0
        %2135 = vmatprep.mubr.f32.mxu0 %v1492
        %2136 = vmatmul.mubr.f32.gmra.mrb[0].mxu0 %v1491
        %v2137 = vpop.f32.mrb[0].mxu0
        %v2138 = vadd.f32 0.0, %v2137
        %v2139 = vpop.f32.mrb[0].mxu0
        %2140 = vmatprep.mubr.f32.mxu0 %v1496
        %2141 = vmatmul.mubr.f32.gmra.mrb[0].mxu0 %v1495
        %v2142 = vpop.f32.mrb[0].mxu0
        %v2143 = vadd.f32 0.0, %v2142
        %v2144 = vpop.f32.mrb[0].mxu0
        %2145 = vmatprep.mubr.f32.mxu0 %v1500
        %2146 = vmatmul.mubr.f32.gmra.mrb[0].mxu0 %v1499
        %v2147 = vpop.f32.mrb[0].mxu0
        %v2148 = vadd.f32 0.0, %v2147
        %v2149 = vpop.f32.mrb[0].mxu0
        %2150 = vmatprep.mubr.f32.mxu0 %v1504
        %2151 = vmatmul.mubr.f32.gmra.mrb[0].mxu0 %v1503
        %v2152 = vpop.f32.mrb[0].mxu0
        %v2153 = vadd.f32 0.0, %v2152
        %v2154 = vpop.f32.mrb[0].mxu0
        %2155 = vmatprep.mubr.f32.mxu0 %v1508
        %2156 = vmatmul.mubr.f32.gmra.mrb[0].mxu0 %v1507
        %v2157 = vpop.f32.mrb[0].mxu0
        %v2158 = vadd.f32 0.0, %v2157
        %v2159 = vpop.f32.mrb[0].mxu0
        %2160 = vmatprep.mubr.f32.mxu0 %v1512
        %2161 = vmatmul.mubr.f32.gmra.mrb[0].mxu0 %v1511
        %v2162 = vpop.f32.mrb[0].mxu0
        %v2163 = vadd.f32 0.0, %v2162
        %v2164 = vpop.f32.mrb[0].mxu0
        %2165 = vmatprep.mubr.f32.mxu0 %v1516
        %2166 = vmatmul.mubr.f32.gmra.mrb[0].mxu0 %v1515
        %v2167 = vpop.f32.mrb[0].mxu0
        %v2168 = vadd.f32 0.0, %v2167
        %v2169 = vpop.f32.mrb[0].mxu0
        %2170 = vmatprep.mubr.f32.mxu0 %v1520
        %2171 = vmatmul.mubr.f32.gmra.mrb[0].mxu0 %v1519
        %v2172 = vpop.f32.mrb[0].mxu0
        %v2173 = vadd.f32 0.0, %v2172
        %v2174 = vpop.f32.mrb[0].mxu0
        %2175 = vmatprep.mubr.f32.mxu0 %v1524
        %2176 = vmatmul.mubr.f32.gmra.mrb[0].mxu0 %v1523
        %v2177 = vpop.f32.mrb[0].mxu0
        %v2178 = vadd.f32 0.0, %v2177
        %v2179 = vpop.f32.mrb[0].mxu0
        %2180 = vmatprep.mubr.f32.mxu0 %v1528
        %2181 = vmatmul.mubr.f32.gmra.mrb[0].mxu0 %v1527
        %v2182 = vpop.f32.mrb[0].mxu0
        %v2183 = vadd.f32 0.0, %v2182
        %v2184 = vpop.f32.mrb[0].mxu0
        %2185 = vmatprep.mubr.f32.mxu0 %v1532
        %2186 = vmatmul.mubr.f32.gmra.mrb[0].mxu0 %v1531
        %v2187 = vpop.f32.mrb[0].mxu0
        %v2188 = vadd.f32 0.0, %v2187
        %v2189 = vpop.f32.mrb[0].mxu0
        %2190 = vmatprep.mubr.f32.mxu0 %v1536
        %2191 = vmatmul.mubr.f32.gmra.mrb[0].mxu0 %v1535
        %v2192 = vpop.f32.mrb[0].mxu0
        %v2193 = vadd.f32 0.0, %v2192
        %v2194 = vpop.f32.mrb[0].mxu0
        %2195 = vmatprep.mubr.f32.mxu0 %v1540
        %2196 = vmatmul.mubr.f32.gmra.mrb[0].mxu0 %v1539
        %v2197 = vpop.f32.mrb[0].mxu0
        %v2198 = vadd.f32 0.0, %v2197
        %v2199 = vpop.f32.mrb[0].mxu0
        %2200 = vmatprep.mubr.f32.mxu0 %v1544
        %2201 = vmatmul.mubr.f32.gmra.mrb[0].mxu0 %v1543
        %v2202 = vpop.f32.mrb[0].mxu0
        %v2203 = vadd.f32 0.0, %v2202
        %v2204 = vpop.f32.mrb[0].mxu0
        %2205 = vmatprep.mubr.f32.mxu0 %v1548
        %2206 = vmatmul.mubr.f32.gmra.mrb[0].mxu0 %v1547
        %v2207 = vpop.f32.mrb[0].mxu0
        %v2208 = vadd.f32 0.0, %v2207
        %v2209 = vpop.f32.mrb[0].mxu0
        %2210 = vmatprep.mubr.f32.mxu0 %v1552
        %2211 = vmatmul.mubr.f32.gmra.mrb[0].mxu0 %v1551
        %v2212 = vpop.f32.mrb[0].mxu0
        %v2213 = vadd.f32 0.0, %v2212
        %v2214 = vpop.f32.mrb[0].mxu0
        %2215 = vmatprep.mubr.f32.mxu0 %v1556
        %2216 = vmatmul.mubr.f32.gmra.mrb[0].mxu0 %v1555
        %v2217 = vpop.f32.mrb[0].mxu0
        %v2218 = vadd.f32 0.0, %v2217
        %v2219 = vpop.f32.mrb[0].mxu0
        %2220 = vmatprep.mubr.f32.mxu0 %v1560
        %2221 = vmatmul.mubr.f32.gmra.mrb[0].mxu0 %v1559
        %v2222 = vpop.f32.mrb[0].mxu0
        %v2223 = vadd.f32 0.0, %v2222
        %v2224 = vpop.f32.mrb[0].mxu0
        %2225 = vmatprep.mubr.f32.mxu0 %v1564
        %2226 = vmatmul.mubr.f32.gmra.mrb[0].mxu0 %v1563
        %v2227 = vpop.f32.mrb[0].mxu0
        %v2228 = vadd.f32 0.0, %v2227
        %v2229 = vpop.f32.mrb[0].mxu0
        %2230 = vmatprep.mubr.f32.mxu0 %v1568
        %2231 = vmatmul.mubr.f32.gmra.mrb[0].mxu0 %v1567
        %v2232 = vpop.f32.mrb[0].mxu0
        %v2233 = vadd.f32 0.0, %v2232
        %v2234 = vpop.f32.mrb[0].mxu0
        %2235 = vmatprep.mubr.f32.mxu0 %v1572
        %2236 = vmatmul.mubr.f32.gmra.mrb[0].mxu0 %v1571
        %v2237 = vpop.f32.mrb[0].mxu0
        %v2238 = vadd.f32 0.0, %v2237
        %v2239 = vpop.f32.mrb[0].mxu0
        %2240 = vmatprep.mubr.f32.mxu0 %v1576
        %2241 = vmatmul.mubr.f32.gmra.mrb[0].mxu0 %v1575
        %v2242 = vpop.f32.mrb[0].mxu0
        %v2243 = vadd.f32 0.0, %v2242
        %v2244 = vpop.f32.mrb[0].mxu0
        %2245 = vmatprep.mubr.f32.mxu0 %v1580
        %2246 = vmatmul.mubr.f32.gmra.mrb[0].mxu0 %v1579
        %v2247 = vpop.f32.mrb[0].mxu0
        %v2248 = vadd.f32 0.0, %v2247
        %v2249 = vpop.f32.mrb[0].mxu0
        %2250 = vmatprep.mubr.f32.mxu0 %v1584
        %2251 = vmatmul.mubr.f32.gmra.mrb[0].mxu0 %v1583
        %v2252 = vpop.f32.mrb[0].mxu0
        %v2253 = vadd.f32 0.0, %v2252
        %v2254 = vpop.f32.mrb[0].mxu0
        %2255 = vmatprep.mubr.f32.mxu0 %v1588
        %2256 = vmatmul.mubr.f32.gmra.mrb[0].mxu0 %v1587
        %v2257 = vpop.f32.mrb[0].mxu0
        %v2258 = vadd.f32 0.0, %v2257
        %v2259 = vpop.f32.mrb[0].mxu0
        %2260 = vmatprep.mubr.f32.mxu0 %v1592
        %2261 = vmatmul.mubr.f32.gmra.mrb[0].mxu0 %v1591
        %v2262 = vpop.f32.mrb[0].mxu0
        %v2263 = vadd.f32 0.0, %v2262
        %v2264 = vpop.f32.mrb[0].mxu0
        %2265 = vmatprep.mubr.f32.mxu0 %v1596
        %2266 = vmatmul.mubr.f32.gmra.mrb[0].mxu0 %v1595
        %v2267 = vpop.f32.mrb[0].mxu0
        %v2268 = vadd.f32 0.0, %v2267
        %v2269 = vpop.f32.mrb[0].mxu0
        %2270 = vmatprep.mubr.f32.mxu0 %v1600
        %2271 = vmatmul.mubr.f32.gmra.mrb[0].mxu0 %v1599
        %v2272 = vpop.f32.mrb[0].mxu0
        %v2273 = vadd.f32 0.0, %v2272
        %v2274 = vpop.f32.mrb[0].mxu0
        %2275 = vmatprep.mubr.f32.mxu0 %v1604
        %2276 = vmatmul.mubr.f32.gmra.mrb[0].mxu0 %v1603
        %v2277 = vpop.f32.mrb[0].mxu0
        %v2278 = vadd.f32 0.0, %v2277
        %v2279 = vpop.f32.mrb[0].mxu0
        %2280 = vmatprep.mubr.f32.mxu0 %v1608
        %2281 = vmatmul.mubr.f32.gmra.mrb[0].mxu0 %v1607
        %v2282 = vpop.f32.mrb[0].mxu0
        %v2283 = vadd.f32 0.0, %v2282
        %v2284 = vpop.f32.mrb[0].mxu0
        %2285 = vmatprep.mubr.f32.mxu0 %v1612
        %2286 = vmatmul.mubr.f32.gmra.mrb[0].mxu0 %v1611
        %v2287 = vpop.f32.mrb[0].mxu0
        %v2288 = vadd.f32 0.0, %v2287
        %v2289 = vpop.f32.mrb[0].mxu0
        %2290 = vmatprep.mubr.f32.mxu0 %v1616
        %2291 = vmatmul.mubr.f32.gmra.mrb[0].mxu0 %v1615
        %v2292 = vpop.f32.mrb[0].mxu0
        %v2293 = vadd.f32 0.0, %v2292
        %v2294 = vpop.f32.mrb[0].mxu0
        %2295 = vmatprep.mubr.f32.mxu0 %v1620
        %2296 = vmatmul.mubr.f32.gmra.mrb[0].mxu0 %v1619
        %v2297 = vpop.f32.mrb[0].mxu0
        %v2298 = vadd.f32 0.0, %v2297
        %v2299 = vpop.f32.mrb[0].mxu0
        %2300 = vmatprep.mubr.f32.mxu0 %v1624
        %2301 = vmatmul.mubr.f32.gmra.mrb[0].mxu0 %v1623
        %v2302 = vpop.f32.mrb[0].mxu0
        %v2303 = vadd.f32 0.0, %v2302
        %v2304 = vpop.f32.mrb[0].mxu0
        %2305 = vmatprep.mubr.f32.mxu0 %v1628
        %2306 = vmatmul.mubr.f32.gmra.mrb[0].mxu0 %v1627
        %v2307 = vpop.f32.mrb[0].mxu0
        %v2308 = vadd.f32 0.0, %v2307
        %v2309 = vpop.f32.mrb[0].mxu0
        %2310 = vmatprep.mubr.f32.mxu0 %v1632
        %2311 = vmatmul.mubr.f32.gmra.mrb[0].mxu0 %v1631
        %v2312 = vpop.f32.mrb[0].mxu0
        %v2313 = vadd.f32 0.0, %v2312
        %v2314 = vpop.f32.mrb[0].mxu0
        %2315 = vmatprep.mubr.f32.mxu0 %v1636
        %2316 = vmatmul.mubr.f32.gmra.mrb[0].mxu0 %v1635
        %v2317 = vpop.f32.mrb[0].mxu0
        %v2318 = vadd.f32 0.0, %v2317
        %v2319 = vpop.f32.mrb[0].mxu0
        %2320 = vmatprep.mubr.f32.mxu0 %v1640
        %2321 = vmatmul.mubr.f32.gmra.mrb[0].mxu0 %v1639
        %v2322 = vpop.f32.mrb[0].mxu0
        %v2323 = vadd.f32 0.0, %v2322
        %v2324 = vpop.f32.mrb[0].mxu0
        %2325 = vmatprep.mubr.f32.mxu0 %v1644
        %2326 = vmatmul.mubr.f32.gmra.mrb[0].mxu0 %v1643
        %v2327 = vpop.f32.mrb[0].mxu0
        %v2328 = vadd.f32 0.0, %v2327
        %v2329 = vpop.f32.mrb[0].mxu0
        %2330 = vmatprep.mubr.f32.mxu0 %v1648
        %2331 = vmatmul.mubr.f32.gmra.mrb[0].mxu0 %v1647
        %v2332 = vpop.f32.mrb[0].mxu0
        %v2333 = vadd.f32 0.0, %v2332
        %v2334 = vpop.f32.mrb[0].mxu0
        %2335 = vmatprep.mubr.f32.mxu0 %v1652
        %2336 = vmatmul.mubr.f32.gmra.mrb[0].mxu0 %v1651
        %v2337 = vpop.f32.mrb[0].mxu0
        %v2338 = vadd.f32 0.0, %v2337
        %v2339 = vpop.f32.mrb[0].mxu0
        %2340 = vmatprep.mubr.f32.mxu0 %v1656
        %2341 = vmatmul.mubr.f32.gmra.mrb[0].mxu0 %v1655
        %v2342 = vpop.f32.mrb[0].mxu0
        %v2343 = vadd.f32 0.0, %v2342
        %v2344 = vpop.f32.mrb[0].mxu0
        %2345 = vmatprep.mubr.f32.mxu0 %v1660
        %2346 = vmatmul.mubr.f32.gmra.mrb[0].mxu0 %v1659
        %v2347 = vpop.f32.mrb[0].mxu0
        %v2348 = vadd.f32 0.0, %v2347
        %v2349 = vpop.f32.mrb[0].mxu0
        %2350 = vmatprep.mubr.f32.mxu0 %v1664
        %2351 = vmatmul.mubr.f32.gmra.mrb[0].mxu0 %v1663
        %v2352 = vpop.f32.mrb[0].mxu0
        %v2353 = vadd.f32 0.0, %v2352
        %v2354 = vpop.f32.mrb[0].mxu0
        %2355 = vmatprep.mubr.f32.mxu0 %v1668
        %2356 = vmatmul.mubr.f32.gmra.mrb[0].mxu0 %v1667
        %v2357 = vpop.f32.mrb[0].mxu0
        %v2358 = vadd.f32 0.0, %v2357
        %v2359 = vpop.f32.mrb[0].mxu0
        %2360 = vmatprep.mubr.f32.mxu0 %v1672
        %2361 = vmatmul.mubr.f32.gmra.mrb[0].mxu0 %v1671
        %v2362 = vpop.f32.mrb[0].mxu0
        %v2363 = vadd.f32 0.0, %v2362
        %v2364 = vpop.f32.mrb[0].mxu0
        %2365 = vmatprep.mubr.f32.mxu0 %v1676
        %2366 = vmatmul.mubr.f32.gmra.mrb[0].mxu0 %v1675
        %v2367 = vpop.f32.mrb[0].mxu0
        %v2368 = vadd.f32 0.0, %v2367
        %v2369 = vpop.f32.mrb[0].mxu0
        %2370 = vmatprep.mubr.f32.mxu0 %v1680
        %2371 = vmatmul.mubr.f32.gmra.mrb[0].mxu0 %v1679
        %v2372 = vpop.f32.mrb[0].mxu0
        %v2373 = vadd.f32 0.0, %v2372
        %v2374 = vpop.f32.mrb[0].mxu0
        %2375 = vmatprep.mubr.f32.mxu0 %v1684
        %2376 = vmatmul.mubr.f32.gmra.mrb[0].mxu0 %v1683
        %v2377 = vpop.f32.mrb[0].mxu0
        %v2378 = vadd.f32 0.0, %v2377
        %v2379 = vpop.f32.mrb[0].mxu0
        %2380 = vmatprep.mubr.f32.mxu0 %v1688
        %2381 = vmatmul.mubr.f32.gmra.mrb[0].mxu0 %v1687
        %v2382 = vpop.f32.mrb[0].mxu0
        %v2383 = vadd.f32 0.0, %v2382
        %v2384 = vpop.f32.mrb[0].mxu0
        %2385 = vmatprep.mubr.f32.mxu0 %v1692
        %2386 = vmatmul.mubr.f32.gmra.mrb[0].mxu0 %v1691
        %v2387 = vpop.f32.mrb[0].mxu0
        %v2388 = vadd.f32 0.0, %v2387
        %v2389 = vpop.f32.mrb[0].mxu0
        %2390 = vmatprep.mubr.f32.mxu0 %v1696
        %2391 = vmatmul.mubr.f32.gmra.mrb[0].mxu0 %v1695
        %v2392 = vpop.f32.mrb[0].mxu0
        %v2393 = vadd.f32 0.0, %v2392
        %v2394 = vpop.f32.mrb[0].mxu0
        %2395 = vmatprep.mubr.f32.mxu0 %v1700
        %2396 = vmatmul.mubr.f32.gmra.mrb[0].mxu0 %v1699
        %v2397 = vpop.f32.mrb[0].mxu0
        %v2398 = vadd.f32 0.0, %v2397
        %v2399 = vpop.f32.mrb[0].mxu0
        %2400 = vmatprep.mubr.f32.mxu0 %v1704
        %2401 = vmatmul.mubr.f32.gmra.mrb[0].mxu0 %v1703
        %v2402 = vpop.f32.mrb[0].mxu0
        %v2403 = vadd.f32 0.0, %v2402
        %v2404 = vpop.f32.mrb[0].mxu0
        %2405 = vmatprep.mubr.f32.mxu0 %v1708
        %2406 = vmatmul.mubr.f32.gmra.mrb[0].mxu0 %v1707
        %v2407 = vpop.f32.mrb[0].mxu0
        %v2408 = vadd.f32 0.0, %v2407
        %v2409 = vpop.f32.mrb[0].mxu0
        %2410 = vmatprep.mubr.f32.mxu0 %v1712
        %2411 = vmatmul.mubr.f32.gmra.mrb[0].mxu0 %v1711
        %v2412 = vpop.f32.mrb[0].mxu0
        %v2413 = vadd.f32 0.0, %v2412
        %v2414 = vpop.f32.mrb[0].mxu0
        %2415 = vmatprep.mubr.f32.mxu0 %v1716
        %2416 = vmatmul.mubr.f32.gmra.mrb[0].mxu0 %v1715
        %v2417 = vpop.f32.mrb[0].mxu0
        %v2418 = vadd.f32 0.0, %v2417
        %v2419 = vpop.f32.mrb[0].mxu0
        %2420 = vmatprep.mubr.f32.mxu0 %v1720
        %2421 = vmatmul.mubr.f32.gmra.mrb[0].mxu0 %v1719
        %v2422 = vpop.f32.mrb[0].mxu0
        %v2423 = vadd.f32 0.0, %v2422
        %v2424 = vpop.f32.mrb[0].mxu0
        %2425 = vmatprep.mubr.f32.mxu0 %v1724
        %2426 = vmatmul.mubr.f32.gmra.mrb[0].mxu0 %v1723
        %v2427 = vpop.f32.mrb[0].mxu0
        %v2428 = vadd.f32 0.0, %v2427
        %v2429 = vpop.f32.mrb[0].mxu0
        %2430 = vmatprep.mubr.f32.mxu0 %v1728
        %2431 = vmatmul.mubr.f32.gmra.mrb[0].mxu0 %v1727
        %v2432 = vpop.f32.mrb[0].mxu0
        %v2433 = vadd.f32 0.0, %v2432
        %v2434 = vpop.f32.mrb[0].mxu0
        %2435 = vmatprep.mubr.f32.mxu0 %v1732
        %2436 = vmatmul.mubr.f32.gmra.mrb[0].mxu0 %v1731
        %v2437 = vpop.f32.mrb[0].mxu0
        %v2438 = vadd.f32 0.0, %v2437
        %v2439 = vpop.f32.mrb[0].mxu0
        %2440 = vmatprep.mubr.f32.mxu0 %v1736
        %2441 = vmatmul.mubr.f32.gmra.mrb[0].mxu0 %v1735
        %v2442 = vpop.f32.mrb[0].mxu0
        %v2443 = vadd.f32 0.0, %v2442
        %v2444 = vpop.f32.mrb[0].mxu0
        %2445 = vmatprep.mubr.f32.mxu0 %v1740
        %2446 = vmatmul.mubr.f32.gmra.mrb[0].mxu0 %v1739
        %v2447 = vpop.f32.mrb[0].mxu0
        %v2448 = vadd.f32 0.0, %v2447
        %v2449 = vpop.f32.mrb[0].mxu0
        %2450 = vmatprep.mubr.f32.mxu0 %v1744
        %2451 = vmatmul.mubr.f32.gmra.mrb[0].mxu0 %v1743
        %v2452 = vpop.f32.mrb[0].mxu0
        %v2453 = vadd.f32 0.0, %v2452
        %v2454 = vpop.f32.mrb[0].mxu0
        %2455 = vmatprep.mubr.f32.mxu0 %v1748
        %2456 = vmatmul.mubr.f32.gmra.mrb[0].mxu0 %v1747
        %v2457 = vpop.f32.mrb[0].mxu0
        %v2458 = vadd.f32 0.0, %v2457
        %v2459 = vpop.f32.mrb[0].mxu0
        %2460 = vmatprep.mubr.f32.mxu0 %v1752
        %2461 = vmatmul.mubr.f32.gmra.mrb[0].mxu0 %v1751
        %v2462 = vpop.f32.mrb[0].mxu0
        %v2463 = vadd.f32 0.0, %v2462
        %v2464 = vpop.f32.mrb[0].mxu0
        %2465 = vmatprep.mubr.f32.mxu0 %v1756
        %2466 = vmatmul.mubr.f32.gmra.mrb[0].mxu0 %v1755
        %v2467 = vpop.f32.mrb[0].mxu0
        %v2468 = vadd.f32 0.0, %v2467
        %v2469 = vpop.f32.mrb[0].mxu0
        %2470 = vmatprep.mubr.f32.mxu0 %v1760
        %2471 = vmatmul.mubr.f32.gmra.mrb[0].mxu0 %v1759
        %v2472 = vpop.f32.mrb[0].mxu0
        %v2473 = vadd.f32 0.0, %v2472
        %v2474 = vpop.f32.mrb[0].mxu0
        %2475 = vmatprep.mubr.f32.mxu0 %v1764
        %2476 = vmatmul.mubr.f32.gmra.mrb[0].mxu0 %v1763
        %v2477 = vpop.f32.mrb[0].mxu0
        %v2478 = vadd.f32 0.0, %v2477
        %v2479 = vpop.f32.mrb[0].mxu0
        %2480 = vmatprep.mubr.f32.mxu0 %v1768
        %2481 = vmatmul.mubr.f32.gmra.mrb[0].mxu0 %v1767
        %v2482 = vpop.f32.mrb[0].mxu0
        %v2483 = vadd.f32 0.0, %v2482
        %v2484 = vpop.f32.mrb[0].mxu0
        %2485 = vmatprep.mubr.f32.mxu0 %v1772
        %2486 = vmatmul.mubr.f32.gmra.mrb[0].mxu0 %v1771
        %v2487 = vpop.f32.mrb[0].mxu0
        %v2488 = vadd.f32 0.0, %v2487
        %v2489 = vpop.f32.mrb[0].mxu0
        %2490 = vmatprep.mubr.f32.mxu0 %v1776
        %2491 = vmatmul.mubr.f32.gmra.mrb[0].mxu0 %v1775
        %v2492 = vpop.f32.mrb[0].mxu0
        %v2493 = vadd.f32 0.0, %v2492
        %v2494 = vpop.f32.mrb[0].mxu0
        %2495 = vmatprep.mubr.f32.mxu0 %v1780
        %2496 = vmatmul.mubr.f32.gmra.mrb[0].mxu0 %v1779
        %v2497 = vpop.f32.mrb[0].mxu0
        %v2498 = vadd.f32 0.0, %v2497
        %v2499 = vpop.f32.mrb[0].mxu0
        %2500 = vmatprep.mubr.f32.mxu0 %v1784
        %2501 = vmatmul.mubr.f32.gmra.mrb[0].mxu0 %v1783
        %v2502 = vpop.f32.mrb[0].mxu0
        %v2503 = vadd.f32 0.0, %v2502
        %v2504 = vpop.f32.mrb[0].mxu0
        %2505 = vmatprep.mubr.f32.mxu0 %v1788
        %2506 = vmatmul.mubr.f32.gmra.mrb[0].mxu0 %v1787
        %v2507 = vpop.f32.mrb[0].mxu0
        %v2508 = vadd.f32 0.0, %v2507
        %v2509 = vpop.f32.mrb[0].mxu0
        %2510 = vmatprep.mubr.f32.mxu0 %v1792
        %2511 = vmatmul.mubr.f32.gmra.mrb[0].mxu0 %v1791
        %v2512 = vpop.f32.mrb[0].mxu0
        %v2513 = vadd.f32 0.0, %v2512
        %v2514 = vpop.f32.mrb[0].mxu0
        %2515 = vmatprep.mubr.f32.mxu0 %v1796
        %2516 = vmatmul.mubr.f32.gmra.mrb[0].mxu0 %v1795
        %v2517 = vpop.f32.mrb[0].mxu0
        %v2518 = vadd.f32 0.0, %v2517
        %v2519 = vpop.f32.mrb[0].mxu0
        %2520 = vmatprep.mubr.f32.mxu0 %v1800
        %2521 = vmatmul.mubr.f32.gmra.mrb[0].mxu0 %v1799
        %v2522 = vpop.f32.mrb[0].mxu0
        %v2523 = vadd.f32 0.0, %v2522
        %v2524 = vpop.f32.mrb[0].mxu0
        %2525 = vmatprep.mubr.f32.mxu0 %v1804
        %2526 = vmatmul.mubr.f32.gmra.mrb[0].mxu0 %v1803
        %v2527 = vpop.f32.mrb[0].mxu0
        %v2528 = vadd.f32 0.0, %v2527
        %v2529 = vpop.f32.mrb[0].mxu0
        %2530 = vmatprep.mubr.f32.mxu0 %v1808
        %2531 = vmatmul.mubr.f32.gmra.mrb[0].mxu0 %v1807
        %v2532 = vpop.f32.mrb[0].mxu0
        %v2533 = vadd.f32 0.0, %v2532
        %v2534 = vpop.f32.mrb[0].mxu0
        %2535 = vmatprep.mubr.f32.mxu0 %v1812
        %2536 = vmatmul.mubr.f32.gmra.mrb[0].mxu0 %v1811
        %v2537 = vpop.f32.mrb[0].mxu0
        %v2538 = vadd.f32 0.0, %v2537
        %v2539 = vpop.f32.mrb[0].mxu0
        %2540 = vmatprep.mubr.f32.mxu0 %v1816
        %2541 = vmatmul.mubr.f32.gmra.mrb[0].mxu0 %v1815
        %v2542 = vpop.f32.mrb[0].mxu0
        %v2543 = vadd.f32 0.0, %v2542
        %v2544 = vpop.f32.mrb[0].mxu0
        %2545 = vmatprep.mubr.f32.mxu0 %v1820
        %2546 = vmatmul.mubr.f32.gmra.mrb[0].mxu0 %v1819
        %v2547 = vpop.f32.mrb[0].mxu0
        %v2548 = vadd.f32 0.0, %v2547
        %v2549 = vpop.f32.mrb[0].mxu0
        %2550 = vmatprep.mubr.f32.mxu0 %v1824
        %2551 = vmatmul.mubr.f32.gmra.mrb[0].mxu0 %v1823
        %v2552 = vpop.f32.mrb[0].mxu0
        %v2553 = vadd.f32 0.0, %v2552
        %v2554 = vpop.f32.mrb[0].mxu0
        %2555 = vmatprep.mubr.f32.mxu0 %v1828
        %2556 = vmatmul.mubr.f32.gmra.mrb[0].mxu0 %v1827
        %v2557 = vpop.f32.mrb[0].mxu0
        %v2558 = vadd.f32 0.0, %v2557
        %v2559 = vpop.f32.mrb[0].mxu0
        %2560 = vmatprep.mubr.f32.mxu0 %v1832
        %2561 = vmatmul.mubr.f32.gmra.mrb[0].mxu0 %v1831
        %v2562 = vpop.f32.mrb[0].mxu0
        %v2563 = vadd.f32 0.0, %v2562
        %v2564 = vpop.f32.mrb[0].mxu0
        %2565 = vmatprep.mubr.f32.mxu0 %v1836
        %2566 = vmatmul.mubr.f32.gmra.mrb[0].mxu0 %v1835
        %v2567 = vpop.f32.mrb[0].mxu0
        %v2568 = vadd.f32 0.0, %v2567
        %v2569 = vpop.f32.mrb[0].mxu0
        %2570 = vmatprep.mubr.f32.mxu0 %v1840
        %2571 = vmatmul.mubr.f32.gmra.mrb[0].mxu0 %v1839
        %v2572 = vpop.f32.mrb[0].mxu0
        %v2573 = vadd.f32 0.0, %v2572
        %v2574 = vpop.f32.mrb[0].mxu0
        %2575 = vmatprep.mubr.f32.mxu0 %v1844
        %2576 = vmatmul.mubr.f32.gmra.mrb[0].mxu0 %v1843
        %v2577 = vpop.f32.mrb[0].mxu0
        %v2578 = vadd.f32 0.0, %v2577
        %v2579 = vpop.f32.mrb[0].mxu0
        %2580 = vmatprep.mubr.f32.mxu0 %v1848
        %2581 = vmatmul.mubr.f32.gmra.mrb[0].mxu0 %v1847
        %v2582 = vpop.f32.mrb[0].mxu0
        %v2583 = vadd.f32 0.0, %v2582
        %v2584 = vpop.f32.mrb[0].mxu0
        %2585 = vmatprep.mubr.f32.mxu0 %v1852
        %2586 = vmatmul.mubr.f32.gmra.mrb[0].mxu0 %v1851
        %v2587 = vpop.f32.mrb[0].mxu0
        %v2588 = vadd.f32 0.0, %v2587
        %v2589 = vpop.f32.mrb[0].mxu0
        %2590 = vmatprep.mubr.f32.mxu0 %v1856
        %2591 = vmatmul.mubr.f32.gmra.mrb[0].mxu0 %v1855
        %v2592 = vpop.f32.mrb[0].mxu0
        %v2593 = vadd.f32 0.0, %v2592
        %v2594 = vpop.f32.mrb[0].mxu0
        %2595 = vmatprep.mubr.f32.mxu0 %v1860
        %2596 = vmatmul.mubr.f32.gmra.mrb[0].mxu0 %v1859
        %v2597 = vpop.f32.mrb[0].mxu0
        %v2598 = vadd.f32 0.0, %v2597
        %v2599 = vpop.f32.mrb[0].mxu0
        %2600 = vmatprep.mubr.f32.mxu0 %v1864
        %2601 = vmatmul.mubr.f32.gmra.mrb[0].mxu0 %v1863
        %v2602 = vpop.f32.mrb[0].mxu0
        %v2603 = vadd.f32 0.0, %v2602
        %v2604 = vpop.f32.mrb[0].mxu0
        %2605 = vmatprep.mubr.f32.mxu0 %v1868
        %2606 = vmatmul.mubr.f32.gmra.mrb[0].mxu0 %v1867
        %v2607 = vpop.f32.mrb[0].mxu0
        %v2608 = vadd.f32 0.0, %v2607
        %v2609 = vpop.f32.mrb[0].mxu0
        %2610 = vmatprep.mubr.f32.mxu0 %v1872
        %2611 = vmatmul.mubr.f32.gmra.mrb[0].mxu0 %v1871
        %v2612 = vpop.f32.mrb[0].mxu0
        %v2613 = vadd.f32 0.0, %v2612
        %v2614 = vpop.f32.mrb[0].mxu0
        %2615 = vmatprep.mubr.f32.mxu0 %v1876
        %2616 = vmatmul.mubr.f32.gmra.mrb[0].mxu0 %v1875
        %v2617 = vpop.f32.mrb[0].mxu0
        %v2618 = vadd.f32 0.0, %v2617
        %v2619 = vpop.f32.mrb[0].mxu0
        %2620 = vmatprep.mubr.f32.mxu0 %v1880
        %2621 = vmatmul.mubr.f32.gmra.mrb[0].mxu0 %v1879
        %v2622 = vpop.f32.mrb[0].mxu0
        %v2623 = vadd.f32 0.0, %v2622
        %v2624 = vpop.f32.mrb[0].mxu0
        %2625 = vmatprep.mubr.f32.mxu0 %v1884
        %2626 = vmatmul.mubr.f32.gmra.mrb[0].mxu0 %v1883
        %v2627 = vpop.f32.mrb[0].mxu0
        %v2628 = vadd.f32 0.0, %v2627
        %v2629 = vpop.f32.mrb[0].mxu0
        %2630 = vmatprep.mubr.f32.mxu0 %v1888
        %2631 = vmatmul.mubr.f32.gmra.mrb[0].mxu0 %v1887
        %v2632 = vpop.f32.mrb[0].mxu0
        %v2633 = vadd.f32 0.0, %v2632
        %v2634 = vpop.f32.mrb[0].mxu0
        %2635 = vmatprep.mubr.f32.mxu0 %v1892
        %2636 = vmatmul.mubr.f32.gmra.mrb[0].mxu0 %v1891
        %v2637 = vpop.f32.mrb[0].mxu0
        %v2638 = vadd.f32 0.0, %v2637
        %v2639 = vpop.f32.mrb[0].mxu0
        %2640 = vmatprep.mubr.f32.mxu0 %v1896
        %2641 = vmatmul.mubr.f32.gmra.mrb[0].mxu0 %v1895
        %v2642 = vpop.f32.mrb[0].mxu0
        %v2643 = vadd.f32 0.0, %v2642
        %v2644 = vpop.f32.mrb[0].mxu0
        %2645 = vmatprep.mubr.f32.mxu0 %v1900
        %2646 = vmatmul.mubr.f32.gmra.mrb[0].mxu0 %v1899
        %v2647 = vpop.f32.mrb[0].mxu0
        %v2648 = vadd.f32 0.0, %v2647
        %v2649 = vpop.f32.mrb[0].mxu0
        %2650 = vmatprep.mubr.f32.mxu0 %v1904
        %2651 = vmatmul.mubr.f32.gmra.mrb[0].mxu0 %v1903
        %v2652 = vpop.f32.mrb[0].mxu0
        %v2653 = vadd.f32 0.0, %v2652
        %v2654 = vpop.f32.mrb[0].mxu0
        %2655 = vmatprep.mubr.f32.mxu0 %v1908
        %2656 = vmatmul.mubr.f32.gmra.mrb[0].mxu0 %v1907
        %v2657 = vpop.f32.mrb[0].mxu0
        %v2658 = vadd.f32 0.0, %v2657
        %v2659 = vpop.f32.mrb[0].mxu0
        %2660 = vmatprep.mubr.f32.mxu0 %v1912
        %2661 = vmatmul.mubr.f32.gmra.mrb[0].mxu0 %v1911
        %v2662 = vpop.f32.mrb[0].mxu0
        %v2663 = vadd.f32 0.0, %v2662
        %v2664 = vpop.f32.mrb[0].mxu0
        %2665 = vmatprep.mubr.f32.mxu0 %v1916
        %2666 = vmatmul.mubr.f32.gmra.mrb[0].mxu0 %v1915
        %v2667 = vpop.f32.mrb[0].mxu0
        %v2668 = vadd.f32 0.0, %v2667
        %v2669 = vpop.f32.mrb[0].mxu0
        %2670 = vmatprep.mubr.f32.mxu0 %v1920
        %2671 = vmatmul.mubr.f32.gmra.mrb[0].mxu0 %v1919
        %v2672 = vpop.f32.mrb[0].mxu0
        %v2673 = vadd.f32 0.0, %v2672
        %v2674 = vpop.f32.mrb[0].mxu0
        %2675 = vmatprep.mubr.f32.mxu0 %v1924
        %2676 = vmatmul.mubr.f32.gmra.mrb[0].mxu0 %v1923
        %v2677 = vpop.f32.mrb[0].mxu0
        %v2678 = vadd.f32 0.0, %v2677
        %v2679 = vpop.f32.mrb[0].mxu0
        %2680 = vmatprep.mubr.f32.mxu0 %v1928
        %2681 = vmatmul.mubr.f32.gmra.mrb[0].mxu0 %v1927
        %v2682 = vpop.f32.mrb[0].mxu0
        %v2683 = vadd.f32 0.0, %v2682
        %v2684 = vpop.f32.mrb[0].mxu0
        %2685 = vmatprep.mubr.f32.mxu0 %v1932
        %2686 = vmatmul.mubr.f32.gmra.mrb[0].mxu0 %v1931
        %v2687 = vpop.f32.mrb[0].mxu0
        %v2688 = vadd.f32 0.0, %v2687
        %v2689 = vpop.f32.mrb[0].mxu0
        %2690 = vmatprep.mubr.f32.mxu0 %v1936
        %2691 = vmatmul.mubr.f32.gmra.mrb[0].mxu0 %v1935
        %v2692 = vpop.f32.mrb[0].mxu0
        %v2693 = vadd.f32 0.0, %v2692
        %v2694 = vpop.f32.mrb[0].mxu0
        %2695 = vmatprep.mubr.f32.mxu0 %v1940
        %2696 = vmatmul.mubr.f32.gmra.mrb[0].mxu0 %v1939
        %v2697 = vpop.f32.mrb[0].mxu0
        %v2698 = vadd.f32 0.0, %v2697
        %v2699 = vpop.f32.mrb[0].mxu0
        %2700 = vmatprep.mubr.f32.mxu0 %v1944
        %2701 = vmatmul.mubr.f32.gmra.mrb[0].mxu0 %v1943
        %v2702 = vpop.f32.mrb[0].mxu0
        %v2703 = vadd.f32 0.0, %v2702
        %v2704 = vpop.f32.mrb[0].mxu0
        %2705 = vmatprep.mubr.f32.mxu0 %v1948
        %2706 = vmatmul.mubr.f32.gmra.mrb[0].mxu0 %v1947
        %v2707 = vpop.f32.mrb[0].mxu0
        %v2708 = vadd.f32 0.0, %v2707
        %v2709 = vpop.f32.mrb[0].mxu0
        %2710 = vmatprep.mubr.f32.mxu0 %v1952
        %2711 = vmatmul.mubr.f32.gmra.mrb[0].mxu0 %v1951
        %v2712 = vpop.f32.mrb[0].mxu0
        %v2713 = vadd.f32 0.0, %v2712
        %v2714 = vpop.f32.mrb[0].mxu0
        %2715 = vmatprep.mubr.f32.mxu0 %v1956
        %2716 = vmatmul.mubr.f32.gmra.mrb[0].mxu0 %v1955
        %v2717 = vpop.f32.mrb[0].mxu0
        %v2718 = vadd.f32 0.0, %v2717
        %v2719 = vpop.f32.mrb[0].mxu0
        %2720 = vmatprep.mubr.f32.mxu0 %v1960
        %2721 = vmatmul.mubr.f32.gmra.mrb[0].mxu0 %v1959
        %v2722 = vpop.f32.mrb[0].mxu0
        %v2723 = vadd.f32 0.0, %v2722
        %v2724 = vpop.f32.mrb[0].mxu0
        %2725 = vmatprep.mubr.f32.mxu0 %v1964
        %2726 = vmatmul.mubr.f32.gmra.mrb[0].mxu0 %v1963
        %v2727 = vpop.f32.mrb[0].mxu0
        %v2728 = vadd.f32 0.0, %v2727
        %v2729 = vpop.f32.mrb[0].mxu0
        %2730 = vmatprep.mubr.f32.mxu0 %v1968
        %2731 = vmatmul.mubr.f32.gmra.mrb[0].mxu0 %v1967
        %v2732 = vpop.f32.mrb[0].mxu0
        %v2733 = vadd.f32 0.0, %v2732
        %v2734 = vpop.f32.mrb[0].mxu0
        %2735 = vmatprep.mubr.f32.mxu0 %v1972
        %2736 = vmatmul.mubr.f32.gmra.mrb[0].mxu0 %v1971
        %v2737 = vpop.f32.mrb[0].mxu0
        %v2738 = vadd.f32 0.0, %v2737
        %v2739 = vpop.f32.mrb[0].mxu0
        %2740 = vmatprep.mubr.f32.mxu0 %v1976
        %2741 = vmatmul.mubr.f32.gmra.mrb[0].mxu0 %v1975
        %v2742 = vpop.f32.mrb[0].mxu0
        %v2743 = vadd.f32 0.0, %v2742
        %v2744 = vpop.f32.mrb[0].mxu0
        %2745 = vmatprep.mubr.f32.mxu0 %v1980
        %2746 = vmatmul.mubr.f32.gmra.mrb[0].mxu0 %v1979
        %v2747 = vpop.f32.mrb[0].mxu0
        %v2748 = vadd.f32 0.0, %v2747
        %v2749 = vpop.f32.mrb[0].mxu0
        %2750 = vmatprep.mubr.f32.mxu0 %v1984
        %2751 = vmatmul.mubr.f32.gmra.mrb[0].mxu0 %v1983
        %v2752 = vpop.f32.mrb[0].mxu0
        %v2753 = vadd.f32 0.0, %v2752
        %v2754 = vpop.f32.mrb[0].mxu0
        %2755 = vmatprep.mubr.f32.mxu0 %v1988
        %2756 = vmatmul.mubr.f32.gmra.mrb[0].mxu0 %v1987
        %v2757 = vpop.f32.mrb[0].mxu0
        %v2758 = vadd.f32 0.0, %v2757
        %v2759 = vpop.f32.mrb[0].mxu0
        %2760 = vmatprep.mubr.f32.mxu0 %v1992
        %2761 = vmatmul.mubr.f32.gmra.mrb[0].mxu0 %v1991
        %v2762 = vpop.f32.mrb[0].mxu0
        %v2763 = vadd.f32 0.0, %v2762
        %v2764 = vpop.f32.mrb[0].mxu0
        %2765 = vmatprep.mubr.f32.mxu0 %v1996
        %2766 = vmatmul.mubr.f32.gmra.mrb[0].mxu0 %v1995
        %v2767 = vpop.f32.mrb[0].mxu0
        %v2768 = vadd.f32 0.0, %v2767
        %v2769 = vpop.f32.mrb[0].mxu0
        %2770 = vmatprep.mubr.f32.mxu0 %v2000
        %2771 = vmatmul.mubr.f32.gmra.mrb[0].mxu0 %v1999
        %v2772 = vpop.f32.mrb[0].mxu0
        %v2773 = vadd.f32 0.0, %v2772
        %v2774 = vpop.f32.mrb[0].mxu0
        %2775 = vmatprep.mubr.f32.mxu0 %v2004
        %2776 = vmatmul.mubr.f32.gmra.mrb[0].mxu0 %v2003
        %v2777 = vpop.f32.mrb[0].mxu0
        %v2778 = vadd.f32 0.0, %v2777
        %v2779 = vpop.f32.mrb[0].mxu0
        %2780 = vmatprep.mubr.f32.mxu0 %v2008
        %2781 = vmatmul.mubr.f32.gmra.mrb[0].mxu0 %v2007
        %v2782 = vpop.f32.mrb[0].mxu0
        %v2783 = vadd.f32 0.0, %v2782
        %v2784 = vpop.f32.mrb[0].mxu0
        %2785 = vmatprep.mubr.f32.mxu0 %v2012
        %2786 = vmatmul.mubr.f32.gmra.mrb[0].mxu0 %v2011
        %v2787 = vpop.f32.mrb[0].mxu0
        %v2788 = vadd.f32 0.0, %v2787
        %v2789 = vpop.f32.mrb[0].mxu0
        %2790 = vmatprep.mubr.f32.mxu0 %v2016
        %2791 = vmatmul.mubr.f32.gmra.mrb[0].mxu0 %v2015
        %v2792 = vpop.f32.mrb[0].mxu0
        %v2793 = vadd.f32 0.0, %v2792
        %v2794 = vpop.f32.mrb[0].mxu0
        %2795 = vmatprep.mubr.f32.mxu0 %v2020
        %2796 = vmatmul.mubr.f32.gmra.mrb[0].mxu0 %v2019
        %v2797 = vpop.f32.mrb[0].mxu0
        %v2798 = vadd.f32 0.0, %v2797
        %v2799 = vpop.f32.mrb[0].mxu0
        %2800 = vmatprep.mubr.f32.mxu0 %v2024
        %2801 = vmatmul.mubr.f32.gmra.mrb[0].mxu0 %v2023
        %v2802 = vpop.f32.mrb[0].mxu0
        %v2803 = vadd.f32 0.0, %v2802
        %v2804 = vpop.f32.mrb[0].mxu0
        %2805 = vmatprep.mubr.f32.mxu0 %v2028
        %2806 = vmatmul.mubr.f32.gmra.mrb[0].mxu0 %v2027
        %v2807 = vpop.f32.mrb[0].mxu0
        %v2808 = vadd.f32 0.0, %v2807
        %v2809 = vpop.f32.mrb[0].mxu0
        %2810 = vmatprep.mubr.f32.mxu0 %v2032
        %2811 = vmatmul.mubr.f32.gmra.mrb[0].mxu0 %v2031
        %v2812 = vpop.f32.mrb[0].mxu0
        %v2813 = vadd.f32 0.0, %v2812
        %v2814 = vpop.f32.mrb[0].mxu0
        %2815 = vmatprep.mubr.f32.mxu0 %v2036
        %2816 = vmatmul.mubr.f32.gmra.mrb[0].mxu0 %v2035
        %v2817 = vpop.f32.mrb[0].mxu0
        %v2818 = vadd.f32 0.0, %v2817
        %v2819 = vpop.f32.mrb[0].mxu0
        %2820 = vmatprep.mubr.f32.mxu0 %v2040
        %2821 = vmatmul.mubr.f32.gmra.mrb[0].mxu0 %v2039
        %v2822 = vpop.f32.mrb[0].mxu0
        %v2823 = vadd.f32 0.0, %v2822
        %v2824 = vpop.f32.mrb[0].mxu0
        %2825 = vmatprep.mubr.f32.mxu0 %v2044
        %2826 = vmatmul.mubr.f32.gmra.mrb[0].mxu0 %v2043
        %v2827 = vpop.f32.mrb[0].mxu0
        %v2828 = vadd.f32 0.0, %v2827
        %v2829 = vpop.f32.mrb[0].mxu0
        %2830 = vmatprep.mubr.f32.mxu0 %v2048
        %2831 = vmatmul.mubr.f32.gmra.mrb[0].mxu0 %v2047
        %v2832 = vpop.f32.mrb[0].mxu0
        %v2833 = vadd.f32 0.0, %v2832
        %v2834 = vpop.f32.mrb[0].mxu0
        %2835 = vdwg.mxu0
        %2836 = vmatprep.subr.mxu0 0.0
        %2837 = vmatpush1.msra.mxu0 %v1443
        %2838 = vmatprep.subr.mxu0 0.0
        %2839 = vmatpush1.msra.mxu0 %v1444
        %2840 = vmatprep.subr.mxu0 0.0
        %2841 = vmatpush1.msra.mxu0 %v1445
        %2842 = vmatprep.subr.mxu0 0.0
        %2843 = vmatpush1.msra.mxu0 %v1446
        %2844 = vmatprep.subr.mxu0 0.0
        %2845 = vmatpush1.msra.mxu0 %v1447
        %2846 = vmatprep.subr.mxu0 0.0
        %2847 = vmatpush1.msra.mxu0 %v1448
        %2848 = vmatprep.subr.mxu0 0.0
        %2849 = vmatpush1.msra.mxu0 %v1449
        %2850 = vmatprep.subr.mxu0 0.0
        %2851 = vmatpush1.msra.mxu0 %v1450
        %2852 = vmatprep.subr.mxu0 0.0
        %2853 = vmatpush1.msra.mxu0 %v1451
        %2854 = vmatprep.subr.mxu0 0.0
        %2855 = vmatpush1.msra.mxu0 %v1452
        %2856 = vmatprep.subr.mxu0 0.0
        %2857 = vmatpush1.msra.mxu0 %v1453
        %2858 = vmatprep.subr.mxu0 0.0
        %2859 = vmatpush1.msra.mxu0 %v1454
        %2860 = vmatprep.subr.mxu0 0.0
        %2861 = vmatpush1.msra.mxu0 %v1455
        %2862 = vmatprep.subr.mxu0 0.0
        %2863 = vmatpush1.msra.mxu0 %v1456
        %2864 = vmatprep.subr.mxu0 0.0
        %2865 = vmatpush1.msra.mxu0 %v1457
        %2866 = vmatprep.subr.mxu0 0.0
        %2867 = vmatpush1.msra.mxu0 %v1458
        %2868 = vmatprep.subr.mxu0 0.0
        %2869 = vmatpush1.msra.mxu0 %v1459
        %2870 = vmatprep.subr.mxu0 0.0
        %2871 = vmatpush1.msra.mxu0 %v1460
        %2872 = vmatprep.subr.mxu0 0.0
        %2873 = vmatpush1.msra.mxu0 %v1461
        %2874 = vmatprep.subr.mxu0 0.0
        %2875 = vmatpush1.msra.mxu0 %v1462
        %2876 = vmatprep.subr.mxu0 0.0
        %2877 = vmatpush1.msra.mxu0 %v1463
        %2878 = vmatprep.subr.mxu0 0.0
        %2879 = vmatpush1.msra.mxu0 %v1464
        %2880 = vmatprep.subr.mxu0 0.0
        %2881 = vmatpush1.msra.mxu0 %v1465
        %2882 = vmatprep.subr.mxu0 0.0
        %2883 = vmatpush1.msra.mxu0 %v1466
        %2884 = vmatprep.subr.mxu0 0.0
        %2885 = vmatpush1.msra.mxu0 %v1467
        %2886 = vmatprep.subr.mxu0 0.0
        %2887 = vmatpush1.msra.mxu0 %v1468
        %2888 = vmatprep.subr.mxu0 0.0
        %2889 = vmatpush1.msra.mxu0 %v1469
        %2890 = vmatprep.subr.mxu0 0.0
        %2891 = vmatpush1.msra.mxu0 %v1470
        %2892 = vmatprep.subr.mxu0 0.0
        %2893 = vmatpush1.msra.mxu0 %v1471
        %2894 = vmatprep.subr.mxu0 0.0
        %2895 = vmatpush1.msra.mxu0 %v1472
        %2896 = vmatprep.subr.mxu0 0.0
        %2897 = vmatpush1.msra.mxu0 %v1473
        %2898 = vmatprep.subr.mxu0 0.0
        %2899 = vmatpush1.msra.mxu0 %v1474
        %2900 = vmatprep.mubr.f32.mxu0 %v1478
        %2901 = vmatmul.mubr.f32.gmra.mrb[0].mxu0 %v1477
        %v2902 = vpop.f32.mrb[0].mxu0
        %v2903 = vadd.f32 %v2118, %v2902
        %v2904 = vpop.f32.mrb[0].mxu0
        %2905 = vmatprep.mubr.f32.mxu0 %v1482
        %2906 = vmatmul.mubr.f32.gmra.mrb[0].mxu0 %v1481
        %v2907 = vpop.f32.mrb[0].mxu0
        %v2908 = vadd.f32 %v2123, %v2907
        %v2909 = vpop.f32.mrb[0].mxu0
        %2910 = vmatprep.mubr.f32.mxu0 %v1486
        %2911 = vmatmul.mubr.f32.gmra.mrb[0].mxu0 %v1485
        %v2912 = vpop.f32.mrb[0].mxu0
        %v2913 = vadd.f32 %v2128, %v2912
        %v2914 = vpop.f32.mrb[0].mxu0
        %2915 = vmatprep.mubr.f32.mxu0 %v1490
        %2916 = vmatmul.mubr.f32.gmra.mrb[0].mxu0 %v1489
        %v2917 = vpop.f32.mrb[0].mxu0
        %v2918 = vadd.f32 %v2133, %v2917
        %v2919 = vpop.f32.mrb[0].mxu0
        %2920 = vmatprep.mubr.f32.mxu0 %v1494
        %2921 = vmatmul.mubr.f32.gmra.mrb[0].mxu0 %v1493
        %v2922 = vpop.f32.mrb[0].mxu0
        %v2923 = vadd.f32 %v2138, %v2922
        %v2924 = vpop.f32.mrb[0].mxu0
        %2925 = vmatprep.mubr.f32.mxu0 %v1498
        %2926 = vmatmul.mubr.f32.gmra.mrb[0].mxu0 %v1497
        %v2927 = vpop.f32.mrb[0].mxu0
        %v2928 = vadd.f32 %v2143, %v2927
        %v2929 = vpop.f32.mrb[0].mxu0
        %2930 = vmatprep.mubr.f32.mxu0 %v1502
        %2931 = vmatmul.mubr.f32.gmra.mrb[0].mxu0 %v1501
        %v2932 = vpop.f32.mrb[0].mxu0
        %v2933 = vadd.f32 %v2148, %v2932
        %v2934 = vpop.f32.mrb[0].mxu0
        %2935 = vmatprep.mubr.f32.mxu0 %v1506
        %2936 = vmatmul.mubr.f32.gmra.mrb[0].mxu0 %v1505
        %v2937 = vpop.f32.mrb[0].mxu0
        %v2938 = vadd.f32 %v2153, %v2937
        %v2939 = vpop.f32.mrb[0].mxu0
        %2940 = vmatprep.mubr.f32.mxu0 %v1510
        %2941 = vmatmul.mubr.f32.gmra.mrb[0].mxu0 %v1509
        %v2942 = vpop.f32.mrb[0].mxu0
        %v2943 = vadd.f32 %v2158, %v2942
        %v2944 = vpop.f32.mrb[0].mxu0
        %2945 = vmatprep.mubr.f32.mxu0 %v1514
        %2946 = vmatmul.mubr.f32.gmra.mrb[0].mxu0 %v1513
        %v2947 = vpop.f32.mrb[0].mxu0
        %v2948 = vadd.f32 %v2163, %v2947
        %v2949 = vpop.f32.mrb[0].mxu0
        %2950 = vmatprep.mubr.f32.mxu0 %v1518
        %2951 = vmatmul.mubr.f32.gmra.mrb[0].mxu0 %v1517
        %v2952 = vpop.f32.mrb[0].mxu0
        %v2953 = vadd.f32 %v2168, %v2952
        %v2954 = vpop.f32.mrb[0].mxu0
        %2955 = vmatprep.mubr.f32.mxu0 %v1522
        %2956 = vmatmul.mubr.f32.gmra.mrb[0].mxu0 %v1521
        %v2957 = vpop.f32.mrb[0].mxu0
        %v2958 = vadd.f32 %v2173, %v2957
        %v2959 = vpop.f32.mrb[0].mxu0
        %2960 = vmatprep.mubr.f32.mxu0 %v1526
        %2961 = vmatmul.mubr.f32.gmra.mrb[0].mxu0 %v1525
        %v2962 = vpop.f32.mrb[0].mxu0
        %v2963 = vadd.f32 %v2178, %v2962
        %v2964 = vpop.f32.mrb[0].mxu0
        %2965 = vmatprep.mubr.f32.mxu0 %v1530
        %2966 = vmatmul.mubr.f32.gmra.mrb[0].mxu0 %v1529
        %v2967 = vpop.f32.mrb[0].mxu0
        %v2968 = vadd.f32 %v2183, %v2967
        %v2969 = vpop.f32.mrb[0].mxu0
        %2970 = vmatprep.mubr.f32.mxu0 %v1534
        %2971 = vmatmul.mubr.f32.gmra.mrb[0].mxu0 %v1533
        %v2972 = vpop.f32.mrb[0].mxu0
        %v2973 = vadd.f32 %v2188, %v2972
        %v2974 = vpop.f32.mrb[0].mxu0
        %2975 = vmatprep.mubr.f32.mxu0 %v1538
        %2976 = vmatmul.mubr.f32.gmra.mrb[0].mxu0 %v1537
        %v2977 = vpop.f32.mrb[0].mxu0
        %v2978 = vadd.f32 %v2193, %v2977
        %v2979 = vpop.f32.mrb[0].mxu0
        %2980 = vmatprep.mubr.f32.mxu0 %v1542
        %2981 = vmatmul.mubr.f32.gmra.mrb[0].mxu0 %v1541
        %v2982 = vpop.f32.mrb[0].mxu0
        %v2983 = vadd.f32 %v2198, %v2982
        %v2984 = vpop.f32.mrb[0].mxu0
        %2985 = vmatprep.mubr.f32.mxu0 %v1546
        %2986 = vmatmul.mubr.f32.gmra.mrb[0].mxu0 %v1545
        %v2987 = vpop.f32.mrb[0].mxu0
        %v2988 = vadd.f32 %v2203, %v2987
        %v2989 = vpop.f32.mrb[0].mxu0
        %2990 = vmatprep.mubr.f32.mxu0 %v1550
        %2991 = vmatmul.mubr.f32.gmra.mrb[0].mxu0 %v1549
        %v2992 = vpop.f32.mrb[0].mxu0
        %v2993 = vadd.f32 %v2208, %v2992
        %v2994 = vpop.f32.mrb[0].mxu0
        %2995 = vmatprep.mubr.f32.mxu0 %v1554
        %2996 = vmatmul.mubr.f32.gmra.mrb[0].mxu0 %v1553
        %v2997 = vpop.f32.mrb[0].mxu0
        %v2998 = vadd.f32 %v2213, %v2997
        %v2999 = vpop.f32.mrb[0].mxu0
        %3000 = vmatprep.mubr.f32.mxu0 %v1558
        %3001 = vmatmul.mubr.f32.gmra.mrb[0].mxu0 %v1557
        %v3002 = vpop.f32.mrb[0].mxu0
        %v3003 = vadd.f32 %v2218, %v3002
        %v3004 = vpop.f32.mrb[0].mxu0
        %3005 = vmatprep.mubr.f32.mxu0 %v1562
        %3006 = vmatmul.mubr.f32.gmra.mrb[0].mxu0 %v1561
        %v3007 = vpop.f32.mrb[0].mxu0
        %v3008 = vadd.f32 %v2223, %v3007
        %v3009 = vpop.f32.mrb[0].mxu0
        %3010 = vmatprep.mubr.f32.mxu0 %v1566
        %3011 = vmatmul.mubr.f32.gmra.mrb[0].mxu0 %v1565
        %v3012 = vpop.f32.mrb[0].mxu0
        %v3013 = vadd.f32 %v2228, %v3012
        %v3014 = vpop.f32.mrb[0].mxu0
        %3015 = vmatprep.mubr.f32.mxu0 %v1570
        %3016 = vmatmul.mubr.f32.gmra.mrb[0].mxu0 %v1569
        %v3017 = vpop.f32.mrb[0].mxu0
        %v3018 = vadd.f32 %v2233, %v3017
        %v3019 = vpop.f32.mrb[0].mxu0
        %3020 = vmatprep.mubr.f32.mxu0 %v1574
        %3021 = vmatmul.mubr.f32.gmra.mrb[0].mxu0 %v1573
        %v3022 = vpop.f32.mrb[0].mxu0
        %v3023 = vadd.f32 %v2238, %v3022
        %v3024 = vpop.f32.mrb[0].mxu0
        %3025 = vmatprep.mubr.f32.mxu0 %v1578
        %3026 = vmatmul.mubr.f32.gmra.mrb[0].mxu0 %v1577
        %v3027 = vpop.f32.mrb[0].mxu0
        %v3028 = vadd.f32 %v2243, %v3027
        %v3029 = vpop.f32.mrb[0].mxu0
        %3030 = vmatprep.mubr.f32.mxu0 %v1582
        %3031 = vmatmul.mubr.f32.gmra.mrb[0].mxu0 %v1581
        %v3032 = vpop.f32.mrb[0].mxu0
        %v3033 = vadd.f32 %v2248, %v3032
        %v3034 = vpop.f32.mrb[0].mxu0
        %3035 = vmatprep.mubr.f32.mxu0 %v1586
        %3036 = vmatmul.mubr.f32.gmra.mrb[0].mxu0 %v1585
        %v3037 = vpop.f32.mrb[0].mxu0
        %v3038 = vadd.f32 %v2253, %v3037
        %v3039 = vpop.f32.mrb[0].mxu0
        %3040 = vmatprep.mubr.f32.mxu0 %v1590
        %3041 = vmatmul.mubr.f32.gmra.mrb[0].mxu0 %v1589
        %v3042 = vpop.f32.mrb[0].mxu0
        %v3043 = vadd.f32 %v2258, %v3042
        %v3044 = vpop.f32.mrb[0].mxu0
        %3045 = vmatprep.mubr.f32.mxu0 %v1594
        %3046 = vmatmul.mubr.f32.gmra.mrb[0].mxu0 %v1593
        %v3047 = vpop.f32.mrb[0].mxu0
        %v3048 = vadd.f32 %v2263, %v3047
        %v3049 = vpop.f32.mrb[0].mxu0
        %3050 = vmatprep.mubr.f32.mxu0 %v1598
        %3051 = vmatmul.mubr.f32.gmra.mrb[0].mxu0 %v1597
        %v3052 = vpop.f32.mrb[0].mxu0
        %v3053 = vadd.f32 %v2268, %v3052
        %v3054 = vpop.f32.mrb[0].mxu0
        %3055 = vmatprep.mubr.f32.mxu0 %v1602
        %3056 = vmatmul.mubr.f32.gmra.mrb[0].mxu0 %v1601
        %v3057 = vpop.f32.mrb[0].mxu0
        %v3058 = vadd.f32 %v2273, %v3057
        %v3059 = vpop.f32.mrb[0].mxu0
        %3060 = vmatprep.mubr.f32.mxu0 %v1606
        %3061 = vmatmul.mubr.f32.gmra.mrb[0].mxu0 %v1605
        %v3062 = vpop.f32.mrb[0].mxu0
        %v3063 = vadd.f32 %v2278, %v3062
        %v3064 = vpop.f32.mrb[0].mxu0
        %3065 = vmatprep.mubr.f32.mxu0 %v1610
        %3066 = vmatmul.mubr.f32.gmra.mrb[0].mxu0 %v1609
        %v3067 = vpop.f32.mrb[0].mxu0
        %v3068 = vadd.f32 %v2283, %v3067
        %v3069 = vpop.f32.mrb[0].mxu0
        %3070 = vmatprep.mubr.f32.mxu0 %v1614
        %3071 = vmatmul.mubr.f32.gmra.mrb[0].mxu0 %v1613
        %v3072 = vpop.f32.mrb[0].mxu0
        %v3073 = vadd.f32 %v2288, %v3072
        %v3074 = vpop.f32.mrb[0].mxu0
        %3075 = vmatprep.mubr.f32.mxu0 %v1618
        %3076 = vmatmul.mubr.f32.gmra.mrb[0].mxu0 %v1617
        %v3077 = vpop.f32.mrb[0].mxu0
        %v3078 = vadd.f32 %v2293, %v3077
        %v3079 = vpop.f32.mrb[0].mxu0
        %3080 = vmatprep.mubr.f32.mxu0 %v1622
        %3081 = vmatmul.mubr.f32.gmra.mrb[0].mxu0 %v1621
        %v3082 = vpop.f32.mrb[0].mxu0
        %v3083 = vadd.f32 %v2298, %v3082
        %v3084 = vpop.f32.mrb[0].mxu0
        %3085 = vmatprep.mubr.f32.mxu0 %v1626
        %3086 = vmatmul.mubr.f32.gmra.mrb[0].mxu0 %v1625
        %v3087 = vpop.f32.mrb[0].mxu0
        %v3088 = vadd.f32 %v2303, %v3087
        %v3089 = vpop.f32.mrb[0].mxu0
        %3090 = vmatprep.mubr.f32.mxu0 %v1630
        %3091 = vmatmul.mubr.f32.gmra.mrb[0].mxu0 %v1629
        %v3092 = vpop.f32.mrb[0].mxu0
        %v3093 = vadd.f32 %v2308, %v3092
        %v3094 = vpop.f32.mrb[0].mxu0
        %3095 = vmatprep.mubr.f32.mxu0 %v1634
        %3096 = vmatmul.mubr.f32.gmra.mrb[0].mxu0 %v1633
        %v3097 = vpop.f32.mrb[0].mxu0
        %v3098 = vadd.f32 %v2313, %v3097
        %v3099 = vpop.f32.mrb[0].mxu0
        %3100 = vmatprep.mubr.f32.mxu0 %v1638
        %3101 = vmatmul.mubr.f32.gmra.mrb[0].mxu0 %v1637
        %v3102 = vpop.f32.mrb[0].mxu0
        %v3103 = vadd.f32 %v2318, %v3102
        %v3104 = vpop.f32.mrb[0].mxu0
        %3105 = vmatprep.mubr.f32.mxu0 %v1642
        %3106 = vmatmul.mubr.f32.gmra.mrb[0].mxu0 %v1641
        %v3107 = vpop.f32.mrb[0].mxu0
        %v3108 = vadd.f32 %v2323, %v3107
        %v3109 = vpop.f32.mrb[0].mxu0
        %3110 = vmatprep.mubr.f32.mxu0 %v1646
        %3111 = vmatmul.mubr.f32.gmra.mrb[0].mxu0 %v1645
        %v3112 = vpop.f32.mrb[0].mxu0
        %v3113 = vadd.f32 %v2328, %v3112
        %v3114 = vpop.f32.mrb[0].mxu0
        %3115 = vmatprep.mubr.f32.mxu0 %v1650
        %3116 = vmatmul.mubr.f32.gmra.mrb[0].mxu0 %v1649
        %v3117 = vpop.f32.mrb[0].mxu0
        %v3118 = vadd.f32 %v2333, %v3117
        %v3119 = vpop.f32.mrb[0].mxu0
        %3120 = vmatprep.mubr.f32.mxu0 %v1654
        %3121 = vmatmul.mubr.f32.gmra.mrb[0].mxu0 %v1653
        %v3122 = vpop.f32.mrb[0].mxu0
        %v3123 = vadd.f32 %v2338, %v3122
        %v3124 = vpop.f32.mrb[0].mxu0
        %3125 = vmatprep.mubr.f32.mxu0 %v1658
        %3126 = vmatmul.mubr.f32.gmra.mrb[0].mxu0 %v1657
        %v3127 = vpop.f32.mrb[0].mxu0
        %v3128 = vadd.f32 %v2343, %v3127
        %v3129 = vpop.f32.mrb[0].mxu0
        %3130 = vmatprep.mubr.f32.mxu0 %v1662
        %3131 = vmatmul.mubr.f32.gmra.mrb[0].mxu0 %v1661
        %v3132 = vpop.f32.mrb[0].mxu0
        %v3133 = vadd.f32 %v2348, %v3132
        %v3134 = vpop.f32.mrb[0].mxu0
        %3135 = vmatprep.mubr.f32.mxu0 %v1666
        %3136 = vmatmul.mubr.f32.gmra.mrb[0].mxu0 %v1665
        %v3137 = vpop.f32.mrb[0].mxu0
        %v3138 = vadd.f32 %v2353, %v3137
        %v3139 = vpop.f32.mrb[0].mxu0
        %3140 = vmatprep.mubr.f32.mxu0 %v1670
        %3141 = vmatmul.mubr.f32.gmra.mrb[0].mxu0 %v1669
        %v3142 = vpop.f32.mrb[0].mxu0
        %v3143 = vadd.f32 %v2358, %v3142
        %v3144 = vpop.f32.mrb[0].mxu0
        %3145 = vmatprep.mubr.f32.mxu0 %v1674
        %3146 = vmatmul.mubr.f32.gmra.mrb[0].mxu0 %v1673
        %v3147 = vpop.f32.mrb[0].mxu0
        %v3148 = vadd.f32 %v2363, %v3147
        %v3149 = vpop.f32.mrb[0].mxu0
        %3150 = vmatprep.mubr.f32.mxu0 %v1678
        %3151 = vmatmul.mubr.f32.gmra.mrb[0].mxu0 %v1677
        %v3152 = vpop.f32.mrb[0].mxu0
        %v3153 = vadd.f32 %v2368, %v3152
        %v3154 = vpop.f32.mrb[0].mxu0
        %3155 = vmatprep.mubr.f32.mxu0 %v1682
        %3156 = vmatmul.mubr.f32.gmra.mrb[0].mxu0 %v1681
        %v3157 = vpop.f32.mrb[0].mxu0
        %v3158 = vadd.f32 %v2373, %v3157
        %v3159 = vpop.f32.mrb[0].mxu0
        %3160 = vmatprep.mubr.f32.mxu0 %v1686
        %3161 = vmatmul.mubr.f32.gmra.mrb[0].mxu0 %v1685
        %v3162 = vpop.f32.mrb[0].mxu0
        %v3163 = vadd.f32 %v2378, %v3162
        %v3164 = vpop.f32.mrb[0].mxu0
        %3165 = vmatprep.mubr.f32.mxu0 %v1690
        %3166 = vmatmul.mubr.f32.gmra.mrb[0].mxu0 %v1689
        %v3167 = vpop.f32.mrb[0].mxu0
        %v3168 = vadd.f32 %v2383, %v3167
        %v3169 = vpop.f32.mrb[0].mxu0
        %3170 = vmatprep.mubr.f32.mxu0 %v1694
        %3171 = vmatmul.mubr.f32.gmra.mrb[0].mxu0 %v1693
        %v3172 = vpop.f32.mrb[0].mxu0
        %v3173 = vadd.f32 %v2388, %v3172
        %v3174 = vpop.f32.mrb[0].mxu0
        %3175 = vmatprep.mubr.f32.mxu0 %v1698
        %3176 = vmatmul.mubr.f32.gmra.mrb[0].mxu0 %v1697
        %v3177 = vpop.f32.mrb[0].mxu0
        %v3178 = vadd.f32 %v2393, %v3177
        %v3179 = vpop.f32.mrb[0].mxu0
        %3180 = vmatprep.mubr.f32.mxu0 %v1702
        %3181 = vmatmul.mubr.f32.gmra.mrb[0].mxu0 %v1701
        %v3182 = vpop.f32.mrb[0].mxu0
        %v3183 = vadd.f32 %v2398, %v3182
        %v3184 = vpop.f32.mrb[0].mxu0
        %3185 = vmatprep.mubr.f32.mxu0 %v1706
        %3186 = vmatmul.mubr.f32.gmra.mrb[0].mxu0 %v1705
        %v3187 = vpop.f32.mrb[0].mxu0
        %v3188 = vadd.f32 %v2403, %v3187
        %v3189 = vpop.f32.mrb[0].mxu0
        %3190 = vmatprep.mubr.f32.mxu0 %v1710
        %3191 = vmatmul.mubr.f32.gmra.mrb[0].mxu0 %v1709
        %v3192 = vpop.f32.mrb[0].mxu0
        %v3193 = vadd.f32 %v2408, %v3192
        %v3194 = vpop.f32.mrb[0].mxu0
        %3195 = vmatprep.mubr.f32.mxu0 %v1714
        %3196 = vmatmul.mubr.f32.gmra.mrb[0].mxu0 %v1713
        %v3197 = vpop.f32.mrb[0].mxu0
        %v3198 = vadd.f32 %v2413, %v3197
        %v3199 = vpop.f32.mrb[0].mxu0
        %3200 = vmatprep.mubr.f32.mxu0 %v1718
        %3201 = vmatmul.mubr.f32.gmra.mrb[0].mxu0 %v1717
        %v3202 = vpop.f32.mrb[0].mxu0
        %v3203 = vadd.f32 %v2418, %v3202
        %v3204 = vpop.f32.mrb[0].mxu0
        %3205 = vmatprep.mubr.f32.mxu0 %v1722
        %3206 = vmatmul.mubr.f32.gmra.mrb[0].mxu0 %v1721
        %v3207 = vpop.f32.mrb[0].mxu0
        %v3208 = vadd.f32 %v2423, %v3207
        %v3209 = vpop.f32.mrb[0].mxu0
        %3210 = vmatprep.mubr.f32.mxu0 %v1726
        %3211 = vmatmul.mubr.f32.gmra.mrb[0].mxu0 %v1725
        %v3212 = vpop.f32.mrb[0].mxu0
        %v3213 = vadd.f32 %v2428, %v3212
        %v3214 = vpop.f32.mrb[0].mxu0
        %3215 = vmatprep.mubr.f32.mxu0 %v1730
        %3216 = vmatmul.mubr.f32.gmra.mrb[0].mxu0 %v1729
        %v3217 = vpop.f32.mrb[0].mxu0
        %v3218 = vadd.f32 %v2433, %v3217
        %v3219 = vpop.f32.mrb[0].mxu0
        %3220 = vmatprep.mubr.f32.mxu0 %v1734
        %3221 = vmatmul.mubr.f32.gmra.mrb[0].mxu0 %v1733
        %v3222 = vpop.f32.mrb[0].mxu0
        %v3223 = vadd.f32 %v2438, %v3222
        %v3224 = vpop.f32.mrb[0].mxu0
        %3225 = vmatprep.mubr.f32.mxu0 %v1738
        %3226 = vmatmul.mubr.f32.gmra.mrb[0].mxu0 %v1737
        %v3227 = vpop.f32.mrb[0].mxu0
        %v3228 = vadd.f32 %v2443, %v3227
        %v3229 = vpop.f32.mrb[0].mxu0
        %3230 = vmatprep.mubr.f32.mxu0 %v1742
        %3231 = vmatmul.mubr.f32.gmra.mrb[0].mxu0 %v1741
        %v3232 = vpop.f32.mrb[0].mxu0
        %v3233 = vadd.f32 %v2448, %v3232
        %v3234 = vpop.f32.mrb[0].mxu0
        %3235 = vmatprep.mubr.f32.mxu0 %v1746
        %3236 = vmatmul.mubr.f32.gmra.mrb[0].mxu0 %v1745
        %v3237 = vpop.f32.mrb[0].mxu0
        %v3238 = vadd.f32 %v2453, %v3237
        %v3239 = vpop.f32.mrb[0].mxu0
        %3240 = vmatprep.mubr.f32.mxu0 %v1750
        %3241 = vmatmul.mubr.f32.gmra.mrb[0].mxu0 %v1749
        %v3242 = vpop.f32.mrb[0].mxu0
        %v3243 = vadd.f32 %v2458, %v3242
        %v3244 = vpop.f32.mrb[0].mxu0
        %3245 = vmatprep.mubr.f32.mxu0 %v1754
        %3246 = vmatmul.mubr.f32.gmra.mrb[0].mxu0 %v1753
        %v3247 = vpop.f32.mrb[0].mxu0
        %v3248 = vadd.f32 %v2463, %v3247
        %v3249 = vpop.f32.mrb[0].mxu0
        %3250 = vmatprep.mubr.f32.mxu0 %v1758
        %3251 = vmatmul.mubr.f32.gmra.mrb[0].mxu0 %v1757
        %v3252 = vpop.f32.mrb[0].mxu0
        %v3253 = vadd.f32 %v2468, %v3252
        %v3254 = vpop.f32.mrb[0].mxu0
        %3255 = vmatprep.mubr.f32.mxu0 %v1762
        %3256 = vmatmul.mubr.f32.gmra.mrb[0].mxu0 %v1761
        %v3257 = vpop.f32.mrb[0].mxu0
        %v3258 = vadd.f32 %v2473, %v3257
        %v3259 = vpop.f32.mrb[0].mxu0
        %3260 = vmatprep.mubr.f32.mxu0 %v1766
        %3261 = vmatmul.mubr.f32.gmra.mrb[0].mxu0 %v1765
        %v3262 = vpop.f32.mrb[0].mxu0
        %v3263 = vadd.f32 %v2478, %v3262
        %v3264 = vpop.f32.mrb[0].mxu0
        %3265 = vmatprep.mubr.f32.mxu0 %v1770
        %3266 = vmatmul.mubr.f32.gmra.mrb[0].mxu0 %v1769
        %v3267 = vpop.f32.mrb[0].mxu0
        %v3268 = vadd.f32 %v2483, %v3267
        %v3269 = vpop.f32.mrb[0].mxu0
        %3270 = vmatprep.mubr.f32.mxu0 %v1774
        %3271 = vmatmul.mubr.f32.gmra.mrb[0].mxu0 %v1773
        %v3272 = vpop.f32.mrb[0].mxu0
        %v3273 = vadd.f32 %v2488, %v3272
        %v3274 = vpop.f32.mrb[0].mxu0
        %3275 = vmatprep.mubr.f32.mxu0 %v1778
        %3276 = vmatmul.mubr.f32.gmra.mrb[0].mxu0 %v1777
        %v3277 = vpop.f32.mrb[0].mxu0
        %v3278 = vadd.f32 %v2493, %v3277
        %v3279 = vpop.f32.mrb[0].mxu0
        %3280 = vmatprep.mubr.f32.mxu0 %v1782
        %3281 = vmatmul.mubr.f32.gmra.mrb[0].mxu0 %v1781
        %v3282 = vpop.f32.mrb[0].mxu0
        %v3283 = vadd.f32 %v2498, %v3282
        %v3284 = vpop.f32.mrb[0].mxu0
        %3285 = vmatprep.mubr.f32.mxu0 %v1786
        %3286 = vmatmul.mubr.f32.gmra.mrb[0].mxu0 %v1785
        %v3287 = vpop.f32.mrb[0].mxu0
        %v3288 = vadd.f32 %v2503, %v3287
        %v3289 = vpop.f32.mrb[0].mxu0
        %3290 = vmatprep.mubr.f32.mxu0 %v1790
        %3291 = vmatmul.mubr.f32.gmra.mrb[0].mxu0 %v1789
        %v3292 = vpop.f32.mrb[0].mxu0
        %v3293 = vadd.f32 %v2508, %v3292
        %v3294 = vpop.f32.mrb[0].mxu0
        %3295 = vmatprep.mubr.f32.mxu0 %v1794
        %3296 = vmatmul.mubr.f32.gmra.mrb[0].mxu0 %v1793
        %v3297 = vpop.f32.mrb[0].mxu0
        %v3298 = vadd.f32 %v2513, %v3297
        %v3299 = vpop.f32.mrb[0].mxu0
        %3300 = vmatprep.mubr.f32.mxu0 %v1798
        %3301 = vmatmul.mubr.f32.gmra.mrb[0].mxu0 %v1797
        %v3302 = vpop.f32.mrb[0].mxu0
        %v3303 = vadd.f32 %v2518, %v3302
        %v3304 = vpop.f32.mrb[0].mxu0
        %3305 = vmatprep.mubr.f32.mxu0 %v1802
        %3306 = vmatmul.mubr.f32.gmra.mrb[0].mxu0 %v1801
        %v3307 = vpop.f32.mrb[0].mxu0
        %v3308 = vadd.f32 %v2523, %v3307
        %v3309 = vpop.f32.mrb[0].mxu0
        %3310 = vmatprep.mubr.f32.mxu0 %v1806
        %3311 = vmatmul.mubr.f32.gmra.mrb[0].mxu0 %v1805
        %v3312 = vpop.f32.mrb[0].mxu0
        %v3313 = vadd.f32 %v2528, %v3312
        %v3314 = vpop.f32.mrb[0].mxu0
        %3315 = vmatprep.mubr.f32.mxu0 %v1810
        %3316 = vmatmul.mubr.f32.gmra.mrb[0].mxu0 %v1809
        %v3317 = vpop.f32.mrb[0].mxu0
        %v3318 = vadd.f32 %v2533, %v3317
        %v3319 = vpop.f32.mrb[0].mxu0
        %3320 = vmatprep.mubr.f32.mxu0 %v1814
        %3321 = vmatmul.mubr.f32.gmra.mrb[0].mxu0 %v1813
        %v3322 = vpop.f32.mrb[0].mxu0
        %v3323 = vadd.f32 %v2538, %v3322
        %v3324 = vpop.f32.mrb[0].mxu0
        %3325 = vmatprep.mubr.f32.mxu0 %v1818
        %3326 = vmatmul.mubr.f32.gmra.mrb[0].mxu0 %v1817
        %v3327 = vpop.f32.mrb[0].mxu0
        %v3328 = vadd.f32 %v2543, %v3327
        %v3329 = vpop.f32.mrb[0].mxu0
        %3330 = vmatprep.mubr.f32.mxu0 %v1822
        %3331 = vmatmul.mubr.f32.gmra.mrb[0].mxu0 %v1821
        %v3332 = vpop.f32.mrb[0].mxu0
        %v3333 = vadd.f32 %v2548, %v3332
        %v3334 = vpop.f32.mrb[0].mxu0
        %3335 = vmatprep.mubr.f32.mxu0 %v1826
        %3336 = vmatmul.mubr.f32.gmra.mrb[0].mxu0 %v1825
        %v3337 = vpop.f32.mrb[0].mxu0
        %v3338 = vadd.f32 %v2553, %v3337
        %v3339 = vpop.f32.mrb[0].mxu0
        %3340 = vmatprep.mubr.f32.mxu0 %v1830
        %3341 = vmatmul.mubr.f32.gmra.mrb[0].mxu0 %v1829
        %v3342 = vpop.f32.mrb[0].mxu0
        %v3343 = vadd.f32 %v2558, %v3342
        %v3344 = vpop.f32.mrb[0].mxu0
        %3345 = vmatprep.mubr.f32.mxu0 %v1834
        %3346 = vmatmul.mubr.f32.gmra.mrb[0].mxu0 %v1833
        %v3347 = vpop.f32.mrb[0].mxu0
        %v3348 = vadd.f32 %v2563, %v3347
        %v3349 = vpop.f32.mrb[0].mxu0
        %3350 = vmatprep.mubr.f32.mxu0 %v1838
        %3351 = vmatmul.mubr.f32.gmra.mrb[0].mxu0 %v1837
        %v3352 = vpop.f32.mrb[0].mxu0
        %v3353 = vadd.f32 %v2568, %v3352
        %v3354 = vpop.f32.mrb[0].mxu0
        %3355 = vmatprep.mubr.f32.mxu0 %v1842
        %3356 = vmatmul.mubr.f32.gmra.mrb[0].mxu0 %v1841
        %v3357 = vpop.f32.mrb[0].mxu0
        %v3358 = vadd.f32 %v2573, %v3357
        %v3359 = vpop.f32.mrb[0].mxu0
        %3360 = vmatprep.mubr.f32.mxu0 %v1846
        %3361 = vmatmul.mubr.f32.gmra.mrb[0].mxu0 %v1845
        %v3362 = vpop.f32.mrb[0].mxu0
        %v3363 = vadd.f32 %v2578, %v3362
        %v3364 = vpop.f32.mrb[0].mxu0
        %3365 = vmatprep.mubr.f32.mxu0 %v1850
        %3366 = vmatmul.mubr.f32.gmra.mrb[0].mxu0 %v1849
        %v3367 = vpop.f32.mrb[0].mxu0
        %v3368 = vadd.f32 %v2583, %v3367
        %v3369 = vpop.f32.mrb[0].mxu0
        %3370 = vmatprep.mubr.f32.mxu0 %v1854
        %3371 = vmatmul.mubr.f32.gmra.mrb[0].mxu0 %v1853
        %v3372 = vpop.f32.mrb[0].mxu0
        %v3373 = vadd.f32 %v2588, %v3372
        %v3374 = vpop.f32.mrb[0].mxu0
        %3375 = vmatprep.mubr.f32.mxu0 %v1858
        %3376 = vmatmul.mubr.f32.gmra.mrb[0].mxu0 %v1857
        %v3377 = vpop.f32.mrb[0].mxu0
        %v3378 = vadd.f32 %v2593, %v3377
        %v3379 = vpop.f32.mrb[0].mxu0
        %3380 = vmatprep.mubr.f32.mxu0 %v1862
        %3381 = vmatmul.mubr.f32.gmra.mrb[0].mxu0 %v1861
        %v3382 = vpop.f32.mrb[0].mxu0
        %v3383 = vadd.f32 %v2598, %v3382
        %v3384 = vpop.f32.mrb[0].mxu0
        %3385 = vmatprep.mubr.f32.mxu0 %v1866
        %3386 = vmatmul.mubr.f32.gmra.mrb[0].mxu0 %v1865
        %v3387 = vpop.f32.mrb[0].mxu0
        %v3388 = vadd.f32 %v2603, %v3387
        %v3389 = vpop.f32.mrb[0].mxu0
        %3390 = vmatprep.mubr.f32.mxu0 %v1870
        %3391 = vmatmul.mubr.f32.gmra.mrb[0].mxu0 %v1869
        %v3392 = vpop.f32.mrb[0].mxu0
        %v3393 = vadd.f32 %v2608, %v3392
        %v3394 = vpop.f32.mrb[0].mxu0
        %3395 = vmatprep.mubr.f32.mxu0 %v1874
        %3396 = vmatmul.mubr.f32.gmra.mrb[0].mxu0 %v1873
        %v3397 = vpop.f32.mrb[0].mxu0
        %v3398 = vadd.f32 %v2613, %v3397
        %v3399 = vpop.f32.mrb[0].mxu0
        %3400 = vmatprep.mubr.f32.mxu0 %v1878
        %3401 = vmatmul.mubr.f32.gmra.mrb[0].mxu0 %v1877
        %v3402 = vpop.f32.mrb[0].mxu0
        %v3403 = vadd.f32 %v2618, %v3402
        %v3404 = vpop.f32.mrb[0].mxu0
        %3405 = vmatprep.mubr.f32.mxu0 %v1882
        %3406 = vmatmul.mubr.f32.gmra.mrb[0].mxu0 %v1881
        %v3407 = vpop.f32.mrb[0].mxu0
        %v3408 = vadd.f32 %v2623, %v3407
        %v3409 = vpop.f32.mrb[0].mxu0
        %3410 = vmatprep.mubr.f32.mxu0 %v1886
        %3411 = vmatmul.mubr.f32.gmra.mrb[0].mxu0 %v1885
        %v3412 = vpop.f32.mrb[0].mxu0
        %v3413 = vadd.f32 %v2628, %v3412
        %v3414 = vpop.f32.mrb[0].mxu0
        %3415 = vmatprep.mubr.f32.mxu0 %v1890
        %3416 = vmatmul.mubr.f32.gmra.mrb[0].mxu0 %v1889
        %v3417 = vpop.f32.mrb[0].mxu0
        %v3418 = vadd.f32 %v2633, %v3417
        %v3419 = vpop.f32.mrb[0].mxu0
        %3420 = vmatprep.mubr.f32.mxu0 %v1894
        %3421 = vmatmul.mubr.f32.gmra.mrb[0].mxu0 %v1893
        %v3422 = vpop.f32.mrb[0].mxu0
        %v3423 = vadd.f32 %v2638, %v3422
        %v3424 = vpop.f32.mrb[0].mxu0
        %3425 = vmatprep.mubr.f32.mxu0 %v1898
        %3426 = vmatmul.mubr.f32.gmra.mrb[0].mxu0 %v1897
        %v3427 = vpop.f32.mrb[0].mxu0
        %v3428 = vadd.f32 %v2643, %v3427
        %v3429 = vpop.f32.mrb[0].mxu0
        %3430 = vmatprep.mubr.f32.mxu0 %v1902
        %3431 = vmatmul.mubr.f32.gmra.mrb[0].mxu0 %v1901
        %v3432 = vpop.f32.mrb[0].mxu0
        %v3433 = vadd.f32 %v2648, %v3432
        %v3434 = vpop.f32.mrb[0].mxu0
        %3435 = vmatprep.mubr.f32.mxu0 %v1906
        %3436 = vmatmul.mubr.f32.gmra.mrb[0].mxu0 %v1905
        %v3437 = vpop.f32.mrb[0].mxu0
        %v3438 = vadd.f32 %v2653, %v3437
        %v3439 = vpop.f32.mrb[0].mxu0
        %3440 = vmatprep.mubr.f32.mxu0 %v1910
        %3441 = vmatmul.mubr.f32.gmra.mrb[0].mxu0 %v1909
        %v3442 = vpop.f32.mrb[0].mxu0
        %v3443 = vadd.f32 %v2658, %v3442
        %v3444 = vpop.f32.mrb[0].mxu0
        %3445 = vmatprep.mubr.f32.mxu0 %v1914
        %3446 = vmatmul.mubr.f32.gmra.mrb[0].mxu0 %v1913
        %v3447 = vpop.f32.mrb[0].mxu0
        %v3448 = vadd.f32 %v2663, %v3447
        %v3449 = vpop.f32.mrb[0].mxu0
        %3450 = vmatprep.mubr.f32.mxu0 %v1918
        %3451 = vmatmul.mubr.f32.gmra.mrb[0].mxu0 %v1917
        %v3452 = vpop.f32.mrb[0].mxu0
        %v3453 = vadd.f32 %v2668, %v3452
        %v3454 = vpop.f32.mrb[0].mxu0
        %3455 = vmatprep.mubr.f32.mxu0 %v1922
        %3456 = vmatmul.mubr.f32.gmra.mrb[0].mxu0 %v1921
        %v3457 = vpop.f32.mrb[0].mxu0
        %v3458 = vadd.f32 %v2673, %v3457
        %v3459 = vpop.f32.mrb[0].mxu0
        %3460 = vmatprep.mubr.f32.mxu0 %v1926
        %3461 = vmatmul.mubr.f32.gmra.mrb[0].mxu0 %v1925
        %v3462 = vpop.f32.mrb[0].mxu0
        %v3463 = vadd.f32 %v2678, %v3462
        %v3464 = vpop.f32.mrb[0].mxu0
        %3465 = vmatprep.mubr.f32.mxu0 %v1930
        %3466 = vmatmul.mubr.f32.gmra.mrb[0].mxu0 %v1929
        %v3467 = vpop.f32.mrb[0].mxu0
        %v3468 = vadd.f32 %v2683, %v3467
        %v3469 = vpop.f32.mrb[0].mxu0
        %3470 = vmatprep.mubr.f32.mxu0 %v1934
        %3471 = vmatmul.mubr.f32.gmra.mrb[0].mxu0 %v1933
        %v3472 = vpop.f32.mrb[0].mxu0
        %v3473 = vadd.f32 %v2688, %v3472
        %v3474 = vpop.f32.mrb[0].mxu0
        %3475 = vmatprep.mubr.f32.mxu0 %v1938
        %3476 = vmatmul.mubr.f32.gmra.mrb[0].mxu0 %v1937
        %v3477 = vpop.f32.mrb[0].mxu0
        %v3478 = vadd.f32 %v2693, %v3477
        %v3479 = vpop.f32.mrb[0].mxu0
        %3480 = vmatprep.mubr.f32.mxu0 %v1942
        %3481 = vmatmul.mubr.f32.gmra.mrb[0].mxu0 %v1941
        %v3482 = vpop.f32.mrb[0].mxu0
        %v3483 = vadd.f32 %v2698, %v3482
        %v3484 = vpop.f32.mrb[0].mxu0
        %3485 = vmatprep.mubr.f32.mxu0 %v1946
        %3486 = vmatmul.mubr.f32.gmra.mrb[0].mxu0 %v1945
        %v3487 = vpop.f32.mrb[0].mxu0
        %v3488 = vadd.f32 %v2703, %v3487
        %v3489 = vpop.f32.mrb[0].mxu0
        %3490 = vmatprep.mubr.f32.mxu0 %v1950
        %3491 = vmatmul.mubr.f32.gmra.mrb[0].mxu0 %v1949
        %v3492 = vpop.f32.mrb[0].mxu0
        %v3493 = vadd.f32 %v2708, %v3492
        %v3494 = vpop.f32.mrb[0].mxu0
        %3495 = vmatprep.mubr.f32.mxu0 %v1954
        %3496 = vmatmul.mubr.f32.gmra.mrb[0].mxu0 %v1953
        %v3497 = vpop.f32.mrb[0].mxu0
        %v3498 = vadd.f32 %v2713, %v3497
        %v3499 = vpop.f32.mrb[0].mxu0
        %3500 = vmatprep.mubr.f32.mxu0 %v1958
        %3501 = vmatmul.mubr.f32.gmra.mrb[0].mxu0 %v1957
        %v3502 = vpop.f32.mrb[0].mxu0
        %v3503 = vadd.f32 %v2718, %v3502
        %v3504 = vpop.f32.mrb[0].mxu0
        %3505 = vmatprep.mubr.f32.mxu0 %v1962
        %3506 = vmatmul.mubr.f32.gmra.mrb[0].mxu0 %v1961
        %v3507 = vpop.f32.mrb[0].mxu0
        %v3508 = vadd.f32 %v2723, %v3507
        %v3509 = vpop.f32.mrb[0].mxu0
        %3510 = vmatprep.mubr.f32.mxu0 %v1966
        %3511 = vmatmul.mubr.f32.gmra.mrb[0].mxu0 %v1965
        %v3512 = vpop.f32.mrb[0].mxu0
        %v3513 = vadd.f32 %v2728, %v3512
        %v3514 = vpop.f32.mrb[0].mxu0
        %3515 = vmatprep.mubr.f32.mxu0 %v1970
        %3516 = vmatmul.mubr.f32.gmra.mrb[0].mxu0 %v1969
        %v3517 = vpop.f32.mrb[0].mxu0
        %v3518 = vadd.f32 %v2733, %v3517
        %v3519 = vpop.f32.mrb[0].mxu0
        %3520 = vmatprep.mubr.f32.mxu0 %v1974
        %3521 = vmatmul.mubr.f32.gmra.mrb[0].mxu0 %v1973
        %v3522 = vpop.f32.mrb[0].mxu0
        %v3523 = vadd.f32 %v2738, %v3522
        %v3524 = vpop.f32.mrb[0].mxu0
        %3525 = vmatprep.mubr.f32.mxu0 %v1978
        %3526 = vmatmul.mubr.f32.gmra.mrb[0].mxu0 %v1977
        %v3527 = vpop.f32.mrb[0].mxu0
        %v3528 = vadd.f32 %v2743, %v3527
        %v3529 = vpop.f32.mrb[0].mxu0
        %3530 = vmatprep.mubr.f32.mxu0 %v1982
        %3531 = vmatmul.mubr.f32.gmra.mrb[0].mxu0 %v1981
        %v3532 = vpop.f32.mrb[0].mxu0
        %v3533 = vadd.f32 %v2748, %v3532
        %v3534 = vpop.f32.mrb[0].mxu0
        %3535 = vmatprep.mubr.f32.mxu0 %v1986
        %3536 = vmatmul.mubr.f32.gmra.mrb[0].mxu0 %v1985
        %v3537 = vpop.f32.mrb[0].mxu0
        %v3538 = vadd.f32 %v2753, %v3537
        %v3539 = vpop.f32.mrb[0].mxu0
        %3540 = vmatprep.mubr.f32.mxu0 %v1990
        %3541 = vmatmul.mubr.f32.gmra.mrb[0].mxu0 %v1989
        %v3542 = vpop.f32.mrb[0].mxu0
        %v3543 = vadd.f32 %v2758, %v3542
        %v3544 = vpop.f32.mrb[0].mxu0
        %3545 = vmatprep.mubr.f32.mxu0 %v1994
        %3546 = vmatmul.mubr.f32.gmra.mrb[0].mxu0 %v1993
        %v3547 = vpop.f32.mrb[0].mxu0
        %v3548 = vadd.f32 %v2763, %v3547
        %v3549 = vpop.f32.mrb[0].mxu0
        %3550 = vmatprep.mubr.f32.mxu0 %v1998
        %3551 = vmatmul.mubr.f32.gmra.mrb[0].mxu0 %v1997
        %v3552 = vpop.f32.mrb[0].mxu0
        %v3553 = vadd.f32 %v2768, %v3552
        %v3554 = vpop.f32.mrb[0].mxu0
        %3555 = vmatprep.mubr.f32.mxu0 %v2002
        %3556 = vmatmul.mubr.f32.gmra.mrb[0].mxu0 %v2001
        %v3557 = vpop.f32.mrb[0].mxu0
        %v3558 = vadd.f32 %v2773, %v3557
        %v3559 = vpop.f32.mrb[0].mxu0
        %3560 = vmatprep.mubr.f32.mxu0 %v2006
        %3561 = vmatmul.mubr.f32.gmra.mrb[0].mxu0 %v2005
        %v3562 = vpop.f32.mrb[0].mxu0
        %v3563 = vadd.f32 %v2778, %v3562
        %v3564 = vpop.f32.mrb[0].mxu0
        %3565 = vmatprep.mubr.f32.mxu0 %v2010
        %3566 = vmatmul.mubr.f32.gmra.mrb[0].mxu0 %v2009
        %v3567 = vpop.f32.mrb[0].mxu0
        %v3568 = vadd.f32 %v2783, %v3567
        %v3569 = vpop.f32.mrb[0].mxu0
        %3570 = vmatprep.mubr.f32.mxu0 %v2014
        %3571 = vmatmul.mubr.f32.gmra.mrb[0].mxu0 %v2013
        %v3572 = vpop.f32.mrb[0].mxu0
        %v3573 = vadd.f32 %v2788, %v3572
        %v3574 = vpop.f32.mrb[0].mxu0
        %3575 = vmatprep.mubr.f32.mxu0 %v2018
        %3576 = vmatmul.mubr.f32.gmra.mrb[0].mxu0 %v2017
        %v3577 = vpop.f32.mrb[0].mxu0
        %v3578 = vadd.f32 %v2793, %v3577
        %v3579 = vpop.f32.mrb[0].mxu0
        %3580 = vmatprep.mubr.f32.mxu0 %v2022
        %3581 = vmatmul.mubr.f32.gmra.mrb[0].mxu0 %v2021
        %v3582 = vpop.f32.mrb[0].mxu0
        %v3583 = vadd.f32 %v2798, %v3582
        %v3584 = vpop.f32.mrb[0].mxu0
        %3585 = vmatprep.mubr.f32.mxu0 %v2026
        %3586 = vmatmul.mubr.f32.gmra.mrb[0].mxu0 %v2025
        %v3587 = vpop.f32.mrb[0].mxu0
        %v3588 = vadd.f32 %v2803, %v3587
        %v3589 = vpop.f32.mrb[0].mxu0
        %3590 = vmatprep.mubr.f32.mxu0 %v2030
        %3591 = vmatmul.mubr.f32.gmra.mrb[0].mxu0 %v2029
        %v3592 = vpop.f32.mrb[0].mxu0
        %v3593 = vadd.f32 %v2808, %v3592
        %v3594 = vpop.f32.mrb[0].mxu0
        %3595 = vmatprep.mubr.f32.mxu0 %v2034
        %3596 = vmatmul.mubr.f32.gmra.mrb[0].mxu0 %v2033
        %v3597 = vpop.f32.mrb[0].mxu0
        %v3598 = vadd.f32 %v2813, %v3597
        %v3599 = vpop.f32.mrb[0].mxu0
        %3600 = vmatprep.mubr.f32.mxu0 %v2038
        %3601 = vmatmul.mubr.f32.gmra.mrb[0].mxu0 %v2037
        %v3602 = vpop.f32.mrb[0].mxu0
        %v3603 = vadd.f32 %v2818, %v3602
        %v3604 = vpop.f32.mrb[0].mxu0
        %3605 = vmatprep.mubr.f32.mxu0 %v2042
        %3606 = vmatmul.mubr.f32.gmra.mrb[0].mxu0 %v2041
        %v3607 = vpop.f32.mrb[0].mxu0
        %v3608 = vadd.f32 %v2823, %v3607
        %v3609 = vpop.f32.mrb[0].mxu0
        %3610 = vmatprep.mubr.f32.mxu0 %v2046
        %3611 = vmatmul.mubr.f32.gmra.mrb[0].mxu0 %v2045
        %v3612 = vpop.f32.mrb[0].mxu0
        %v3613 = vadd.f32 %v2828, %v3612
        %v3614 = vpop.f32.mrb[0].mxu0
        %3615 = vmatprep.mubr.f32.mxu0 %v2050
        %3616 = vmatmul.mubr.f32.gmra.mrb[0].mxu0 %v2049
        %v3617 = vpop.f32.mrb[0].mxu0
        %v3618 = vadd.f32 %v2833, %v3617
        %v3619 = vpop.f32.mrb[0].mxu0
        %3620 = vdwg.mxu0
        %v3621 = vld [vmem:[%s3] sm:$0xff]
        %v3622 = vld [vmem:[%s3 + $0x8] sm:$0xff]
        %v3623 = vld [vmem:[%s3 + $0x10] sm:$0xff]
        %v3624 = vld [vmem:[%s3 + $0x18] sm:$0xff]
        %s3625 = scalar_lea.vmem %s3, 32
        %v3626 = vld [vmem:[%s3625] sm:$0xff]
        %v3627 = vld [vmem:[%s3625 + $0x8] sm:$0xff]
        %v3628 = vld [vmem:[%s3625 + $0x10] sm:$0xff]
        %v3629 = vld [vmem:[%s3625 + $0x18] sm:$0xff]
        %vm3630 = vcmask 261120
        %v3632 = vsel %vm3630, %v2983, 0
        %v3635 = vsel %vm3630, %v2988, 0
        %v3638 = vsel %vm3630, %v2993, 0
        %v3641 = vsel %vm3630, %v2998, 0
        %v3644 = vsel %vm3630, %v3003, 0
        %v3647 = vsel %vm3630, %v3008, 0
        %v3650 = vsel %vm3630, %v3013, 0
        %v3653 = vsel %vm3630, %v3018, 0
        %v3656 = vsel %vm3630, %v3023, 0
        %v3659 = vsel %vm3630, %v3028, 0
        %v3662 = vsel %vm3630, %v3033, 0
        %v3665 = vsel %vm3630, %v3038, 0
        %v3668 = vsel %vm3630, %v3043, 0
        %v3671 = vsel %vm3630, %v3048, 0
        %v3674 = vsel %vm3630, %v3053, 0
        %v3677 = vsel %vm3630, %v3058, 0
        %3679 = vmatprep.subr.mxu0 0.0
        %3680 = vmatpush1.msra.mxu0 %v3626
        %3681 = vmatprep.subr.mxu0 0.0
        %3682 = vmatpush1.msra.mxu0 %v3627
        %3683 = vmatprep.subr.mxu0 0.0
        %3684 = vmatpush1.msra.mxu0 %v3628
        %3685 = vmatprep.subr.mxu0 0.0
        %3686 = vmatpush1.msra.mxu0 %v3629
        %3687 = vmatprep.subr.mxu0 0.0
        %3688 = vmatpush1.msra.mxu0 0.0
        %3689 = vmatprep.subr.mxu0 0.0
        %3690 = vmatpush1.msra.mxu0 0.0
        %3691 = vmatprep.subr.mxu0 0.0
        %3692 = vmatpush1.msra.mxu0 0.0
        %3693 = vmatprep.subr.mxu0 0.0
        %3694 = vmatpush1.msra.mxu0 0.0
        %3695 = vmatprep.subr.mxu0 0.0
        %3696 = vmatpush1.msra.mxu0 0.0
        %3697 = vmatprep.subr.mxu0 0.0
        %3698 = vmatpush1.msra.mxu0 0.0
        %3699 = vmatprep.subr.mxu0 0.0
        %3700 = vmatpush1.msra.mxu0 0.0
        %3701 = vmatprep.subr.mxu0 0.0
        %3702 = vmatpush1.msra.mxu0 0.0
        %3703 = vmatprep.subr.mxu0 0.0
        %3704 = vmatpush1.msra.mxu0 0.0
        %3705 = vmatprep.subr.mxu0 0.0
        %3706 = vmatpush1.msra.mxu0 0.0
        %3707 = vmatprep.subr.mxu0 0.0
        %3708 = vmatpush1.msra.mxu0 0.0
        %3709 = vmatprep.subr.mxu0 0.0
        %3710 = vmatpush1.msra.mxu0 0.0
        %3711 = vmatprep.subr.mxu0 0.0
        %3712 = vmatpush1.msra.mxu0 0.0
        %3713 = vmatprep.subr.mxu0 0.0
        %3714 = vmatpush1.msra.mxu0 0.0
        %3715 = vmatprep.subr.mxu0 0.0
        %3716 = vmatpush1.msra.mxu0 0.0
        %3717 = vmatprep.subr.mxu0 0.0
        %3718 = vmatpush1.msra.mxu0 0.0
        %3719 = vmatprep.subr.mxu0 0.0
        %3720 = vmatpush1.msra.mxu0 0.0
        %3721 = vmatprep.subr.mxu0 0.0
        %3722 = vmatpush1.msra.mxu0 0.0
        %3723 = vmatprep.subr.mxu0 0.0
        %3724 = vmatpush1.msra.mxu0 0.0
        %3725 = vmatprep.subr.mxu0 0.0
        %3726 = vmatpush1.msra.mxu0 0.0
        %3727 = vmatprep.subr.mxu0 0.0
        %3728 = vmatpush1.msra.mxu0 0.0
        %3729 = vmatprep.subr.mxu0 0.0
        %3730 = vmatpush1.msra.mxu0 0.0
        %3731 = vmatprep.subr.mxu0 0.0
        %3732 = vmatpush1.msra.mxu0 0.0
        %3733 = vmatprep.subr.mxu0 0.0
        %3734 = vmatpush1.msra.mxu0 0.0
        %3735 = vmatprep.subr.mxu0 0.0
        %3736 = vmatpush1.msra.mxu0 0.0
        %3737 = vmatprep.subr.mxu0 0.0
        %3738 = vmatpush1.msra.mxu0 0.0
        %3739 = vmatprep.subr.mxu0 0.0
        %3740 = vmatpush1.msra.mxu0 0.0
        %3741 = vmatprep.subr.mxu0 0.0
        %3742 = vmatpush1.msra.mxu0 0.0
        %3743 = vmatprep.mubr.f32.mxu0 0.0
        %3744 = vmatmul.mubr.f32.gmra.mrb[0].mxu0 %v3632
        %v3745 = vpop.f32.mrb[0].mxu0
        %v3746 = vadd.f32 0.0, %v3745
        %v3747 = vpop.f32.mrb[0].mxu0
        %3748 = vmatprep.mubr.f32.mxu0 0.0
        %3749 = vmatmul.mubr.f32.gmra.mrb[0].mxu0 %v3635
        %v3750 = vpop.f32.mrb[0].mxu0
        %v3751 = vadd.f32 0.0, %v3750
        %v3752 = vpop.f32.mrb[0].mxu0
        %3753 = vmatprep.mubr.f32.mxu0 0.0
        %3754 = vmatmul.mubr.f32.gmra.mrb[0].mxu0 %v3638
        %v3755 = vpop.f32.mrb[0].mxu0
        %v3756 = vadd.f32 0.0, %v3755
        %v3757 = vpop.f32.mrb[0].mxu0
        %3758 = vmatprep.mubr.f32.mxu0 0.0
        %3759 = vmatmul.mubr.f32.gmra.mrb[0].mxu0 %v3641
        %v3760 = vpop.f32.mrb[0].mxu0
        %v3761 = vadd.f32 0.0, %v3760
        %v3762 = vpop.f32.mrb[0].mxu0
        %3763 = vmatprep.mubr.f32.mxu0 0.0
        %3764 = vmatmul.mubr.f32.gmra.mrb[0].mxu0 %v3644
        %v3765 = vpop.f32.mrb[0].mxu0
        %v3766 = vadd.f32 0.0, %v3765
        %v3767 = vpop.f32.mrb[0].mxu0
        %3768 = vmatprep.mubr.f32.mxu0 0.0
        %3769 = vmatmul.mubr.f32.gmra.mrb[0].mxu0 %v3647
        %v3770 = vpop.f32.mrb[0].mxu0
        %v3771 = vadd.f32 0.0, %v3770
        %v3772 = vpop.f32.mrb[0].mxu0
        %3773 = vmatprep.mubr.f32.mxu0 0.0
        %3774 = vmatmul.mubr.f32.gmra.mrb[0].mxu0 %v3650
        %v3775 = vpop.f32.mrb[0].mxu0
        %v3776 = vadd.f32 0.0, %v3775
        %v3777 = vpop.f32.mrb[0].mxu0
        %3778 = vmatprep.mubr.f32.mxu0 0.0
        %3779 = vmatmul.mubr.f32.gmra.mrb[0].mxu0 %v3653
        %v3780 = vpop.f32.mrb[0].mxu0
        %v3781 = vadd.f32 0.0, %v3780
        %v3782 = vpop.f32.mrb[0].mxu0
        %3783 = vmatprep.mubr.f32.mxu0 0.0
        %3784 = vmatmul.mubr.f32.gmra.mrb[0].mxu0 %v3656
        %v3785 = vpop.f32.mrb[0].mxu0
        %v3786 = vadd.f32 0.0, %v3785
        %v3787 = vpop.f32.mrb[0].mxu0
        %3788 = vmatprep.mubr.f32.mxu0 0.0
        %3789 = vmatmul.mubr.f32.gmra.mrb[0].mxu0 %v3659
        %v3790 = vpop.f32.mrb[0].mxu0
        %v3791 = vadd.f32 0.0, %v3790
        %v3792 = vpop.f32.mrb[0].mxu0
        %3793 = vmatprep.mubr.f32.mxu0 0.0
        %3794 = vmatmul.mubr.f32.gmra.mrb[0].mxu0 %v3662
        %v3795 = vpop.f32.mrb[0].mxu0
        %v3796 = vadd.f32 0.0, %v3795
        %v3797 = vpop.f32.mrb[0].mxu0
        %3798 = vmatprep.mubr.f32.mxu0 0.0
        %3799 = vmatmul.mubr.f32.gmra.mrb[0].mxu0 %v3665
        %v3800 = vpop.f32.mrb[0].mxu0
        %v3801 = vadd.f32 0.0, %v3800
        %v3802 = vpop.f32.mrb[0].mxu0
        %3803 = vmatprep.mubr.f32.mxu0 0.0
        %3804 = vmatmul.mubr.f32.gmra.mrb[0].mxu0 %v3668
        %v3805 = vpop.f32.mrb[0].mxu0
        %v3806 = vadd.f32 0.0, %v3805
        %v3807 = vpop.f32.mrb[0].mxu0
        %3808 = vmatprep.mubr.f32.mxu0 0.0
        %3809 = vmatmul.mubr.f32.gmra.mrb[0].mxu0 %v3671
        %v3810 = vpop.f32.mrb[0].mxu0
        %v3811 = vadd.f32 0.0, %v3810
        %v3812 = vpop.f32.mrb[0].mxu0
        %3813 = vmatprep.mubr.f32.mxu0 0.0
        %3814 = vmatmul.mubr.f32.gmra.mrb[0].mxu0 %v3674
        %v3815 = vpop.f32.mrb[0].mxu0
        %v3816 = vadd.f32 0.0, %v3815
        %v3817 = vpop.f32.mrb[0].mxu0
        %3818 = vmatprep.mubr.f32.mxu0 0.0
        %3819 = vmatmul.mubr.f32.gmra.mrb[0].mxu0 %v3677
        %v3820 = vpop.f32.mrb[0].mxu0
        %v3821 = vadd.f32 0.0, %v3820
        %v3822 = vpop.f32.mrb[0].mxu0
        %3823 = vdwg.mxu0
        %s3824 = scalar_lea.vmem %s3, 64
        %v3825 = vld [vmem:[%s3824] sm:$0xff]
        %v3826 = vld [vmem:[%s3824 + $0x8] sm:$0xff]
        %v3827 = vld [vmem:[%s3824 + $0x10] sm:$0xff]
        %v3828 = vld [vmem:[%s3824 + $0x18] sm:$0xff]
        %s3829 = scalar_lea.vmem %s3, 96
        %v3830 = vld [vmem:[%s3829] sm:$0xff]
        %v3831 = vld [vmem:[%s3829 + $0x8] sm:$0xff]
        %v3832 = vld [vmem:[%s3829 + $0x10] sm:$0xff]
        %v3833 = vld [vmem:[%s3829 + $0x18] sm:$0xff]
        %v3835 = vsel %vm3630, %v3143, 0
        %v3838 = vsel %vm3630, %v3148, 0
        %v3841 = vsel %vm3630, %v3153, 0
        %v3844 = vsel %vm3630, %v3158, 0
        %v3847 = vsel %vm3630, %v3163, 0
        %v3850 = vsel %vm3630, %v3168, 0
        %v3853 = vsel %vm3630, %v3173, 0
        %v3856 = vsel %vm3630, %v3178, 0
        %v3859 = vsel %vm3630, %v3183, 0
        %v3862 = vsel %vm3630, %v3188, 0
        %v3865 = vsel %vm3630, %v3193, 0
        %v3868 = vsel %vm3630, %v3198, 0
        %v3871 = vsel %vm3630, %v3203, 0
        %v3874 = vsel %vm3630, %v3208, 0
        %v3877 = vsel %vm3630, %v3213, 0
        %v3880 = vsel %vm3630, %v3218, 0
        %3882 = vmatprep.subr.mxu0 0.0
        %3883 = vmatpush1.msra.mxu0 %v3830
        %3884 = vmatprep.subr.mxu0 0.0
        %3885 = vmatpush1.msra.mxu0 %v3831
        %3886 = vmatprep.subr.mxu0 0.0
        %3887 = vmatpush1.msra.mxu0 %v3832
        %3888 = vmatprep.subr.mxu0 0.0
        %3889 = vmatpush1.msra.mxu0 %v3833
        %3890 = vmatprep.subr.mxu0 0.0
        %3891 = vmatpush1.msra.mxu0 0.0
        %3892 = vmatprep.subr.mxu0 0.0
        %3893 = vmatpush1.msra.mxu0 0.0
        %3894 = vmatprep.subr.mxu0 0.0
        %3895 = vmatpush1.msra.mxu0 0.0
        %3896 = vmatprep.subr.mxu0 0.0
        %3897 = vmatpush1.msra.mxu0 0.0
        %3898 = vmatprep.subr.mxu0 0.0
        %3899 = vmatpush1.msra.mxu0 0.0
        %3900 = vmatprep.subr.mxu0 0.0
        %3901 = vmatpush1.msra.mxu0 0.0
        %3902 = vmatprep.subr.mxu0 0.0
        %3903 = vmatpush1.msra.mxu0 0.0
        %3904 = vmatprep.subr.mxu0 0.0
        %3905 = vmatpush1.msra.mxu0 0.0
        %3906 = vmatprep.subr.mxu0 0.0
        %3907 = vmatpush1.msra.mxu0 0.0
        %3908 = vmatprep.subr.mxu0 0.0
        %3909 = vmatpush1.msra.mxu0 0.0
        %3910 = vmatprep.subr.mxu0 0.0
        %3911 = vmatpush1.msra.mxu0 0.0
        %3912 = vmatprep.subr.mxu0 0.0
        %3913 = vmatpush1.msra.mxu0 0.0
        %3914 = vmatprep.subr.mxu0 0.0
        %3915 = vmatpush1.msra.mxu0 0.0
        %3916 = vmatprep.subr.mxu0 0.0
        %3917 = vmatpush1.msra.mxu0 0.0
        %3918 = vmatprep.subr.mxu0 0.0
        %3919 = vmatpush1.msra.mxu0 0.0
        %3920 = vmatprep.subr.mxu0 0.0
        %3921 = vmatpush1.msra.mxu0 0.0
        %3922 = vmatprep.subr.mxu0 0.0
        %3923 = vmatpush1.msra.mxu0 0.0
        %3924 = vmatprep.subr.mxu0 0.0
        %3925 = vmatpush1.msra.mxu0 0.0
        %3926 = vmatprep.subr.mxu0 0.0
        %3927 = vmatpush1.msra.mxu0 0.0
        %3928 = vmatprep.subr.mxu0 0.0
        %3929 = vmatpush1.msra.mxu0 0.0
        %3930 = vmatprep.subr.mxu0 0.0
        %3931 = vmatpush1.msra.mxu0 0.0
        %3932 = vmatprep.subr.mxu0 0.0
        %3933 = vmatpush1.msra.mxu0 0.0
        %3934 = vmatprep.subr.mxu0 0.0
        %3935 = vmatpush1.msra.mxu0 0.0
        %3936 = vmatprep.subr.mxu0 0.0
        %3937 = vmatpush1.msra.mxu0 0.0
        %3938 = vmatprep.subr.mxu0 0.0
        %3939 = vmatpush1.msra.mxu0 0.0
        %3940 = vmatprep.subr.mxu0 0.0
        %3941 = vmatpush1.msra.mxu0 0.0
        %3942 = vmatprep.subr.mxu0 0.0
        %3943 = vmatpush1.msra.mxu0 0.0
        %3944 = vmatprep.subr.mxu0 0.0
        %3945 = vmatpush1.msra.mxu0 0.0
        %3946 = vmatprep.mubr.f32.mxu0 0.0
        %3947 = vmatmul.mubr.f32.gmra.mrb[0].mxu0 %v3835
        %v3948 = vpop.f32.mrb[0].mxu0
        %v3949 = vadd.f32 0.0, %v3948
        %v3950 = vpop.f32.mrb[0].mxu0
        %3951 = vmatprep.mubr.f32.mxu0 0.0
        %3952 = vmatmul.mubr.f32.gmra.mrb[0].mxu0 %v3838
        %v3953 = vpop.f32.mrb[0].mxu0
        %v3954 = vadd.f32 0.0, %v3953
        %v3955 = vpop.f32.mrb[0].mxu0
        %3956 = vmatprep.mubr.f32.mxu0 0.0
        %3957 = vmatmul.mubr.f32.gmra.mrb[0].mxu0 %v3841
        %v3958 = vpop.f32.mrb[0].mxu0
        %v3959 = vadd.f32 0.0, %v3958
        %v3960 = vpop.f32.mrb[0].mxu0
        %3961 = vmatprep.mubr.f32.mxu0 0.0
        %3962 = vmatmul.mubr.f32.gmra.mrb[0].mxu0 %v3844
        %v3963 = vpop.f32.mrb[0].mxu0
        %v3964 = vadd.f32 0.0, %v3963
        %v3965 = vpop.f32.mrb[0].mxu0
        %3966 = vmatprep.mubr.f32.mxu0 0.0
        %3967 = vmatmul.mubr.f32.gmra.mrb[0].mxu0 %v3847
        %v3968 = vpop.f32.mrb[0].mxu0
        %v3969 = vadd.f32 0.0, %v3968
        %v3970 = vpop.f32.mrb[0].mxu0
        %3971 = vmatprep.mubr.f32.mxu0 0.0
        %3972 = vmatmul.mubr.f32.gmra.mrb[0].mxu0 %v3850
        %v3973 = vpop.f32.mrb[0].mxu0
        %v3974 = vadd.f32 0.0, %v3973
        %v3975 = vpop.f32.mrb[0].mxu0
        %3976 = vmatprep.mubr.f32.mxu0 0.0
        %3977 = vmatmul.mubr.f32.gmra.mrb[0].mxu0 %v3853
        %v3978 = vpop.f32.mrb[0].mxu0
        %v3979 = vadd.f32 0.0, %v3978
        %v3980 = vpop.f32.mrb[0].mxu0
        %3981 = vmatprep.mubr.f32.mxu0 0.0
        %3982 = vmatmul.mubr.f32.gmra.mrb[0].mxu0 %v3856
        %v3983 = vpop.f32.mrb[0].mxu0
        %v3984 = vadd.f32 0.0, %v3983
        %v3985 = vpop.f32.mrb[0].mxu0
        %3986 = vmatprep.mubr.f32.mxu0 0.0
        %3987 = vmatmul.mubr.f32.gmra.mrb[0].mxu0 %v3859
        %v3988 = vpop.f32.mrb[0].mxu0
        %v3989 = vadd.f32 0.0, %v3988
        %v3990 = vpop.f32.mrb[0].mxu0
        %3991 = vmatprep.mubr.f32.mxu0 0.0
        %3992 = vmatmul.mubr.f32.gmra.mrb[0].mxu0 %v3862
        %v3993 = vpop.f32.mrb[0].mxu0
        %v3994 = vadd.f32 0.0, %v3993
        %v3995 = vpop.f32.mrb[0].mxu0
        %3996 = vmatprep.mubr.f32.mxu0 0.0
        %3997 = vmatmul.mubr.f32.gmra.mrb[0].mxu0 %v3865
        %v3998 = vpop.f32.mrb[0].mxu0
        %v3999 = vadd.f32 0.0, %v3998
        %v4000 = vpop.f32.mrb[0].mxu0
        %4001 = vmatprep.mubr.f32.mxu0 0.0
        %4002 = vmatmul.mubr.f32.gmra.mrb[0].mxu0 %v3868
        %v4003 = vpop.f32.mrb[0].mxu0
        %v4004 = vadd.f32 0.0, %v4003
        %v4005 = vpop.f32.mrb[0].mxu0
        %4006 = vmatprep.mubr.f32.mxu0 0.0
        %4007 = vmatmul.mubr.f32.gmra.mrb[0].mxu0 %v3871
        %v4008 = vpop.f32.mrb[0].mxu0
        %v4009 = vadd.f32 0.0, %v4008
        %v4010 = vpop.f32.mrb[0].mxu0
        %4011 = vmatprep.mubr.f32.mxu0 0.0
        %4012 = vmatmul.mubr.f32.gmra.mrb[0].mxu0 %v3874
        %v4013 = vpop.f32.mrb[0].mxu0
        %v4014 = vadd.f32 0.0, %v4013
        %v4015 = vpop.f32.mrb[0].mxu0
        %4016 = vmatprep.mubr.f32.mxu0 0.0
        %4017 = vmatmul.mubr.f32.gmra.mrb[0].mxu0 %v3877
        %v4018 = vpop.f32.mrb[0].mxu0
        %v4019 = vadd.f32 0.0, %v4018
        %v4020 = vpop.f32.mrb[0].mxu0
        %4021 = vmatprep.mubr.f32.mxu0 0.0
        %4022 = vmatmul.mubr.f32.gmra.mrb[0].mxu0 %v3880
        %v4023 = vpop.f32.mrb[0].mxu0
        %v4024 = vadd.f32 0.0, %v4023
        %v4025 = vpop.f32.mrb[0].mxu0
        %4026 = vdwg.mxu0
        %s4027 = scalar_lea.vmem %s3, 128
        %v4028 = vld [vmem:[%s4027] sm:$0xff]
        %v4029 = vld [vmem:[%s4027 + $0x8] sm:$0xff]
        %v4030 = vld [vmem:[%s4027 + $0x10] sm:$0xff]
        %v4031 = vld [vmem:[%s4027 + $0x18] sm:$0xff]
        %s4032 = scalar_lea.vmem %s3, 160
        %v4033 = vld [vmem:[%s4032] sm:$0xff]
        %v4034 = vld [vmem:[%s4032 + $0x8] sm:$0xff]
        %v4035 = vld [vmem:[%s4032 + $0x10] sm:$0xff]
        %v4036 = vld [vmem:[%s4032 + $0x18] sm:$0xff]
        %v4038 = vsel %vm3630, %v3303, 0
        %v4041 = vsel %vm3630, %v3308, 0
        %v4044 = vsel %vm3630, %v3313, 0
        %v4047 = vsel %vm3630, %v3318, 0
        %v4050 = vsel %vm3630, %v3323, 0
        %v4053 = vsel %vm3630, %v3328, 0
        %v4056 = vsel %vm3630, %v3333, 0
        %v4059 = vsel %vm3630, %v3338, 0
        %v4062 = vsel %vm3630, %v3343, 0
        %v4065 = vsel %vm3630, %v3348, 0
        %v4068 = vsel %vm3630, %v3353, 0
        %v4071 = vsel %vm3630, %v3358, 0
        %v4074 = vsel %vm3630, %v3363, 0
        %v4077 = vsel %vm3630, %v3368, 0
        %v4080 = vsel %vm3630, %v3373, 0
        %v4083 = vsel %vm3630, %v3378, 0
        %4085 = vmatprep.subr.mxu0 0.0
        %4086 = vmatpush1.msra.mxu0 %v4033
        %4087 = vmatprep.subr.mxu0 0.0
        %4088 = vmatpush1.msra.mxu0 %v4034
        %4089 = vmatprep.subr.mxu0 0.0
        %4090 = vmatpush1.msra.mxu0 %v4035
        %4091 = vmatprep.subr.mxu0 0.0
        %4092 = vmatpush1.msra.mxu0 %v4036
        %4093 = vmatprep.subr.mxu0 0.0
        %4094 = vmatpush1.msra.mxu0 0.0
        %4095 = vmatprep.subr.mxu0 0.0
        %4096 = vmatpush1.msra.mxu0 0.0
        %4097 = vmatprep.subr.mxu0 0.0
        %4098 = vmatpush1.msra.mxu0 0.0
        %4099 = vmatprep.subr.mxu0 0.0
        %4100 = vmatpush1.msra.mxu0 0.0
        %4101 = vmatprep.subr.mxu0 0.0
        %4102 = vmatpush1.msra.mxu0 0.0
        %4103 = vmatprep.subr.mxu0 0.0
        %4104 = vmatpush1.msra.mxu0 0.0
        %4105 = vmatprep.subr.mxu0 0.0
        %4106 = vmatpush1.msra.mxu0 0.0
        %4107 = vmatprep.subr.mxu0 0.0
        %4108 = vmatpush1.msra.mxu0 0.0
        %4109 = vmatprep.subr.mxu0 0.0
        %4110 = vmatpush1.msra.mxu0 0.0
        %4111 = vmatprep.subr.mxu0 0.0
        %4112 = vmatpush1.msra.mxu0 0.0
        %4113 = vmatprep.subr.mxu0 0.0
        %4114 = vmatpush1.msra.mxu0 0.0
        %4115 = vmatprep.subr.mxu0 0.0
        %4116 = vmatpush1.msra.mxu0 0.0
        %4117 = vmatprep.subr.mxu0 0.0
        %4118 = vmatpush1.msra.mxu0 0.0
        %4119 = vmatprep.subr.mxu0 0.0
        %4120 = vmatpush1.msra.mxu0 0.0
        %4121 = vmatprep.subr.mxu0 0.0
        %4122 = vmatpush1.msra.mxu0 0.0
        %4123 = vmatprep.subr.mxu0 0.0
        %4124 = vmatpush1.msra.mxu0 0.0
        %4125 = vmatprep.subr.mxu0 0.0
        %4126 = vmatpush1.msra.mxu0 0.0
        %4127 = vmatprep.subr.mxu0 0.0
        %4128 = vmatpush1.msra.mxu0 0.0
        %4129 = vmatprep.subr.mxu0 0.0
        %4130 = vmatpush1.msra.mxu0 0.0
        %4131 = vmatprep.subr.mxu0 0.0
        %4132 = vmatpush1.msra.mxu0 0.0
        %4133 = vmatprep.subr.mxu0 0.0
        %4134 = vmatpush1.msra.mxu0 0.0
        %4135 = vmatprep.subr.mxu0 0.0
        %4136 = vmatpush1.msra.mxu0 0.0
        %4137 = vmatprep.subr.mxu0 0.0
        %4138 = vmatpush1.msra.mxu0 0.0
        %4139 = vmatprep.subr.mxu0 0.0
        %4140 = vmatpush1.msra.mxu0 0.0
        %4141 = vmatprep.subr.mxu0 0.0
        %4142 = vmatpush1.msra.mxu0 0.0
        %4143 = vmatprep.subr.mxu0 0.0
        %4144 = vmatpush1.msra.mxu0 0.0
        %4145 = vmatprep.subr.mxu0 0.0
        %4146 = vmatpush1.msra.mxu0 0.0
        %4147 = vmatprep.subr.mxu0 0.0
        %4148 = vmatpush1.msra.mxu0 0.0
        %4149 = vmatprep.mubr.f32.mxu0 0.0
        %4150 = vmatmul.mubr.f32.gmra.mrb[0].mxu0 %v4038
        %v4151 = vpop.f32.mrb[0].mxu0
        %v4152 = vadd.f32 0.0, %v4151
        %v4153 = vpop.f32.mrb[0].mxu0
        %4154 = vmatprep.mubr.f32.mxu0 0.0
        %4155 = vmatmul.mubr.f32.gmra.mrb[0].mxu0 %v4041
        %v4156 = vpop.f32.mrb[0].mxu0
        %v4157 = vadd.f32 0.0, %v4156
        %v4158 = vpop.f32.mrb[0].mxu0
        %4159 = vmatprep.mubr.f32.mxu0 0.0
        %4160 = vmatmul.mubr.f32.gmra.mrb[0].mxu0 %v4044
        %v4161 = vpop.f32.mrb[0].mxu0
        %v4162 = vadd.f32 0.0, %v4161
        %v4163 = vpop.f32.mrb[0].mxu0
        %4164 = vmatprep.mubr.f32.mxu0 0.0
        %4165 = vmatmul.mubr.f32.gmra.mrb[0].mxu0 %v4047
        %v4166 = vpop.f32.mrb[0].mxu0
        %v4167 = vadd.f32 0.0, %v4166
        %v4168 = vpop.f32.mrb[0].mxu0
        %4169 = vmatprep.mubr.f32.mxu0 0.0
        %4170 = vmatmul.mubr.f32.gmra.mrb[0].mxu0 %v4050
        %v4171 = vpop.f32.mrb[0].mxu0
        %v4172 = vadd.f32 0.0, %v4171
        %v4173 = vpop.f32.mrb[0].mxu0
        %4174 = vmatprep.mubr.f32.mxu0 0.0
        %4175 = vmatmul.mubr.f32.gmra.mrb[0].mxu0 %v4053
        %v4176 = vpop.f32.mrb[0].mxu0
        %v4177 = vadd.f32 0.0, %v4176
        %v4178 = vpop.f32.mrb[0].mxu0
        %4179 = vmatprep.mubr.f32.mxu0 0.0
        %4180 = vmatmul.mubr.f32.gmra.mrb[0].mxu0 %v4056
        %v4181 = vpop.f32.mrb[0].mxu0
        %v4182 = vadd.f32 0.0, %v4181
        %v4183 = vpop.f32.mrb[0].mxu0
        %4184 = vmatprep.mubr.f32.mxu0 0.0
        %4185 = vmatmul.mubr.f32.gmra.mrb[0].mxu0 %v4059
        %v4186 = vpop.f32.mrb[0].mxu0
        %v4187 = vadd.f32 0.0, %v4186
        %v4188 = vpop.f32.mrb[0].mxu0
        %4189 = vmatprep.mubr.f32.mxu0 0.0
        %4190 = vmatmul.mubr.f32.gmra.mrb[0].mxu0 %v4062
        %v4191 = vpop.f32.mrb[0].mxu0
        %v4192 = vadd.f32 0.0, %v4191
        %v4193 = vpop.f32.mrb[0].mxu0
        %4194 = vmatprep.mubr.f32.mxu0 0.0
        %4195 = vmatmul.mubr.f32.gmra.mrb[0].mxu0 %v4065
        %v4196 = vpop.f32.mrb[0].mxu0
        %v4197 = vadd.f32 0.0, %v4196
        %v4198 = vpop.f32.mrb[0].mxu0
        %4199 = vmatprep.mubr.f32.mxu0 0.0
        %4200 = vmatmul.mubr.f32.gmra.mrb[0].mxu0 %v4068
        %v4201 = vpop.f32.mrb[0].mxu0
        %v4202 = vadd.f32 0.0, %v4201
        %v4203 = vpop.f32.mrb[0].mxu0
        %4204 = vmatprep.mubr.f32.mxu0 0.0
        %4205 = vmatmul.mubr.f32.gmra.mrb[0].mxu0 %v4071
        %v4206 = vpop.f32.mrb[0].mxu0
        %v4207 = vadd.f32 0.0, %v4206
        %v4208 = vpop.f32.mrb[0].mxu0
        %4209 = vmatprep.mubr.f32.mxu0 0.0
        %4210 = vmatmul.mubr.f32.gmra.mrb[0].mxu0 %v4074
        %v4211 = vpop.f32.mrb[0].mxu0
        %v4212 = vadd.f32 0.0, %v4211
        %v4213 = vpop.f32.mrb[0].mxu0
        %4214 = vmatprep.mubr.f32.mxu0 0.0
        %4215 = vmatmul.mubr.f32.gmra.mrb[0].mxu0 %v4077
        %v4216 = vpop.f32.mrb[0].mxu0
        %v4217 = vadd.f32 0.0, %v4216
        %v4218 = vpop.f32.mrb[0].mxu0
        %4219 = vmatprep.mubr.f32.mxu0 0.0
        %4220 = vmatmul.mubr.f32.gmra.mrb[0].mxu0 %v4080
        %v4221 = vpop.f32.mrb[0].mxu0
        %v4222 = vadd.f32 0.0, %v4221
        %v4223 = vpop.f32.mrb[0].mxu0
        %4224 = vmatprep.mubr.f32.mxu0 0.0
        %4225 = vmatmul.mubr.f32.gmra.mrb[0].mxu0 %v4083
        %v4226 = vpop.f32.mrb[0].mxu0
        %v4227 = vadd.f32 0.0, %v4226
        %v4228 = vpop.f32.mrb[0].mxu0
        %4229 = vdwg.mxu0
        %s4230 = scalar_lea.vmem %s3, 192
        %v4231 = vld [vmem:[%s4230] sm:$0xff]
        %v4232 = vld [vmem:[%s4230 + $0x8] sm:$0xff]
        %v4233 = vld [vmem:[%s4230 + $0x10] sm:$0xff]
        %v4234 = vld [vmem:[%s4230 + $0x18] sm:$0xff]
        %s4235 = scalar_lea.vmem %s3, 224
        %v4236 = vld [vmem:[%s4235] sm:$0xff]
        %v4237 = vld [vmem:[%s4235 + $0x8] sm:$0xff]
        %v4238 = vld [vmem:[%s4235 + $0x10] sm:$0xff]
        %v4239 = vld [vmem:[%s4235 + $0x18] sm:$0xff]
        %v4241 = vsel %vm3630, %v3463, 0
        %v4244 = vsel %vm3630, %v3468, 0
        %v4247 = vsel %vm3630, %v3473, 0
        %v4250 = vsel %vm3630, %v3478, 0
        %v4253 = vsel %vm3630, %v3483, 0
        %v4256 = vsel %vm3630, %v3488, 0
        %v4259 = vsel %vm3630, %v3493, 0
        %v4262 = vsel %vm3630, %v3498, 0
        %v4265 = vsel %vm3630, %v3503, 0
        %v4268 = vsel %vm3630, %v3508, 0
        %v4271 = vsel %vm3630, %v3513, 0
        %v4274 = vsel %vm3630, %v3518, 0
        %v4277 = vsel %vm3630, %v3523, 0
        %v4280 = vsel %vm3630, %v3528, 0
        %v4283 = vsel %vm3630, %v3533, 0
        %v4286 = vsel %vm3630, %v3538, 0
        %4288 = vmatprep.subr.mxu0 0.0
        %4289 = vmatpush1.msra.mxu0 %v4236
        %4290 = vmatprep.subr.mxu0 0.0
        %4291 = vmatpush1.msra.mxu0 %v4237
        %4292 = vmatprep.subr.mxu0 0.0
        %4293 = vmatpush1.msra.mxu0 %v4238
        %4294 = vmatprep.subr.mxu0 0.0
        %4295 = vmatpush1.msra.mxu0 %v4239
        %4296 = vmatprep.subr.mxu0 0.0
        %4297 = vmatpush1.msra.mxu0 0.0
        %4298 = vmatprep.subr.mxu0 0.0
        %4299 = vmatpush1.msra.mxu0 0.0
        %4300 = vmatprep.subr.mxu0 0.0
        %4301 = vmatpush1.msra.mxu0 0.0
        %4302 = vmatprep.subr.mxu0 0.0
        %4303 = vmatpush1.msra.mxu0 0.0
        %4304 = vmatprep.subr.mxu0 0.0
        %4305 = vmatpush1.msra.mxu0 0.0
        %4306 = vmatprep.subr.mxu0 0.0
        %4307 = vmatpush1.msra.mxu0 0.0
        %4308 = vmatprep.subr.mxu0 0.0
        %4309 = vmatpush1.msra.mxu0 0.0
        %4310 = vmatprep.subr.mxu0 0.0
        %4311 = vmatpush1.msra.mxu0 0.0
        %4312 = vmatprep.subr.mxu0 0.0
        %4313 = vmatpush1.msra.mxu0 0.0
        %4314 = vmatprep.subr.mxu0 0.0
        %4315 = vmatpush1.msra.mxu0 0.0
        %4316 = vmatprep.subr.mxu0 0.0
        %4317 = vmatpush1.msra.mxu0 0.0
        %4318 = vmatprep.subr.mxu0 0.0
        %4319 = vmatpush1.msra.mxu0 0.0
        %4320 = vmatprep.subr.mxu0 0.0
        %4321 = vmatpush1.msra.mxu0 0.0
        %4322 = vmatprep.subr.mxu0 0.0
        %4323 = vmatpush1.msra.mxu0 0.0
        %4324 = vmatprep.subr.mxu0 0.0
        %4325 = vmatpush1.msra.mxu0 0.0
        %4326 = vmatprep.subr.mxu0 0.0
        %4327 = vmatpush1.msra.mxu0 0.0
        %4328 = vmatprep.subr.mxu0 0.0
        %4329 = vmatpush1.msra.mxu0 0.0
        %4330 = vmatprep.subr.mxu0 0.0
        %4331 = vmatpush1.msra.mxu0 0.0
        %4332 = vmatprep.subr.mxu0 0.0
        %4333 = vmatpush1.msra.mxu0 0.0
        %4334 = vmatprep.subr.mxu0 0.0
        %4335 = vmatpush1.msra.mxu0 0.0
        %4336 = vmatprep.subr.mxu0 0.0
        %4337 = vmatpush1.msra.mxu0 0.0
        %4338 = vmatprep.subr.mxu0 0.0
        %4339 = vmatpush1.msra.mxu0 0.0
        %4340 = vmatprep.subr.mxu0 0.0
        %4341 = vmatpush1.msra.mxu0 0.0
        %4342 = vmatprep.subr.mxu0 0.0
        %4343 = vmatpush1.msra.mxu0 0.0
        %4344 = vmatprep.subr.mxu0 0.0
        %4345 = vmatpush1.msra.mxu0 0.0
        %4346 = vmatprep.subr.mxu0 0.0
        %4347 = vmatpush1.msra.mxu0 0.0
        %4348 = vmatprep.subr.mxu0 0.0
        %4349 = vmatpush1.msra.mxu0 0.0
        %4350 = vmatprep.subr.mxu0 0.0
        %4351 = vmatpush1.msra.mxu0 0.0
        %4352 = vmatprep.mubr.f32.mxu0 0.0
        %4353 = vmatmul.mubr.f32.gmra.mrb[0].mxu0 %v4241
        %v4354 = vpop.f32.mrb[0].mxu0
        %v4355 = vadd.f32 0.0, %v4354
        %v4356 = vpop.f32.mrb[0].mxu0
        %4357 = vmatprep.mubr.f32.mxu0 0.0
        %4358 = vmatmul.mubr.f32.gmra.mrb[0].mxu0 %v4244
        %v4359 = vpop.f32.mrb[0].mxu0
        %v4360 = vadd.f32 0.0, %v4359
        %v4361 = vpop.f32.mrb[0].mxu0
        %4362 = vmatprep.mubr.f32.mxu0 0.0
        %4363 = vmatmul.mubr.f32.gmra.mrb[0].mxu0 %v4247
        %v4364 = vpop.f32.mrb[0].mxu0
        %v4365 = vadd.f32 0.0, %v4364
        %v4366 = vpop.f32.mrb[0].mxu0
        %4367 = vmatprep.mubr.f32.mxu0 0.0
        %4368 = vmatmul.mubr.f32.gmra.mrb[0].mxu0 %v4250
        %v4369 = vpop.f32.mrb[0].mxu0
        %v4370 = vadd.f32 0.0, %v4369
        %v4371 = vpop.f32.mrb[0].mxu0
        %4372 = vmatprep.mubr.f32.mxu0 0.0
        %4373 = vmatmul.mubr.f32.gmra.mrb[0].mxu0 %v4253
        %v4374 = vpop.f32.mrb[0].mxu0
        %v4375 = vadd.f32 0.0, %v4374
        %v4376 = vpop.f32.mrb[0].mxu0
        %4377 = vmatprep.mubr.f32.mxu0 0.0
        %4378 = vmatmul.mubr.f32.gmra.mrb[0].mxu0 %v4256
        %v4379 = vpop.f32.mrb[0].mxu0
        %v4380 = vadd.f32 0.0, %v4379
        %v4381 = vpop.f32.mrb[0].mxu0
        %4382 = vmatprep.mubr.f32.mxu0 0.0
        %4383 = vmatmul.mubr.f32.gmra.mrb[0].mxu0 %v4259
        %v4384 = vpop.f32.mrb[0].mxu0
        %v4385 = vadd.f32 0.0, %v4384
        %v4386 = vpop.f32.mrb[0].mxu0
        %4387 = vmatprep.mubr.f32.mxu0 0.0
        %4388 = vmatmul.mubr.f32.gmra.mrb[0].mxu0 %v4262
        %v4389 = vpop.f32.mrb[0].mxu0
        %v4390 = vadd.f32 0.0, %v4389
        %v4391 = vpop.f32.mrb[0].mxu0
        %4392 = vmatprep.mubr.f32.mxu0 0.0
        %4393 = vmatmul.mubr.f32.gmra.mrb[0].mxu0 %v4265
        %v4394 = vpop.f32.mrb[0].mxu0
        %v4395 = vadd.f32 0.0, %v4394
        %v4396 = vpop.f32.mrb[0].mxu0
        %4397 = vmatprep.mubr.f32.mxu0 0.0
        %4398 = vmatmul.mubr.f32.gmra.mrb[0].mxu0 %v4268
        %v4399 = vpop.f32.mrb[0].mxu0
        %v4400 = vadd.f32 0.0, %v4399
        %v4401 = vpop.f32.mrb[0].mxu0
        %4402 = vmatprep.mubr.f32.mxu0 0.0
        %4403 = vmatmul.mubr.f32.gmra.mrb[0].mxu0 %v4271
        %v4404 = vpop.f32.mrb[0].mxu0
        %v4405 = vadd.f32 0.0, %v4404
        %v4406 = vpop.f32.mrb[0].mxu0
        %4407 = vmatprep.mubr.f32.mxu0 0.0
        %4408 = vmatmul.mubr.f32.gmra.mrb[0].mxu0 %v4274
        %v4409 = vpop.f32.mrb[0].mxu0
        %v4410 = vadd.f32 0.0, %v4409
        %v4411 = vpop.f32.mrb[0].mxu0
        %4412 = vmatprep.mubr.f32.mxu0 0.0
        %4413 = vmatmul.mubr.f32.gmra.mrb[0].mxu0 %v4277
        %v4414 = vpop.f32.mrb[0].mxu0
        %v4415 = vadd.f32 0.0, %v4414
        %v4416 = vpop.f32.mrb[0].mxu0
        %4417 = vmatprep.mubr.f32.mxu0 0.0
        %4418 = vmatmul.mubr.f32.gmra.mrb[0].mxu0 %v4280
        %v4419 = vpop.f32.mrb[0].mxu0
        %v4420 = vadd.f32 0.0, %v4419
        %v4421 = vpop.f32.mrb[0].mxu0
        %4422 = vmatprep.mubr.f32.mxu0 0.0
        %4423 = vmatmul.mubr.f32.gmra.mrb[0].mxu0 %v4283
        %v4424 = vpop.f32.mrb[0].mxu0
        %v4425 = vadd.f32 0.0, %v4424
        %v4426 = vpop.f32.mrb[0].mxu0
        %4427 = vmatprep.mubr.f32.mxu0 0.0
        %4428 = vmatmul.mubr.f32.gmra.mrb[0].mxu0 %v4286
        %v4429 = vpop.f32.mrb[0].mxu0
        %v4430 = vadd.f32 0.0, %v4429
        %v4431 = vpop.f32.mrb[0].mxu0
        %4432 = vdwg.mxu0
        %s4433 = scalar_lea.vmem %s3, 256
        %v4434 = vld [vmem:[%s4433] sm:$0xff]
        %v4435 = vld [vmem:[%s4433 + $0x8] sm:$0xff]
        %v4436 = vld [vmem:[%s4433 + $0x10] sm:$0xff]
        %v4437 = vld [vmem:[%s4433 + $0x18] sm:$0xff]
        %v4439 = vsel %vm3630, %v3543, 0
        %v4442 = vsel %vm3630, %v3548, 0
        %v4445 = vsel %vm3630, %v3553, 0
        %v4448 = vsel %vm3630, %v3558, 0
        %v4451 = vsel %vm3630, %v3563, 0
        %v4454 = vsel %vm3630, %v3568, 0
        %v4457 = vsel %vm3630, %v3573, 0
        %v4460 = vsel %vm3630, %v3578, 0
        %v4463 = vsel %vm3630, %v3583, 0
        %v4466 = vsel %vm3630, %v3588, 0
        %v4469 = vsel %vm3630, %v3593, 0
        %v4472 = vsel %vm3630, %v3598, 0
        %v4475 = vsel %vm3630, %v3603, 0
        %v4478 = vsel %vm3630, %v3608, 0
        %v4481 = vsel %vm3630, %v3613, 0
        %v4484 = vsel %vm3630, %v3618, 0
        %4486 = vmatprep.subr.mxu0 0.0
        %4487 = vmatpush1.msra.mxu0 %v4434
        %4488 = vmatprep.subr.mxu0 0.0
        %4489 = vmatpush1.msra.mxu0 %v4435
        %4490 = vmatprep.subr.mxu0 0.0
        %4491 = vmatpush1.msra.mxu0 %v4436
        %4492 = vmatprep.subr.mxu0 0.0
        %4493 = vmatpush1.msra.mxu0 %v4437
        %4494 = vmatprep.subr.mxu0 0.0
        %4495 = vmatpush1.msra.mxu0 0.0
        %4496 = vmatprep.subr.mxu0 0.0
        %4497 = vmatpush1.msra.mxu0 0.0
        %4498 = vmatprep.subr.mxu0 0.0
        %4499 = vmatpush1.msra.mxu0 0.0
        %4500 = vmatprep.subr.mxu0 0.0
        %4501 = vmatpush1.msra.mxu0 0.0
        %4502 = vmatprep.subr.mxu0 0.0
        %4503 = vmatpush1.msra.mxu0 0.0
        %4504 = vmatprep.subr.mxu0 0.0
        %4505 = vmatpush1.msra.mxu0 0.0
        %4506 = vmatprep.subr.mxu0 0.0
        %4507 = vmatpush1.msra.mxu0 0.0
        %4508 = vmatprep.subr.mxu0 0.0
        %4509 = vmatpush1.msra.mxu0 0.0
        %4510 = vmatprep.subr.mxu0 0.0
        %4511 = vmatpush1.msra.mxu0 0.0
        %4512 = vmatprep.subr.mxu0 0.0
        %4513 = vmatpush1.msra.mxu0 0.0
        %4514 = vmatprep.subr.mxu0 0.0
        %4515 = vmatpush1.msra.mxu0 0.0
        %4516 = vmatprep.subr.mxu0 0.0
        %4517 = vmatpush1.msra.mxu0 0.0
        %4518 = vmatprep.subr.mxu0 0.0
        %4519 = vmatpush1.msra.mxu0 0.0
        %4520 = vmatprep.subr.mxu0 0.0
        %4521 = vmatpush1.msra.mxu0 0.0
        %4522 = vmatprep.subr.mxu0 0.0
        %4523 = vmatpush1.msra.mxu0 0.0
        %4524 = vmatprep.subr.mxu0 0.0
        %4525 = vmatpush1.msra.mxu0 0.0
        %4526 = vmatprep.subr.mxu0 0.0
        %4527 = vmatpush1.msra.mxu0 0.0
        %4528 = vmatprep.subr.mxu0 0.0
        %4529 = vmatpush1.msra.mxu0 0.0
        %4530 = vmatprep.subr.mxu0 0.0
        %4531 = vmatpush1.msra.mxu0 0.0
        %4532 = vmatprep.subr.mxu0 0.0
        %4533 = vmatpush1.msra.mxu0 0.0
        %4534 = vmatprep.subr.mxu0 0.0
        %4535 = vmatpush1.msra.mxu0 0.0
        %4536 = vmatprep.subr.mxu0 0.0
        %4537 = vmatpush1.msra.mxu0 0.0
        %4538 = vmatprep.subr.mxu0 0.0
        %4539 = vmatpush1.msra.mxu0 0.0
        %4540 = vmatprep.subr.mxu0 0.0
        %4541 = vmatpush1.msra.mxu0 0.0
        %4542 = vmatprep.subr.mxu0 0.0
        %4543 = vmatpush1.msra.mxu0 0.0
        %4544 = vmatprep.subr.mxu0 0.0
        %4545 = vmatpush1.msra.mxu0 0.0
        %4546 = vmatprep.subr.mxu0 0.0
        %4547 = vmatpush1.msra.mxu0 0.0
        %4548 = vmatprep.subr.mxu0 0.0
        %4549 = vmatpush1.msra.mxu0 0.0
        %4550 = vmatprep.mubr.f32.mxu0 0.0
        %4551 = vmatmul.mubr.f32.gmra.mrb[0].mxu0 %v4439
        %v4552 = vpop.f32.mrb[0].mxu0
        %v4553 = vadd.f32 0.0, %v4552
        %v4554 = vpop.f32.mrb[0].mxu0
        %4555 = vmatprep.mubr.f32.mxu0 0.0
        %4556 = vmatmul.mubr.f32.gmra.mrb[0].mxu0 %v4442
        %v4557 = vpop.f32.mrb[0].mxu0
        %v4558 = vadd.f32 0.0, %v4557
        %v4559 = vpop.f32.mrb[0].mxu0
        %4560 = vmatprep.mubr.f32.mxu0 0.0
        %4561 = vmatmul.mubr.f32.gmra.mrb[0].mxu0 %v4445
        %v4562 = vpop.f32.mrb[0].mxu0
        %v4563 = vadd.f32 0.0, %v4562
        %v4564 = vpop.f32.mrb[0].mxu0
        %4565 = vmatprep.mubr.f32.mxu0 0.0
        %4566 = vmatmul.mubr.f32.gmra.mrb[0].mxu0 %v4448
        %v4567 = vpop.f32.mrb[0].mxu0
        %v4568 = vadd.f32 0.0, %v4567
        %v4569 = vpop.f32.mrb[0].mxu0
        %4570 = vmatprep.mubr.f32.mxu0 0.0
        %4571 = vmatmul.mubr.f32.gmra.mrb[0].mxu0 %v4451
        %v4572 = vpop.f32.mrb[0].mxu0
        %v4573 = vadd.f32 0.0, %v4572
        %v4574 = vpop.f32.mrb[0].mxu0
        %4575 = vmatprep.mubr.f32.mxu0 0.0
        %4576 = vmatmul.mubr.f32.gmra.mrb[0].mxu0 %v4454
        %v4577 = vpop.f32.mrb[0].mxu0
        %v4578 = vadd.f32 0.0, %v4577
        %v4579 = vpop.f32.mrb[0].mxu0
        %4580 = vmatprep.mubr.f32.mxu0 0.0
        %4581 = vmatmul.mubr.f32.gmra.mrb[0].mxu0 %v4457
        %v4582 = vpop.f32.mrb[0].mxu0
        %v4583 = vadd.f32 0.0, %v4582
        %v4584 = vpop.f32.mrb[0].mxu0
        %4585 = vmatprep.mubr.f32.mxu0 0.0
        %4586 = vmatmul.mubr.f32.gmra.mrb[0].mxu0 %v4460
        %v4587 = vpop.f32.mrb[0].mxu0
        %v4588 = vadd.f32 0.0, %v4587
        %v4589 = vpop.f32.mrb[0].mxu0
        %4590 = vmatprep.mubr.f32.mxu0 0.0
        %4591 = vmatmul.mubr.f32.gmra.mrb[0].mxu0 %v4463
        %v4592 = vpop.f32.mrb[0].mxu0
        %v4593 = vadd.f32 0.0, %v4592
        %v4594 = vpop.f32.mrb[0].mxu0
        %4595 = vmatprep.mubr.f32.mxu0 0.0
        %4596 = vmatmul.mubr.f32.gmra.mrb[0].mxu0 %v4466
        %v4597 = vpop.f32.mrb[0].mxu0
        %v4598 = vadd.f32 0.0, %v4597
        %v4599 = vpop.f32.mrb[0].mxu0
        %4600 = vmatprep.mubr.f32.mxu0 0.0
        %4601 = vmatmul.mubr.f32.gmra.mrb[0].mxu0 %v4469
        %v4602 = vpop.f32.mrb[0].mxu0
        %v4603 = vadd.f32 0.0, %v4602
        %v4604 = vpop.f32.mrb[0].mxu0
        %4605 = vmatprep.mubr.f32.mxu0 0.0
        %4606 = vmatmul.mubr.f32.gmra.mrb[0].mxu0 %v4472
        %v4607 = vpop.f32.mrb[0].mxu0
        %v4608 = vadd.f32 0.0, %v4607
        %v4609 = vpop.f32.mrb[0].mxu0
        %4610 = vmatprep.mubr.f32.mxu0 0.0
        %4611 = vmatmul.mubr.f32.gmra.mrb[0].mxu0 %v4475
        %v4612 = vpop.f32.mrb[0].mxu0
        %v4613 = vadd.f32 0.0, %v4612
        %v4614 = vpop.f32.mrb[0].mxu0
        %4615 = vmatprep.mubr.f32.mxu0 0.0
        %4616 = vmatmul.mubr.f32.gmra.mrb[0].mxu0 %v4478
        %v4617 = vpop.f32.mrb[0].mxu0
        %v4618 = vadd.f32 0.0, %v4617
        %v4619 = vpop.f32.mrb[0].mxu0
        %4620 = vmatprep.mubr.f32.mxu0 0.0
        %4621 = vmatmul.mubr.f32.gmra.mrb[0].mxu0 %v4481
        %v4622 = vpop.f32.mrb[0].mxu0
        %v4623 = vadd.f32 0.0, %v4622
        %v4624 = vpop.f32.mrb[0].mxu0
        %4625 = vmatprep.mubr.f32.mxu0 0.0
        %4626 = vmatmul.mubr.f32.gmra.mrb[0].mxu0 %v4484
        %v4627 = vpop.f32.mrb[0].mxu0
        %v4628 = vadd.f32 0.0, %v4627
        %v4629 = vpop.f32.mrb[0].mxu0
        %4630 = vdwg.mxu0
        %v4632 = vsel %vm3630, %v2903, 0
        %v4635 = vsel %vm3630, %v2908, 0
        %v4638 = vsel %vm3630, %v2913, 0
        %v4641 = vsel %vm3630, %v2918, 0
        %v4644 = vsel %vm3630, %v2923, 0
        %v4647 = vsel %vm3630, %v2928, 0
        %v4650 = vsel %vm3630, %v2933, 0
        %v4653 = vsel %vm3630, %v2938, 0
        %v4656 = vsel %vm3630, %v2943, 0
        %v4659 = vsel %vm3630, %v2948, 0
        %v4662 = vsel %vm3630, %v2953, 0
        %v4665 = vsel %vm3630, %v2958, 0
        %v4668 = vsel %vm3630, %v2963, 0
        %v4671 = vsel %vm3630, %v2968, 0
        %v4674 = vsel %vm3630, %v2973, 0
        %v4677 = vsel %vm3630, %v2978, 0
        %4679 = vmatprep.subr.mxu0 0.0
        %4680 = vmatpush1.msra.mxu0 %v3621
        %4681 = vmatprep.subr.mxu0 0.0
        %4682 = vmatpush1.msra.mxu0 %v3622
        %4683 = vmatprep.subr.mxu0 0.0
        %4684 = vmatpush1.msra.mxu0 %v3623
        %4685 = vmatprep.subr.mxu0 0.0
        %4686 = vmatpush1.msra.mxu0 %v3624
        %4687 = vmatprep.subr.mxu0 0.0
        %4688 = vmatpush1.msra.mxu0 0.0
        %4689 = vmatprep.subr.mxu0 0.0
        %4690 = vmatpush1.msra.mxu0 0.0
        %4691 = vmatprep.subr.mxu0 0.0
        %4692 = vmatpush1.msra.mxu0 0.0
        %4693 = vmatprep.subr.mxu0 0.0
        %4694 = vmatpush1.msra.mxu0 0.0
        %4695 = vmatprep.subr.mxu0 0.0
        %4696 = vmatpush1.msra.mxu0 0.0
        %4697 = vmatprep.subr.mxu0 0.0
        %4698 = vmatpush1.msra.mxu0 0.0
        %4699 = vmatprep.subr.mxu0 0.0
        %4700 = vmatpush1.msra.mxu0 0.0
        %4701 = vmatprep.subr.mxu0 0.0
        %4702 = vmatpush1.msra.mxu0 0.0
        %4703 = vmatprep.subr.mxu0 0.0
        %4704 = vmatpush1.msra.mxu0 0.0
        %4705 = vmatprep.subr.mxu0 0.0
        %4706 = vmatpush1.msra.mxu0 0.0
        %4707 = vmatprep.subr.mxu0 0.0
        %4708 = vmatpush1.msra.mxu0 0.0
        %4709 = vmatprep.subr.mxu0 0.0
        %4710 = vmatpush1.msra.mxu0 0.0
        %4711 = vmatprep.subr.mxu0 0.0
        %4712 = vmatpush1.msra.mxu0 0.0
        %4713 = vmatprep.subr.mxu0 0.0
        %4714 = vmatpush1.msra.mxu0 0.0
        %4715 = vmatprep.subr.mxu0 0.0
        %4716 = vmatpush1.msra.mxu0 0.0
        %4717 = vmatprep.subr.mxu0 0.0
        %4718 = vmatpush1.msra.mxu0 0.0
        %4719 = vmatprep.subr.mxu0 0.0
        %4720 = vmatpush1.msra.mxu0 0.0
        %4721 = vmatprep.subr.mxu0 0.0
        %4722 = vmatpush1.msra.mxu0 0.0
        %4723 = vmatprep.subr.mxu0 0.0
        %4724 = vmatpush1.msra.mxu0 0.0
        %4725 = vmatprep.subr.mxu0 0.0
        %4726 = vmatpush1.msra.mxu0 0.0
        %4727 = vmatprep.subr.mxu0 0.0
        %4728 = vmatpush1.msra.mxu0 0.0
        %4729 = vmatprep.subr.mxu0 0.0
        %4730 = vmatpush1.msra.mxu0 0.0
        %4731 = vmatprep.subr.mxu0 0.0
        %4732 = vmatpush1.msra.mxu0 0.0
        %4733 = vmatprep.subr.mxu0 0.0
        %4734 = vmatpush1.msra.mxu0 0.0
        %4735 = vmatprep.subr.mxu0 0.0
        %4736 = vmatpush1.msra.mxu0 0.0
        %4737 = vmatprep.subr.mxu0 0.0
        %4738 = vmatpush1.msra.mxu0 0.0
        %4739 = vmatprep.subr.mxu0 0.0
        %4740 = vmatpush1.msra.mxu0 0.0
        %4741 = vmatprep.subr.mxu0 0.0
        %4742 = vmatpush1.msra.mxu0 0.0
        %4743 = vmatprep.mubr.f32.mxu0 0.0
        %4744 = vmatmul.mubr.f32.gmra.mrb[0].mxu0 %v4632
        %v4745 = vpop.f32.mrb[0].mxu0
        %v4746 = vadd.f32 %v3746, %v4745
        %v4747 = vpop.f32.mrb[0].mxu0
        %4748 = vmatprep.mubr.f32.mxu0 0.0
        %4749 = vmatmul.mubr.f32.gmra.mrb[0].mxu0 %v4635
        %v4750 = vpop.f32.mrb[0].mxu0
        %v4751 = vadd.f32 %v3751, %v4750
        %v4752 = vpop.f32.mrb[0].mxu0
        %4753 = vmatprep.mubr.f32.mxu0 0.0
        %4754 = vmatmul.mubr.f32.gmra.mrb[0].mxu0 %v4638
        %v4755 = vpop.f32.mrb[0].mxu0
        %v4756 = vadd.f32 %v3756, %v4755
        %v4757 = vpop.f32.mrb[0].mxu0
        %4758 = vmatprep.mubr.f32.mxu0 0.0
        %4759 = vmatmul.mubr.f32.gmra.mrb[0].mxu0 %v4641
        %v4760 = vpop.f32.mrb[0].mxu0
        %v4761 = vadd.f32 %v3761, %v4760
        %v4762 = vpop.f32.mrb[0].mxu0
        %4763 = vmatprep.mubr.f32.mxu0 0.0
        %4764 = vmatmul.mubr.f32.gmra.mrb[0].mxu0 %v4644
        %v4765 = vpop.f32.mrb[0].mxu0
        %v4766 = vadd.f32 %v3766, %v4765
        %v4767 = vpop.f32.mrb[0].mxu0
        %4768 = vmatprep.mubr.f32.mxu0 0.0
        %4769 = vmatmul.mubr.f32.gmra.mrb[0].mxu0 %v4647
        %v4770 = vpop.f32.mrb[0].mxu0
        %v4771 = vadd.f32 %v3771, %v4770
        %v4772 = vpop.f32.mrb[0].mxu0
        %4773 = vmatprep.mubr.f32.mxu0 0.0
        %4774 = vmatmul.mubr.f32.gmra.mrb[0].mxu0 %v4650
        %v4775 = vpop.f32.mrb[0].mxu0
        %v4776 = vadd.f32 %v3776, %v4775
        %v4777 = vpop.f32.mrb[0].mxu0
        %4778 = vmatprep.mubr.f32.mxu0 0.0
        %4779 = vmatmul.mubr.f32.gmra.mrb[0].mxu0 %v4653
        %v4780 = vpop.f32.mrb[0].mxu0
        %v4781 = vadd.f32 %v3781, %v4780
        %v4782 = vpop.f32.mrb[0].mxu0
        %4783 = vmatprep.mubr.f32.mxu0 0.0
        %4784 = vmatmul.mubr.f32.gmra.mrb[0].mxu0 %v4656
        %v4785 = vpop.f32.mrb[0].mxu0
        %v4786 = vadd.f32 %v3786, %v4785
        %v4787 = vpop.f32.mrb[0].mxu0
        %4788 = vmatprep.mubr.f32.mxu0 0.0
        %4789 = vmatmul.mubr.f32.gmra.mrb[0].mxu0 %v4659
        %v4790 = vpop.f32.mrb[0].mxu0
        %v4791 = vadd.f32 %v3791, %v4790
        %v4792 = vpop.f32.mrb[0].mxu0
        %4793 = vmatprep.mubr.f32.mxu0 0.0
        %4794 = vmatmul.mubr.f32.gmra.mrb[0].mxu0 %v4662
        %v4795 = vpop.f32.mrb[0].mxu0
        %v4796 = vadd.f32 %v3796, %v4795
        %v4797 = vpop.f32.mrb[0].mxu0
        %4798 = vmatprep.mubr.f32.mxu0 0.0
        %4799 = vmatmul.mubr.f32.gmra.mrb[0].mxu0 %v4665
        %v4800 = vpop.f32.mrb[0].mxu0
        %v4801 = vadd.f32 %v3801, %v4800
        %v4802 = vpop.f32.mrb[0].mxu0
        %4803 = vmatprep.mubr.f32.mxu0 0.0
        %4804 = vmatmul.mubr.f32.gmra.mrb[0].mxu0 %v4668
        %v4805 = vpop.f32.mrb[0].mxu0
        %v4806 = vadd.f32 %v3806, %v4805
        %v4807 = vpop.f32.mrb[0].mxu0
        %4808 = vmatprep.mubr.f32.mxu0 0.0
        %4809 = vmatmul.mubr.f32.gmra.mrb[0].mxu0 %v4671
        %v4810 = vpop.f32.mrb[0].mxu0
        %v4811 = vadd.f32 %v3811, %v4810
        %v4812 = vpop.f32.mrb[0].mxu0
        %4813 = vmatprep.mubr.f32.mxu0 0.0
        %4814 = vmatmul.mubr.f32.gmra.mrb[0].mxu0 %v4674
        %v4815 = vpop.f32.mrb[0].mxu0
        %v4816 = vadd.f32 %v3816, %v4815
        %v4817 = vpop.f32.mrb[0].mxu0
        %4818 = vmatprep.mubr.f32.mxu0 0.0
        %4819 = vmatmul.mubr.f32.gmra.mrb[0].mxu0 %v4677
        %v4820 = vpop.f32.mrb[0].mxu0
        %v4821 = vadd.f32 %v3821, %v4820
        %v4822 = vpop.f32.mrb[0].mxu0
        %4823 = vdwg.mxu0
        %v4825 = vsel %vm3630, %v3063, 0
        %v4828 = vsel %vm3630, %v3068, 0
        %v4831 = vsel %vm3630, %v3073, 0
        %v4834 = vsel %vm3630, %v3078, 0
        %v4837 = vsel %vm3630, %v3083, 0
        %v4840 = vsel %vm3630, %v3088, 0
        %v4843 = vsel %vm3630, %v3093, 0
        %v4846 = vsel %vm3630, %v3098, 0
        %v4849 = vsel %vm3630, %v3103, 0
        %v4852 = vsel %vm3630, %v3108, 0
        %v4855 = vsel %vm3630, %v3113, 0
        %v4858 = vsel %vm3630, %v3118, 0
        %v4861 = vsel %vm3630, %v3123, 0
        %v4864 = vsel %vm3630, %v3128, 0
        %v4867 = vsel %vm3630, %v3133, 0
        %v4870 = vsel %vm3630, %v3138, 0
        %4872 = vmatprep.subr.mxu0 0.0
        %4873 = vmatpush1.msra.mxu0 %v3825
        %4874 = vmatprep.subr.mxu0 0.0
        %4875 = vmatpush1.msra.mxu0 %v3826
        %4876 = vmatprep.subr.mxu0 0.0
        %4877 = vmatpush1.msra.mxu0 %v3827
        %4878 = vmatprep.subr.mxu0 0.0
        %4879 = vmatpush1.msra.mxu0 %v3828
        %4880 = vmatprep.subr.mxu0 0.0
        %4881 = vmatpush1.msra.mxu0 0.0
        %4882 = vmatprep.subr.mxu0 0.0
        %4883 = vmatpush1.msra.mxu0 0.0
        %4884 = vmatprep.subr.mxu0 0.0
        %4885 = vmatpush1.msra.mxu0 0.0
        %4886 = vmatprep.subr.mxu0 0.0
        %4887 = vmatpush1.msra.mxu0 0.0
        %4888 = vmatprep.subr.mxu0 0.0
        %4889 = vmatpush1.msra.mxu0 0.0
        %4890 = vmatprep.subr.mxu0 0.0
        %4891 = vmatpush1.msra.mxu0 0.0
        %4892 = vmatprep.subr.mxu0 0.0
        %4893 = vmatpush1.msra.mxu0 0.0
        %4894 = vmatprep.subr.mxu0 0.0
        %4895 = vmatpush1.msra.mxu0 0.0
        %4896 = vmatprep.subr.mxu0 0.0
        %4897 = vmatpush1.msra.mxu0 0.0
        %4898 = vmatprep.subr.mxu0 0.0
        %4899 = vmatpush1.msra.mxu0 0.0
        %4900 = vmatprep.subr.mxu0 0.0
        %4901 = vmatpush1.msra.mxu0 0.0
        %4902 = vmatprep.subr.mxu0 0.0
        %4903 = vmatpush1.msra.mxu0 0.0
        %4904 = vmatprep.subr.mxu0 0.0
        %4905 = vmatpush1.msra.mxu0 0.0
        %4906 = vmatprep.subr.mxu0 0.0
        %4907 = vmatpush1.msra.mxu0 0.0
        %4908 = vmatprep.subr.mxu0 0.0
        %4909 = vmatpush1.msra.mxu0 0.0
        %4910 = vmatprep.subr.mxu0 0.0
        %4911 = vmatpush1.msra.mxu0 0.0
        %4912 = vmatprep.subr.mxu0 0.0
        %4913 = vmatpush1.msra.mxu0 0.0
        %4914 = vmatprep.subr.mxu0 0.0
        %4915 = vmatpush1.msra.mxu0 0.0
        %4916 = vmatprep.subr.mxu0 0.0
        %4917 = vmatpush1.msra.mxu0 0.0
        %4918 = vmatprep.subr.mxu0 0.0
        %4919 = vmatpush1.msra.mxu0 0.0
        %4920 = vmatprep.subr.mxu0 0.0
        %4921 = vmatpush1.msra.mxu0 0.0
        %4922 = vmatprep.subr.mxu0 0.0
        %4923 = vmatpush1.msra.mxu0 0.0
        %4924 = vmatprep.subr.mxu0 0.0
        %4925 = vmatpush1.msra.mxu0 0.0
        %4926 = vmatprep.subr.mxu0 0.0
        %4927 = vmatpush1.msra.mxu0 0.0
        %4928 = vmatprep.subr.mxu0 0.0
        %4929 = vmatpush1.msra.mxu0 0.0
        %4930 = vmatprep.subr.mxu0 0.0
        %4931 = vmatpush1.msra.mxu0 0.0
        %4932 = vmatprep.subr.mxu0 0.0
        %4933 = vmatpush1.msra.mxu0 0.0
        %4934 = vmatprep.subr.mxu0 0.0
        %4935 = vmatpush1.msra.mxu0 0.0
        %4936 = vmatprep.mubr.f32.mxu0 0.0
        %4937 = vmatmul.mubr.f32.gmra.mrb[0].mxu0 %v4825
        %v4938 = vpop.f32.mrb[0].mxu0
        %v4939 = vadd.f32 %v3949, %v4938
        %v4940 = vpop.f32.mrb[0].mxu0
        %4941 = vmatprep.mubr.f32.mxu0 0.0
        %4942 = vmatmul.mubr.f32.gmra.mrb[0].mxu0 %v4828
        %v4943 = vpop.f32.mrb[0].mxu0
        %v4944 = vadd.f32 %v3954, %v4943
        %v4945 = vpop.f32.mrb[0].mxu0
        %4946 = vmatprep.mubr.f32.mxu0 0.0
        %4947 = vmatmul.mubr.f32.gmra.mrb[0].mxu0 %v4831
        %v4948 = vpop.f32.mrb[0].mxu0
        %v4949 = vadd.f32 %v3959, %v4948
        %v4950 = vpop.f32.mrb[0].mxu0
        %4951 = vmatprep.mubr.f32.mxu0 0.0
        %4952 = vmatmul.mubr.f32.gmra.mrb[0].mxu0 %v4834
        %v4953 = vpop.f32.mrb[0].mxu0
        %v4954 = vadd.f32 %v3964, %v4953
        %v4955 = vpop.f32.mrb[0].mxu0
        %4956 = vmatprep.mubr.f32.mxu0 0.0
        %4957 = vmatmul.mubr.f32.gmra.mrb[0].mxu0 %v4837
        %v4958 = vpop.f32.mrb[0].mxu0
        %v4959 = vadd.f32 %v3969, %v4958
        %v4960 = vpop.f32.mrb[0].mxu0
        %4961 = vmatprep.mubr.f32.mxu0 0.0
        %4962 = vmatmul.mubr.f32.gmra.mrb[0].mxu0 %v4840
        %v4963 = vpop.f32.mrb[0].mxu0
        %v4964 = vadd.f32 %v3974, %v4963
        %v4965 = vpop.f32.mrb[0].mxu0
        %4966 = vmatprep.mubr.f32.mxu0 0.0
        %4967 = vmatmul.mubr.f32.gmra.mrb[0].mxu0 %v4843
        %v4968 = vpop.f32.mrb[0].mxu0
        %v4969 = vadd.f32 %v3979, %v4968
        %v4970 = vpop.f32.mrb[0].mxu0
        %4971 = vmatprep.mubr.f32.mxu0 0.0
        %4972 = vmatmul.mubr.f32.gmra.mrb[0].mxu0 %v4846
        %v4973 = vpop.f32.mrb[0].mxu0
        %v4974 = vadd.f32 %v3984, %v4973
        %v4975 = vpop.f32.mrb[0].mxu0
        %4976 = vmatprep.mubr.f32.mxu0 0.0
        %4977 = vmatmul.mubr.f32.gmra.mrb[0].mxu0 %v4849
        %v4978 = vpop.f32.mrb[0].mxu0
        %v4979 = vadd.f32 %v3989, %v4978
        %v4980 = vpop.f32.mrb[0].mxu0
        %4981 = vmatprep.mubr.f32.mxu0 0.0
        %4982 = vmatmul.mubr.f32.gmra.mrb[0].mxu0 %v4852
        %v4983 = vpop.f32.mrb[0].mxu0
        %v4984 = vadd.f32 %v3994, %v4983
        %v4985 = vpop.f32.mrb[0].mxu0
        %4986 = vmatprep.mubr.f32.mxu0 0.0
        %4987 = vmatmul.mubr.f32.gmra.mrb[0].mxu0 %v4855
        %v4988 = vpop.f32.mrb[0].mxu0
        %v4989 = vadd.f32 %v3999, %v4988
        %v4990 = vpop.f32.mrb[0].mxu0
        %4991 = vmatprep.mubr.f32.mxu0 0.0
        %4992 = vmatmul.mubr.f32.gmra.mrb[0].mxu0 %v4858
        %v4993 = vpop.f32.mrb[0].mxu0
        %v4994 = vadd.f32 %v4004, %v4993
        %v4995 = vpop.f32.mrb[0].mxu0
        %4996 = vmatprep.mubr.f32.mxu0 0.0
        %4997 = vmatmul.mubr.f32.gmra.mrb[0].mxu0 %v4861
        %v4998 = vpop.f32.mrb[0].mxu0
        %v4999 = vadd.f32 %v4009, %v4998
        %v5000 = vpop.f32.mrb[0].mxu0
        %5001 = vmatprep.mubr.f32.mxu0 0.0
        %5002 = vmatmul.mubr.f32.gmra.mrb[0].mxu0 %v4864
        %v5003 = vpop.f32.mrb[0].mxu0
        %v5004 = vadd.f32 %v4014, %v5003
        %v5005 = vpop.f32.mrb[0].mxu0
        %5006 = vmatprep.mubr.f32.mxu0 0.0
        %5007 = vmatmul.mubr.f32.gmra.mrb[0].mxu0 %v4867
        %v5008 = vpop.f32.mrb[0].mxu0
        %v5009 = vadd.f32 %v4019, %v5008
        %v5010 = vpop.f32.mrb[0].mxu0
        %5011 = vmatprep.mubr.f32.mxu0 0.0
        %5012 = vmatmul.mubr.f32.gmra.mrb[0].mxu0 %v4870
        %v5013 = vpop.f32.mrb[0].mxu0
        %v5014 = vadd.f32 %v4024, %v5013
        %v5015 = vpop.f32.mrb[0].mxu0
        %5016 = vdwg.mxu0
        %v5018 = vsel %vm3630, %v3223, 0
        %v5021 = vsel %vm3630, %v3228, 0
        %v5024 = vsel %vm3630, %v3233, 0
        %v5027 = vsel %vm3630, %v3238, 0
        %v5030 = vsel %vm3630, %v3243, 0
        %v5033 = vsel %vm3630, %v3248, 0
        %v5036 = vsel %vm3630, %v3253, 0
        %v5039 = vsel %vm3630, %v3258, 0
        %v5042 = vsel %vm3630, %v3263, 0
        %v5045 = vsel %vm3630, %v3268, 0
        %v5048 = vsel %vm3630, %v3273, 0
        %v5051 = vsel %vm3630, %v3278, 0
        %v5054 = vsel %vm3630, %v3283, 0
        %v5057 = vsel %vm3630, %v3288, 0
        %v5060 = vsel %vm3630, %v3293, 0
        %v5063 = vsel %vm3630, %v3298, 0
        %5065 = vmatprep.subr.mxu0 0.0
        %5066 = vmatpush1.msra.mxu0 %v4028
        %5067 = vmatprep.subr.mxu0 0.0
        %5068 = vmatpush1.msra.mxu0 %v4029
        %5069 = vmatprep.subr.mxu0 0.0
        %5070 = vmatpush1.msra.mxu0 %v4030
        %5071 = vmatprep.subr.mxu0 0.0
        %5072 = vmatpush1.msra.mxu0 %v4031
        %5073 = vmatprep.subr.mxu0 0.0
        %5074 = vmatpush1.msra.mxu0 0.0
        %5075 = vmatprep.subr.mxu0 0.0
        %5076 = vmatpush1.msra.mxu0 0.0
        %5077 = vmatprep.subr.mxu0 0.0
        %5078 = vmatpush1.msra.mxu0 0.0
        %5079 = vmatprep.subr.mxu0 0.0
        %5080 = vmatpush1.msra.mxu0 0.0
        %5081 = vmatprep.subr.mxu0 0.0
        %5082 = vmatpush1.msra.mxu0 0.0
        %5083 = vmatprep.subr.mxu0 0.0
        %5084 = vmatpush1.msra.mxu0 0.0
        %5085 = vmatprep.subr.mxu0 0.0
        %5086 = vmatpush1.msra.mxu0 0.0
        %5087 = vmatprep.subr.mxu0 0.0
        %5088 = vmatpush1.msra.mxu0 0.0
        %5089 = vmatprep.subr.mxu0 0.0
        %5090 = vmatpush1.msra.mxu0 0.0
        %5091 = vmatprep.subr.mxu0 0.0
        %5092 = vmatpush1.msra.mxu0 0.0
        %5093 = vmatprep.subr.mxu0 0.0
        %5094 = vmatpush1.msra.mxu0 0.0
        %5095 = vmatprep.subr.mxu0 0.0
        %5096 = vmatpush1.msra.mxu0 0.0
        %5097 = vmatprep.subr.mxu0 0.0
        %5098 = vmatpush1.msra.mxu0 0.0
        %5099 = vmatprep.subr.mxu0 0.0
        %5100 = vmatpush1.msra.mxu0 0.0
        %5101 = vmatprep.subr.mxu0 0.0
        %5102 = vmatpush1.msra.mxu0 0.0
        %5103 = vmatprep.subr.mxu0 0.0
        %5104 = vmatpush1.msra.mxu0 0.0
        %5105 = vmatprep.subr.mxu0 0.0
        %5106 = vmatpush1.msra.mxu0 0.0
        %5107 = vmatprep.subr.mxu0 0.0
        %5108 = vmatpush1.msra.mxu0 0.0
        %5109 = vmatprep.subr.mxu0 0.0
        %5110 = vmatpush1.msra.mxu0 0.0
        %5111 = vmatprep.subr.mxu0 0.0
        %5112 = vmatpush1.msra.mxu0 0.0
        %5113 = vmatprep.subr.mxu0 0.0
        %5114 = vmatpush1.msra.mxu0 0.0
        %5115 = vmatprep.subr.mxu0 0.0
        %5116 = vmatpush1.msra.mxu0 0.0
        %5117 = vmatprep.subr.mxu0 0.0
        %5118 = vmatpush1.msra.mxu0 0.0
        %5119 = vmatprep.subr.mxu0 0.0
        %5120 = vmatpush1.msra.mxu0 0.0
        %5121 = vmatprep.subr.mxu0 0.0
        %5122 = vmatpush1.msra.mxu0 0.0
        %5123 = vmatprep.subr.mxu0 0.0
        %5124 = vmatpush1.msra.mxu0 0.0
        %5125 = vmatprep.subr.mxu0 0.0
        %5126 = vmatpush1.msra.mxu0 0.0
        %5127 = vmatprep.subr.mxu0 0.0
        %5128 = vmatpush1.msra.mxu0 0.0
        %5129 = vmatprep.mubr.f32.mxu0 0.0
        %5130 = vmatmul.mubr.f32.gmra.mrb[0].mxu0 %v5018
        %v5131 = vpop.f32.mrb[0].mxu0
        %v5132 = vadd.f32 %v4152, %v5131
        %v5133 = vpop.f32.mrb[0].mxu0
        %5134 = vmatprep.mubr.f32.mxu0 0.0
        %5135 = vmatmul.mubr.f32.gmra.mrb[0].mxu0 %v5021
        %v5136 = vpop.f32.mrb[0].mxu0
        %v5137 = vadd.f32 %v4157, %v5136
        %v5138 = vpop.f32.mrb[0].mxu0
        %5139 = vmatprep.mubr.f32.mxu0 0.0
        %5140 = vmatmul.mubr.f32.gmra.mrb[0].mxu0 %v5024
        %v5141 = vpop.f32.mrb[0].mxu0
        %v5142 = vadd.f32 %v4162, %v5141
        %v5143 = vpop.f32.mrb[0].mxu0
        %5144 = vmatprep.mubr.f32.mxu0 0.0
        %5145 = vmatmul.mubr.f32.gmra.mrb[0].mxu0 %v5027
        %v5146 = vpop.f32.mrb[0].mxu0
        %v5147 = vadd.f32 %v4167, %v5146
        %v5148 = vpop.f32.mrb[0].mxu0
        %5149 = vmatprep.mubr.f32.mxu0 0.0
        %5150 = vmatmul.mubr.f32.gmra.mrb[0].mxu0 %v5030
        %v5151 = vpop.f32.mrb[0].mxu0
        %v5152 = vadd.f32 %v4172, %v5151
        %v5153 = vpop.f32.mrb[0].mxu0
        %5154 = vmatprep.mubr.f32.mxu0 0.0
        %5155 = vmatmul.mubr.f32.gmra.mrb[0].mxu0 %v5033
        %v5156 = vpop.f32.mrb[0].mxu0
        %v5157 = vadd.f32 %v4177, %v5156
        %v5158 = vpop.f32.mrb[0].mxu0
        %5159 = vmatprep.mubr.f32.mxu0 0.0
        %5160 = vmatmul.mubr.f32.gmra.mrb[0].mxu0 %v5036
        %v5161 = vpop.f32.mrb[0].mxu0
        %v5162 = vadd.f32 %v4182, %v5161
        %v5163 = vpop.f32.mrb[0].mxu0
        %5164 = vmatprep.mubr.f32.mxu0 0.0
        %5165 = vmatmul.mubr.f32.gmra.mrb[0].mxu0 %v5039
        %v5166 = vpop.f32.mrb[0].mxu0
        %v5167 = vadd.f32 %v4187, %v5166
        %v5168 = vpop.f32.mrb[0].mxu0
        %5169 = vmatprep.mubr.f32.mxu0 0.0
        %5170 = vmatmul.mubr.f32.gmra.mrb[0].mxu0 %v5042
        %v5171 = vpop.f32.mrb[0].mxu0
        %v5172 = vadd.f32 %v4192, %v5171
        %v5173 = vpop.f32.mrb[0].mxu0
        %5174 = vmatprep.mubr.f32.mxu0 0.0
        %5175 = vmatmul.mubr.f32.gmra.mrb[0].mxu0 %v5045
        %v5176 = vpop.f32.mrb[0].mxu0
        %v5177 = vadd.f32 %v4197, %v5176
        %v5178 = vpop.f32.mrb[0].mxu0
        %5179 = vmatprep.mubr.f32.mxu0 0.0
        %5180 = vmatmul.mubr.f32.gmra.mrb[0].mxu0 %v5048
        %v5181 = vpop.f32.mrb[0].mxu0
        %v5182 = vadd.f32 %v4202, %v5181
        %v5183 = vpop.f32.mrb[0].mxu0
        %5184 = vmatprep.mubr.f32.mxu0 0.0
        %5185 = vmatmul.mubr.f32.gmra.mrb[0].mxu0 %v5051
        %v5186 = vpop.f32.mrb[0].mxu0
        %v5187 = vadd.f32 %v4207, %v5186
        %v5188 = vpop.f32.mrb[0].mxu0
        %5189 = vmatprep.mubr.f32.mxu0 0.0
        %5190 = vmatmul.mubr.f32.gmra.mrb[0].mxu0 %v5054
        %v5191 = vpop.f32.mrb[0].mxu0
        %v5192 = vadd.f32 %v4212, %v5191
        %v5193 = vpop.f32.mrb[0].mxu0
        %5194 = vmatprep.mubr.f32.mxu0 0.0
        %5195 = vmatmul.mubr.f32.gmra.mrb[0].mxu0 %v5057
        %v5196 = vpop.f32.mrb[0].mxu0
        %v5197 = vadd.f32 %v4217, %v5196
        %v5198 = vpop.f32.mrb[0].mxu0
        %5199 = vmatprep.mubr.f32.mxu0 0.0
        %5200 = vmatmul.mubr.f32.gmra.mrb[0].mxu0 %v5060
        %v5201 = vpop.f32.mrb[0].mxu0
        %v5202 = vadd.f32 %v4222, %v5201
        %v5203 = vpop.f32.mrb[0].mxu0
        %5204 = vmatprep.mubr.f32.mxu0 0.0
        %5205 = vmatmul.mubr.f32.gmra.mrb[0].mxu0 %v5063
        %v5206 = vpop.f32.mrb[0].mxu0
        %v5207 = vadd.f32 %v4227, %v5206
        %v5208 = vpop.f32.mrb[0].mxu0
        %5209 = vdwg.mxu0
        %v5211 = vsel %vm3630, %v3383, 0
        %v5214 = vsel %vm3630, %v3388, 0
        %v5217 = vsel %vm3630, %v3393, 0
        %v5220 = vsel %vm3630, %v3398, 0
        %v5223 = vsel %vm3630, %v3403, 0
        %v5226 = vsel %vm3630, %v3408, 0
        %v5229 = vsel %vm3630, %v3413, 0
        %v5232 = vsel %vm3630, %v3418, 0
        %v5235 = vsel %vm3630, %v3423, 0
        %v5238 = vsel %vm3630, %v3428, 0
        %v5241 = vsel %vm3630, %v3433, 0
        %v5244 = vsel %vm3630, %v3438, 0
        %v5247 = vsel %vm3630, %v3443, 0
        %v5250 = vsel %vm3630, %v3448, 0
        %v5253 = vsel %vm3630, %v3453, 0
        %v5256 = vsel %vm3630, %v3458, 0
        %5258 = vmatprep.subr.mxu0 0.0
        %5259 = vmatpush1.msra.mxu0 %v4231
        %5260 = vmatprep.subr.mxu0 0.0
        %5261 = vmatpush1.msra.mxu0 %v4232
        %5262 = vmatprep.subr.mxu0 0.0
        %5263 = vmatpush1.msra.mxu0 %v4233
        %5264 = vmatprep.subr.mxu0 0.0
        %5265 = vmatpush1.msra.mxu0 %v4234
        %5266 = vmatprep.subr.mxu0 0.0
        %5267 = vmatpush1.msra.mxu0 0.0
        %5268 = vmatprep.subr.mxu0 0.0
        %5269 = vmatpush1.msra.mxu0 0.0
        %5270 = vmatprep.subr.mxu0 0.0
        %5271 = vmatpush1.msra.mxu0 0.0
        %5272 = vmatprep.subr.mxu0 0.0
        %5273 = vmatpush1.msra.mxu0 0.0
        %5274 = vmatprep.subr.mxu0 0.0
        %5275 = vmatpush1.msra.mxu0 0.0
        %5276 = vmatprep.subr.mxu0 0.0
        %5277 = vmatpush1.msra.mxu0 0.0
        %5278 = vmatprep.subr.mxu0 0.0
        %5279 = vmatpush1.msra.mxu0 0.0
        %5280 = vmatprep.subr.mxu0 0.0
        %5281 = vmatpush1.msra.mxu0 0.0
        %5282 = vmatprep.subr.mxu0 0.0
        %5283 = vmatpush1.msra.mxu0 0.0
        %5284 = vmatprep.subr.mxu0 0.0
        %5285 = vmatpush1.msra.mxu0 0.0
        %5286 = vmatprep.subr.mxu0 0.0
        %5287 = vmatpush1.msra.mxu0 0.0
        %5288 = vmatprep.subr.mxu0 0.0
        %5289 = vmatpush1.msra.mxu0 0.0
        %5290 = vmatprep.subr.mxu0 0.0
        %5291 = vmatpush1.msra.mxu0 0.0
        %5292 = vmatprep.subr.mxu0 0.0
        %5293 = vmatpush1.msra.mxu0 0.0
        %5294 = vmatprep.subr.mxu0 0.0
        %5295 = vmatpush1.msra.mxu0 0.0
        %5296 = vmatprep.subr.mxu0 0.0
        %5297 = vmatpush1.msra.mxu0 0.0
        %5298 = vmatprep.subr.mxu0 0.0
        %5299 = vmatpush1.msra.mxu0 0.0
        %5300 = vmatprep.subr.mxu0 0.0
        %5301 = vmatpush1.msra.mxu0 0.0
        %5302 = vmatprep.subr.mxu0 0.0
        %5303 = vmatpush1.msra.mxu0 0.0
        %5304 = vmatprep.subr.mxu0 0.0
        %5305 = vmatpush1.msra.mxu0 0.0
        %5306 = vmatprep.subr.mxu0 0.0
        %5307 = vmatpush1.msra.mxu0 0.0
        %5308 = vmatprep.subr.mxu0 0.0
        %5309 = vmatpush1.msra.mxu0 0.0
        %5310 = vmatprep.subr.mxu0 0.0
        %5311 = vmatpush1.msra.mxu0 0.0
        %5312 = vmatprep.subr.mxu0 0.0
        %5313 = vmatpush1.msra.mxu0 0.0
        %5314 = vmatprep.subr.mxu0 0.0
        %5315 = vmatpush1.msra.mxu0 0.0
        %5316 = vmatprep.subr.mxu0 0.0
        %5317 = vmatpush1.msra.mxu0 0.0
        %5318 = vmatprep.subr.mxu0 0.0
        %5319 = vmatpush1.msra.mxu0 0.0
        %5320 = vmatprep.subr.mxu0 0.0
        %5321 = vmatpush1.msra.mxu0 0.0
        %5322 = vmatprep.mubr.f32.mxu0 0.0
        %5323 = vmatmul.mubr.f32.gmra.mrb[0].mxu0 %v5211
        %v5324 = vpop.f32.mrb[0].mxu0
        %v5325 = vadd.f32 %v4355, %v5324
        %v5326 = vpop.f32.mrb[0].mxu0
        %5327 = vmatprep.mubr.f32.mxu0 0.0
        %5328 = vmatmul.mubr.f32.gmra.mrb[0].mxu0 %v5214
        %v5329 = vpop.f32.mrb[0].mxu0
        %v5330 = vadd.f32 %v4360, %v5329
        %v5331 = vpop.f32.mrb[0].mxu0
        %5332 = vmatprep.mubr.f32.mxu0 0.0
        %5333 = vmatmul.mubr.f32.gmra.mrb[0].mxu0 %v5217
        %v5334 = vpop.f32.mrb[0].mxu0
        %v5335 = vadd.f32 %v4365, %v5334
        %v5336 = vpop.f32.mrb[0].mxu0
        %5337 = vmatprep.mubr.f32.mxu0 0.0
        %5338 = vmatmul.mubr.f32.gmra.mrb[0].mxu0 %v5220
        %v5339 = vpop.f32.mrb[0].mxu0
        %v5340 = vadd.f32 %v4370, %v5339
        %v5341 = vpop.f32.mrb[0].mxu0
        %5342 = vmatprep.mubr.f32.mxu0 0.0
        %5343 = vmatmul.mubr.f32.gmra.mrb[0].mxu0 %v5223
        %v5344 = vpop.f32.mrb[0].mxu0
        %v5345 = vadd.f32 %v4375, %v5344
        %v5346 = vpop.f32.mrb[0].mxu0
        %5347 = vmatprep.mubr.f32.mxu0 0.0
        %5348 = vmatmul.mubr.f32.gmra.mrb[0].mxu0 %v5226
        %v5349 = vpop.f32.mrb[0].mxu0
        %v5350 = vadd.f32 %v4380, %v5349
        %v5351 = vpop.f32.mrb[0].mxu0
        %5352 = vmatprep.mubr.f32.mxu0 0.0
        %5353 = vmatmul.mubr.f32.gmra.mrb[0].mxu0 %v5229
        %v5354 = vpop.f32.mrb[0].mxu0
        %v5355 = vadd.f32 %v4385, %v5354
        %v5356 = vpop.f32.mrb[0].mxu0
        %5357 = vmatprep.mubr.f32.mxu0 0.0
        %5358 = vmatmul.mubr.f32.gmra.mrb[0].mxu0 %v5232
        %v5359 = vpop.f32.mrb[0].mxu0
        %v5360 = vadd.f32 %v4390, %v5359
        %v5361 = vpop.f32.mrb[0].mxu0
        %5362 = vmatprep.mubr.f32.mxu0 0.0
        %5363 = vmatmul.mubr.f32.gmra.mrb[0].mxu0 %v5235
        %v5364 = vpop.f32.mrb[0].mxu0
        %v5365 = vadd.f32 %v4395, %v5364
        %v5366 = vpop.f32.mrb[0].mxu0
        %5367 = vmatprep.mubr.f32.mxu0 0.0
        %5368 = vmatmul.mubr.f32.gmra.mrb[0].mxu0 %v5238
        %v5369 = vpop.f32.mrb[0].mxu0
        %v5370 = vadd.f32 %v4400, %v5369
        %v5371 = vpop.f32.mrb[0].mxu0
        %5372 = vmatprep.mubr.f32.mxu0 0.0
        %5373 = vmatmul.mubr.f32.gmra.mrb[0].mxu0 %v5241
        %v5374 = vpop.f32.mrb[0].mxu0
        %v5375 = vadd.f32 %v4405, %v5374
        %v5376 = vpop.f32.mrb[0].mxu0
        %5377 = vmatprep.mubr.f32.mxu0 0.0
        %5378 = vmatmul.mubr.f32.gmra.mrb[0].mxu0 %v5244
        %v5379 = vpop.f32.mrb[0].mxu0
        %v5380 = vadd.f32 %v4410, %v5379
        %v5381 = vpop.f32.mrb[0].mxu0
        %5382 = vmatprep.mubr.f32.mxu0 0.0
        %5383 = vmatmul.mubr.f32.gmra.mrb[0].mxu0 %v5247
        %v5384 = vpop.f32.mrb[0].mxu0
        %v5385 = vadd.f32 %v4415, %v5384
        %v5386 = vpop.f32.mrb[0].mxu0
        %5387 = vmatprep.mubr.f32.mxu0 0.0
        %5388 = vmatmul.mubr.f32.gmra.mrb[0].mxu0 %v5250
        %v5389 = vpop.f32.mrb[0].mxu0
        %v5390 = vadd.f32 %v4420, %v5389
        %v5391 = vpop.f32.mrb[0].mxu0
        %5392 = vmatprep.mubr.f32.mxu0 0.0
        %5393 = vmatmul.mubr.f32.gmra.mrb[0].mxu0 %v5253
        %v5394 = vpop.f32.mrb[0].mxu0
        %v5395 = vadd.f32 %v4425, %v5394
        %v5396 = vpop.f32.mrb[0].mxu0
        %5397 = vmatprep.mubr.f32.mxu0 0.0
        %5398 = vmatmul.mubr.f32.gmra.mrb[0].mxu0 %v5256
        %v5399 = vpop.f32.mrb[0].mxu0
        %v5400 = vadd.f32 %v4430, %v5399
        %v5401 = vpop.f32.mrb[0].mxu0
        %5402 = vdwg.mxu0
        %v5403 = vadd.f32 %v4746, %v4939
        %v5404 = vadd.f32 %v4751, %v4944
        %v5405 = vadd.f32 %v4756, %v4949
        %v5406 = vadd.f32 %v4761, %v4954
        %v5407 = vadd.f32 %v4766, %v4959
        %v5408 = vadd.f32 %v4771, %v4964
        %v5409 = vadd.f32 %v4776, %v4969
        %v5410 = vadd.f32 %v4781, %v4974
        %v5411 = vadd.f32 %v4786, %v4979
        %v5412 = vadd.f32 %v4791, %v4984
        %v5413 = vadd.f32 %v4796, %v4989
        %v5414 = vadd.f32 %v4801, %v4994
        %v5415 = vadd.f32 %v4806, %v4999
        %v5416 = vadd.f32 %v4811, %v5004
        %v5417 = vadd.f32 %v4816, %v5009
        %v5418 = vadd.f32 %v4821, %v5014
        %v5419 = vadd.f32 %v5132, %v5325
        %v5420 = vadd.f32 %v5137, %v5330
        %v5421 = vadd.f32 %v5142, %v5335
        %v5422 = vadd.f32 %v5147, %v5340
        %v5423 = vadd.f32 %v5152, %v5345
        %v5424 = vadd.f32 %v5157, %v5350
        %v5425 = vadd.f32 %v5162, %v5355
        %v5426 = vadd.f32 %v5167, %v5360
        %v5427 = vadd.f32 %v5172, %v5365
        %v5428 = vadd.f32 %v5177, %v5370
        %v5429 = vadd.f32 %v5182, %v5375
        %v5430 = vadd.f32 %v5187, %v5380
        %v5431 = vadd.f32 %v5192, %v5385
        %v5432 = vadd.f32 %v5197, %v5390
        %v5433 = vadd.f32 %v5202, %v5395
        %v5434 = vadd.f32 %v5207, %v5400
        %v5435 = vadd.f32 %v5403, %v5419
        %v5436 = vadd.f32 %v5404, %v5420
        %v5437 = vadd.f32 %v5405, %v5421
        %v5438 = vadd.f32 %v5406, %v5422
        %v5439 = vadd.f32 %v5407, %v5423
        %v5440 = vadd.f32 %v5408, %v5424
        %v5441 = vadd.f32 %v5409, %v5425
        %v5442 = vadd.f32 %v5410, %v5426
        %v5443 = vadd.f32 %v5411, %v5427
        %v5444 = vadd.f32 %v5412, %v5428
        %v5445 = vadd.f32 %v5413, %v5429
        %v5446 = vadd.f32 %v5414, %v5430
        %v5447 = vadd.f32 %v5415, %v5431
        %v5448 = vadd.f32 %v5416, %v5432
        %v5449 = vadd.f32 %v5417, %v5433
        %v5450 = vadd.f32 %v5418, %v5434
        %v5451 = vadd.f32 %v5435, %v4553
        %v5452 = vadd.f32 %v5436, %v4558
        %v5453 = vadd.f32 %v5437, %v4563
        %v5454 = vadd.f32 %v5438, %v4568
        %v5455 = vadd.f32 %v5439, %v4573
        %v5456 = vadd.f32 %v5440, %v4578
        %v5457 = vadd.f32 %v5441, %v4583
        %v5458 = vadd.f32 %v5442, %v4588
        %v5459 = vadd.f32 %v5443, %v4593
        %v5460 = vadd.f32 %v5444, %v4598
        %v5461 = vadd.f32 %v5445, %v4603
        %v5462 = vadd.f32 %v5446, %v4608
        %v5463 = vadd.f32 %v5447, %v4613
        %v5464 = vadd.f32 %v5448, %v4618
        %v5465 = vadd.f32 %v5449, %v4623
        %v5466 = vadd.f32 %v5450, %v4628
        %v5467 = vld [vmem:[%s4] sm:$0x1]
        %v5469 = vlaneseq
        %v5470 = vshrl.u32 %v5469, 7
        %v5471 = vsub.s32 0, %v5470
        %v5472 = vrot.slane %v5467, %v5471
        %v5474 = vadd.f32 %v5451, %v5472
        %v5475 = vadd.f32 %v5452, %v5472
        %v5476 = vadd.f32 %v5453, %v5472
        %v5477 = vadd.f32 %v5454, %v5472
        %v5478 = vadd.f32 %v5455, %v5472
        %v5479 = vadd.f32 %v5456, %v5472
        %v5480 = vadd.f32 %v5457, %v5472
        %v5481 = vadd.f32 %v5458, %v5472
        %v5482 = vadd.f32 %v5459, %v5472
        %v5483 = vadd.f32 %v5460, %v5472
        %v5484 = vadd.f32 %v5461, %v5472
        %v5485 = vadd.f32 %v5462, %v5472
        %v5486 = vadd.f32 %v5463, %v5472
        %v5487 = vadd.f32 %v5464, %v5472
        %v5488 = vadd.f32 %v5465, %v5472
        %v5489 = vadd.f32 %v5466, %v5472
        %v5490 = vmax.f32 %v5474, 0.0
        %v5491 = vmax.f32 %v5475, 0.0
        %v5492 = vmax.f32 %v5476, 0.0
        %v5493 = vmax.f32 %v5477, 0.0
        %v5494 = vmax.f32 %v5478, 0.0
        %v5495 = vmax.f32 %v5479, 0.0
        %v5496 = vmax.f32 %v5480, 0.0
        %v5497 = vmax.f32 %v5481, 0.0
        %v5498 = vmax.f32 %v5482, 0.0
        %v5499 = vmax.f32 %v5483, 0.0
        %v5500 = vmax.f32 %v5484, 0.0
        %v5501 = vmax.f32 %v5485, 0.0
        %v5502 = vmax.f32 %v5486, 0.0
        %v5503 = vmax.f32 %v5487, 0.0
        %v5504 = vmax.f32 %v5488, 0.0
        %v5505 = vmax.f32 %v5489, 0.0
        %v5506 = vld [vmem:[%s5] sm:$0xff]
        %5507 = vmatprep.subr.mxu0 0.0
        %5508 = vmatpush1.msra.mxu0 %v5490
        %5509 = vmatprep.subr.mxu0 0.0
        %5510 = vmatpush1.msra.mxu0 %v5491
        %5511 = vmatprep.subr.mxu0 0.0
        %5512 = vmatpush1.msra.mxu0 %v5492
        %5513 = vmatprep.subr.mxu0 0.0
        %5514 = vmatpush1.msra.mxu0 %v5493
        %5515 = vmatprep.subr.mxu0 0.0
        %5516 = vmatpush1.msra.mxu0 %v5494
        %5517 = vmatprep.subr.mxu0 0.0
        %5518 = vmatpush1.msra.mxu0 %v5495
        %5519 = vmatprep.subr.mxu0 0.0
        %5520 = vmatpush1.msra.mxu0 %v5496
        %5521 = vmatprep.subr.mxu0 0.0
        %5522 = vmatpush1.msra.mxu0 %v5497
        %5523 = vmatprep.subr.mxu0 0.0
        %5524 = vmatpush1.msra.mxu0 %v5498
        %5525 = vmatprep.subr.mxu0 0.0
        %5526 = vmatpush1.msra.mxu0 %v5499
        %5527 = vmatprep.subr.mxu0 0.0
        %5528 = vmatpush1.msra.mxu0 %v5500
        %5529 = vmatprep.subr.mxu0 0.0
        %5530 = vmatpush1.msra.mxu0 %v5501
        %5531 = vmatprep.subr.mxu0 0.0
        %5532 = vmatpush1.msra.mxu0 %v5502
        %5533 = vmatprep.subr.mxu0 0.0
        %5534 = vmatpush1.msra.mxu0 %v5503
        %5535 = vmatprep.subr.mxu0 0.0
        %5536 = vmatpush1.msra.mxu0 %v5504
        %5537 = vmatprep.subr.mxu0 0.0
        %5538 = vmatpush1.msra.mxu0 %v5505
        %5539 = vmatprep.subr.mxu0 0.0
        %5540 = vmatpush1.msra.mxu0 0.0
        %5541 = vmatprep.subr.mxu0 0.0
        %5542 = vmatpush1.msra.mxu0 0.0
        %5543 = vmatprep.subr.mxu0 0.0
        %5544 = vmatpush1.msra.mxu0 0.0
        %5545 = vmatprep.subr.mxu0 0.0
        %5546 = vmatpush1.msra.mxu0 0.0
        %5547 = vmatprep.subr.mxu0 0.0
        %5548 = vmatpush1.msra.mxu0 0.0
        %5549 = vmatprep.subr.mxu0 0.0
        %5550 = vmatpush1.msra.mxu0 0.0
        %5551 = vmatprep.subr.mxu0 0.0
        %5552 = vmatpush1.msra.mxu0 0.0
        %5553 = vmatprep.subr.mxu0 0.0
        %5554 = vmatpush1.msra.mxu0 0.0
        %5555 = vmatprep.subr.mxu0 0.0
        %5556 = vmatpush1.msra.mxu0 0.0
        %5557 = vmatprep.subr.mxu0 0.0
        %5558 = vmatpush1.msra.mxu0 0.0
        %5559 = vmatprep.subr.mxu0 0.0
        %5560 = vmatpush1.msra.mxu0 0.0
        %5561 = vmatprep.subr.mxu0 0.0
        %5562 = vmatpush1.msra.mxu0 0.0
        %5563 = vmatprep.subr.mxu0 0.0
        %5564 = vmatpush1.msra.mxu0 0.0
        %5565 = vmatprep.subr.mxu0 0.0
        %5566 = vmatpush1.msra.mxu0 0.0
        %5567 = vmatprep.subr.mxu0 0.0
        %5568 = vmatpush1.msra.mxu0 0.0
        %5569 = vmatprep.subr.mxu0 0.0
        %5570 = vmatpush1.msra.mxu0 0.0
        %5571 = vmatprep.mubr.f32.mxu0 0.0
        %5572 = vmatmul.mubr.f32.gmra.mrb[0].mxu0 %v5506
        %v5573 = vpop.f32.mrb[0].mxu0
        %v5574 = vadd.f32 0.0, %v5573
        %v5575 = vpop.f32.mrb[0].mxu0
        %5576 = vdwg.mxu0
        %v5577 = vld [vmem:[%s6] sm:$0xff]
        %v5578 = vld [vmem:[%s6 + $0x8] sm:$0xff]
        %v5579 = vld [vmem:[%s6 + $0x10] sm:$0xff]
        %v5580 = vld [vmem:[%s6 + $0x18] sm:$0xff]
        %v5581 = vld [vmem:[%s6 + $0x20] sm:$0xff]
        %v5582 = vld [vmem:[%s6 + $0x28] sm:$0xff]
        %v5583 = vld [vmem:[%s6 + $0x30] sm:$0xff]
        %v5584 = vld [vmem:[%s6 + $0x38] sm:$0xff]
        %v5585 = vld [vmem:[%s7] sm:$0x1]
        %v5587 = vlaneseq
        %v5588 = vshrl.u32 %v5587, 7
        %v5589 = vsub.s32 0, %v5588
        %v5590 = vrot.slane %v5585, %v5589
        %vm5592 = vcmask 523264
        %v5594 = vsel %vm5592, %v5574, 0
        %5596 = vmatprep.subr.mxu0 0.0
        %5597 = vmatpush1.msra.mxu0 %v5577
        %5598 = vmatprep.subr.mxu0 0.0
        %5599 = vmatpush1.msra.mxu0 %v5578
        %5600 = vmatprep.subr.mxu0 0.0
        %5601 = vmatpush1.msra.mxu0 %v5579
        %5602 = vmatprep.subr.mxu0 0.0
        %5603 = vmatpush1.msra.mxu0 %v5580
        %5604 = vmatprep.subr.mxu0 0.0
        %5605 = vmatpush1.msra.mxu0 %v5581
        %5606 = vmatprep.subr.mxu0 0.0
        %5607 = vmatpush1.msra.mxu0 %v5582
        %5608 = vmatprep.subr.mxu0 0.0
        %5609 = vmatpush1.msra.mxu0 %v5583
        %5610 = vmatprep.subr.mxu0 0.0
        %5611 = vmatpush1.msra.mxu0 %v5584
        %5612 = vmatprep.subr.mxu0 0.0
        %5613 = vmatpush1.msra.mxu0 0.0
        %5614 = vmatprep.subr.mxu0 0.0
        %5615 = vmatpush1.msra.mxu0 0.0
        %5616 = vmatprep.subr.mxu0 0.0
        %5617 = vmatpush1.msra.mxu0 0.0
        %5618 = vmatprep.subr.mxu0 0.0
        %5619 = vmatpush1.msra.mxu0 0.0
        %5620 = vmatprep.subr.mxu0 0.0
        %5621 = vmatpush1.msra.mxu0 0.0
        %5622 = vmatprep.subr.mxu0 0.0
        %5623 = vmatpush1.msra.mxu0 0.0
        %5624 = vmatprep.subr.mxu0 0.0
        %5625 = vmatpush1.msra.mxu0 0.0
        %5626 = vmatprep.subr.mxu0 0.0
        %5627 = vmatpush1.msra.mxu0 0.0
        %5628 = vmatprep.subr.mxu0 0.0
        %5629 = vmatpush1.msra.mxu0 0.0
        %5630 = vmatprep.subr.mxu0 0.0
        %5631 = vmatpush1.msra.mxu0 0.0
        %5632 = vmatprep.subr.mxu0 0.0
        %5633 = vmatpush1.msra.mxu0 0.0
        %5634 = vmatprep.subr.mxu0 0.0
        %5635 = vmatpush1.msra.mxu0 0.0
        %5636 = vmatprep.subr.mxu0 0.0
        %5637 = vmatpush1.msra.mxu0 0.0
        %5638 = vmatprep.subr.mxu0 0.0
        %5639 = vmatpush1.msra.mxu0 0.0
        %5640 = vmatprep.subr.mxu0 0.0
        %5641 = vmatpush1.msra.mxu0 0.0
        %5642 = vmatprep.subr.mxu0 0.0
        %5643 = vmatpush1.msra.mxu0 0.0
        %5644 = vmatprep.subr.mxu0 0.0
        %5645 = vmatpush1.msra.mxu0 0.0
        %5646 = vmatprep.subr.mxu0 0.0
        %5647 = vmatpush1.msra.mxu0 0.0
        %5648 = vmatprep.subr.mxu0 0.0
        %5649 = vmatpush1.msra.mxu0 0.0
        %5650 = vmatprep.subr.mxu0 0.0
        %5651 = vmatpush1.msra.mxu0 0.0
        %5652 = vmatprep.subr.mxu0 0.0
        %5653 = vmatpush1.msra.mxu0 0.0
        %5654 = vmatprep.subr.mxu0 0.0
        %5655 = vmatpush1.msra.mxu0 0.0
        %5656 = vmatprep.subr.mxu0 0.0
        %5657 = vmatpush1.msra.mxu0 0.0
        %5658 = vmatprep.subr.mxu0 0.0
        %5659 = vmatpush1.msra.mxu0 0.0
        %5660 = vmatprep.mubr.f32.mxu0 0.0
        %5661 = vmatmul.mubr.f32.gmra.mrb[0].mxu0 %v5594
        %v5662 = vpop.f32.mrb[0].mxu0
        %v5663 = vadd.f32 %v5590, %v5662
        %v5664 = vpop.f32.mrb[0].mxu0
        %5665 = vdwg.mxu0
        %v5666 = vmax.f32 %v5663, 0.0
        %5667 = vst [vmem:[%s299] sm:$0xff] %v5666
        %s5668 = sand.u32 %s203, 1
        %s5669 = scalar_lea.sflag [#allocation3], %s5668
        %s5670 = sand.u32 %s203, 1
        %s5671 = smul.addr %s5670, 8
        %s5672 = scalar_lea.vmem [#allocation2], %s5671
        // Predicated region
        $region53: #{semantic_feature_extractor_forward.1} parent=51 // pred_check
          %p5673 = pneg %p213
        $region54: #{semantic_feature_extractor_forward.1} parent=51 // pred_check_branch
          %5675 = sbr.rel (%p5673) target = $region56
        $region55: #{semantic_feature_extractor_forward.1} parent=51 // pred_region
          %s5677 = ssub.s32 128, 128
          %5678 = vsyncadd %s5669, %s5677
          %s5679 = smul.addr %s22, 128
          %s5680 = scalar_lea.hbm %s8, %s5679
          %s5682 = sshll.u32 %s5672, 4
          %s5683 = int_to_ptr.vmem [resolvable:$true] %s5682
          %5685 = dma.vmem_to_hbm [thread:$0]  %s5683, 128, %s5680, %s5669
        $region56: #{semantic_feature_extractor_forward.1} parent=51 // pred_fallthru
          _
      $region52: #{semantic_feature_extractor_forward.1} parent=5 // pred_fallthru
        _
      %p5686 = scmp.le.s32.totalorder 2, %s17
      // Predicated region
      $region57: #{semantic_feature_extractor_forward.1} parent=5 // pred_check
        %p5687 = pneg %p5686
      $region58: #{semantic_feature_extractor_forward.1} parent=5 // pred_check_branch
        %5689 = sbr.rel (%p5687) target = $region60
      $region59: #{semantic_feature_extractor_forward.1} parent=5 // pred_region
        %s5690 = ssub.s32 %s17, 2
        // Predicated region
        $region61: #{semantic_feature_extractor_forward.1} parent=59 // pred_check
          %p5691 = pneg %p219
        $region62: #{semantic_feature_extractor_forward.1} parent=59 // pred_check_branch
          %5693 = sbr.rel (%p5691) target = $region64
        $region63: #{semantic_feature_extractor_forward.1} parent=59 // pred_region
          %s5694 = sand.u32 %s204, 1
          %s5695 = scalar_lea.sflag [#allocation3], %s5694
          %s5696 = sand.u32 %s204, 1
          %s5697 = smul.addr %s5696, 8
          %s5698 = scalar_lea.vmem [#allocation2], %s5697
          %5699 = dma.done %s5695, 128
        $region64: #{semantic_feature_extractor_forward.1} parent=59 // pred_fallthru
          _
      $region60: #{semantic_feature_extractor_forward.1} parent=5 // pred_fallthru
        _
    $region6: #{semantic_feature_extractor_forward.1} parent=1 // loop_footer
      %s21 = sadd.s32 1, %s17
    $region7: #{semantic_feature_extractor_forward.1} parent=1 // loop_footer_branch
      %16 = sbr.rel target = $region3
    $region8: #{semantic_feature_extractor_forward.1} parent=1 // loop_exit
      _
    %5700 = vsyncpa [#allocation3], 1
    %s5701 = scalar_lea.sflag [#allocation3], 1
    %5702 = vsyncpa %s5701, 1

</llo_original>
